<compile_context>
chip_gen: v7x
topology: tpu7x:2x2x1
jax: 0.10.0
libtpu: 0.0.40
codegen_flags: <defaults>
</compile_context>

<pallas_src>
import functools

import jax
import jax.numpy as jnp
from jax import lax
from jax.experimental import pallas as pl
from jax.experimental.pallas import tpu as pltpu

_BN_EPS = 1e-5
_LEAKY_SLOPE = 0.2
_LANE = 128


def _round_up(x, m):
    return (x + m - 1) // m * m


def _tpu_vmem_bytes():
    try:
        return int(pltpu.get_tpu_info().vmem_capacity_bytes)
    except Exception:                      # no info available: assume v7x (64 MiB / TC)
        return 64 << 20


_VMEM_BYTES = _tpu_vmem_bytes()
# ~48 MiB scoped limit on v7x (64 MiB VMEM/TC), ~96-100 MiB on v5e/v6e (128 MiB).
_VMEM_LIMIT_BYTES = min((_VMEM_BYTES * 3) // 4, 100 << 20)
# Per-grid-step tile budget: ~12.8 MiB on v7x, ~25.6 MiB on v5e/v6e.
_TILE_BUDGET = _VMEM_BYTES // 5


def _compiler_params():
    return pltpu.CompilerParams(
        dimension_semantics=("parallel",),       # all grids are independent row tiles
        vmem_limit_bytes=_VMEM_LIMIT_BYTES,
    )


# ----------------------------------------------------------------------------
# Tile-size choosers (generation-aware budgets, 256-aligned M preferred)
# ----------------------------------------------------------------------------
def _choose_conv_row_tile(ho, wo, k_tap, cp, budget):
    """Output-row-band height th (dividing ho).  Footprint counts double-buffered
    bf16 staged/output tiles, both weight taps, per-channel vectors, and the
    in-kernel f32 affine temporary + accumulator."""
    def foot(th):
        r_halo, rows = (th + 1) * wo, th * wo
        return (2 * (r_halo * k_tap * 2 + rows * cp * 2 + 4 * cp * 4 + 2 * k_tap * 4)
                + 2 * (2 * k_tap * cp * 2)
                + r_halo * k_tap * 6 + rows * cp * 4)

    cands = [th for th in range(1, ho + 1)
             if ho % th == 0 and (th * wo) % 16 == 0]
    if not cands:
        return ho          # TODO(synk): pad ho/M for pathological tiny/odd shapes
    fits = [th for th in cands if foot(th) <= budget]
    if not fits:
        return min(cands)  # nothing fits the budget: smallest legal band
    pref = [th for th in fits if (th * wo) % 256 == 0]   # MXU-friendly M (v6e/v7x)
    return max(pref) if pref else max(fits)


def _pick_m_tile(m, bytes_per_row, budget):
    """Largest divisor of m (16-row aligned for bf16 blocks; prefers 256-, then
    128-aligned tiles) whose per-step footprint fits `budget`."""
    cap = max(16, min(m, budget // max(bytes_per_row, 1)))
    for align in (256, 128, 16):
        d = (cap // align) * align
        while d >= align:
            if m % d == 0:
                return d
            d -= align
    return m   # no 16-aligned divisor: full extent (legal: block == whole dim)


# ----------------------------------------------------------------------------
# Pallas kernels
# ----------------------------------------------------------------------------
def _conv4x4s2_matmul(x_tiles, w_taps, bias, sc_k, sh_k, *, wo, rows, apply_act):
    """Phase-1 of a 4x4/stride-2 conv layer (two-tap MXU decomposition).

    The PREVIOUS layer's BatchNorm + LeakyReLU is fused here: the staged tile
    holds pre-activation bf16 values, `sc_k`/`sh_k` are the per-channel BN
    scale/shift tiled 8x along K, and spatial border positions were padded with
    -shift/scale so they map to ~0 after the fused affine + LeakyReLU.
    """
    n_tiles, r_halo, k_tap = x_tiles.shape
    cp = w_taps.shape[-1]
    m_total = n_tiles * rows

    def kernel(*refs):
        if apply_act:
            x_ref, w_ref, b_ref, sc_ref, sh_ref, y_ref, s1_ref, m2_ref = refs
        else:
            x_ref, w_ref, b_ref, y_ref, s1_ref, m2_ref = refs
        x = x_ref[0]                                      # ((th+1)*wo, k_tap) bf16
        if apply_act:
            z = x.astype(jnp.float32) * sc_ref[...] + sh_ref[...]
            x = jnp.where(z >= 0, z, _LEAKY_SLOPE * z).astype(jnp.bfloat16)
        acc = jnp.dot(x[0:rows, :], w_ref[0], preferred_element_type=jnp.float32)
        acc = acc + jnp.dot(x[wo:wo + rows, :], w_ref[1],
                            preferred_element_type=jnp.float32)
        y = acc + b_ref[...]                              # conv bias
        y_ref[...] = y.astype(jnp.bfloat16)               # bf16 intermediate
        # Per-tile BN statistics from the f32 accumulator (Chan merge outside).
        s1 = jnp.sum(y, axis=0, keepdims=True)
        d = y - s1 * (1.0 / rows)
        s1_ref[...] = s1.reshape(1, 1, cp)
        m2_ref[...] = jnp.sum(d * d, axis=0, keepdims=True).reshape(1, 1, cp)

    in_specs = [
        pl.BlockSpec((1, r_halo, k_tap), lambda i: (i, 0, 0)),
        pl.BlockSpec((2, k_tap, cp), lambda i: (0, 0, 0)),
        pl.BlockSpec((1, cp), lambda i: (0, 0)),
    ]
    args = [x_tiles, w_taps, bias]
    if apply_act:
        in_specs += [pl.BlockSpec((1, k_tap), lambda i: (0, 0)),
                     pl.BlockSpec((1, k_tap), lambda i: (0, 0))]
        args += [sc_k, sh_k]

    flops = 2 * m_total * 2 * k_tap * cp
    if apply_act:
        flops += 5 * n_tiles * r_halo * k_tap
    bytes_accessed = (x_tiles.size * 2 + w_taps.size * 2 + bias.size * 4
                      + (2 * k_tap * 4 if apply_act else 0)
                      + m_total * cp * 2 + 2 * n_tiles * cp * 4)

    return pl.pallas_call(
        kernel,
        out_shape=(
            jax.ShapeDtypeStruct((m_total, cp), jnp.bfloat16),
            jax.ShapeDtypeStruct((n_tiles, 1, cp), jnp.float32),
            jax.ShapeDtypeStruct((n_tiles, 1, cp), jnp.float32),
        ),
        grid=(n_tiles,),
        in_specs=in_specs,
        out_specs=(
            pl.BlockSpec((rows, cp), lambda i: (i, 0)),
            pl.BlockSpec((1, 1, cp), lambda i: (i, 0, 0)),
            pl.BlockSpec((1, 1, cp), lambda i: (i, 0, 0)),
        ),
        compiler_params=_compiler_params(),
        cost_estimate=pl.CostEstimate(flops=flops, transcendentals=0,
                                      bytes_accessed=bytes_accessed),
    )(*args)


def _dense_matmul(x2d, w, bias, sc, sh, *, tm, apply_act):
    """Phase-1 of the 1x1 conv layer: fused input BN+LeakyReLU, matmul + bias,
    bf16 output and per-tile BN statistics."""
    m_total, k = x2d.shape
    cp = w.shape[-1]
    n_tiles = m_total // tm

    def kernel(*refs):
        if apply_act:
            x_ref, w_ref, b_ref, sc_ref, sh_ref, y_ref, s1_ref, m2_ref = refs
        else:
            x_ref, w_ref, b_ref, y_ref, s1_ref, m2_ref = refs
        x = x_ref[...]
        if apply_act:
            z = x.astype(jnp.float32) * sc_ref[...] + sh_ref[...]
            x = jnp.where(z >= 0, z, _LEAKY_SLOPE * z).astype(jnp.bfloat16)
        y = jnp.dot(x, w_ref[...], preferred_element_type=jnp.float32) + b_ref[...]
        y_ref[...] = y.astype(jnp.bfloat16)
        s1 = jnp.sum(y, axis=0, keepdims=True)
        d = y - s1 * (1.0 / tm)
        s1_ref[...] = s1.reshape(1, 1, cp)
        m2_ref[...] = jnp.sum(d * d, axis=0, keepdims=True).reshape(1, 1, cp)

    in_specs = [
        pl.BlockSpec((tm, k), lambda i: (i, 0)),
        pl.BlockSpec((k, cp), lambda i: (0, 0)),
        pl.BlockSpec((1, cp), lambda i: (0, 0)),
    ]
    args = [x2d, w, bias]
    if apply_act:
        in_specs += [pl.BlockSpec((1, k), lambda i: (0, 0)),
                     pl.BlockSpec((1, k), lambda i: (0, 0))]
        args += [sc, sh]

    flops = 2 * m_total * k * cp + (5 * m_total * k if apply_act else 0)
    bytes_accessed = (x2d.size * 2 + w.size * 2 + bias.size * 4
                      + (2 * k * 4 if apply_act else 0)
                      + m_total * cp * 2 + 2 * n_tiles * cp * 4)

    return pl.pallas_call(
        kernel,
        out_shape=(
            jax.ShapeDtypeStruct((m_total, cp), jnp.bfloat16),
            jax.ShapeDtypeStruct((n_tiles, 1, cp), jnp.float32),
            jax.ShapeDtypeStruct((n_tiles, 1, cp), jnp.float32),
        ),
        grid=(n_tiles,),
        in_specs=in_specs,
        out_specs=(
            pl.BlockSpec((tm, cp), lambda i: (i, 0)),
            pl.BlockSpec((1, 1, cp), lambda i: (i, 0, 0)),
            pl.BlockSpec((1, 1, cp), lambda i: (i, 0, 0)),
        ),
        compiler_params=_compiler_params(),
        cost_estimate=pl.CostEstimate(flops=flops, transcendentals=0,
                                      bytes_accessed=bytes_accessed),
    )(*args)


def _bn_act_apply(y2d, scale, shift):
    """Final-layer only: per-channel affine (global BN) + LeakyReLU, f32 output."""
    m_total, cp = y2d.shape
    tm = _pick_m_tile(m_total, cp * 16, _TILE_BUDGET)
    n_tiles = m_total // tm
    sc = scale.reshape(1, cp)
    sh = shift.reshape(1, cp)

    def kernel(y_ref, sc_ref, sh_ref, o_ref):
        z = y_ref[...].astype(jnp.float32) * sc_ref[...] + sh_ref[...]
        o_ref[...] = jnp.where(z >= 0, z, _LEAKY_SLOPE * z)

    bytes_accessed = m_total * cp * 2 + m_total * cp * 4 + 2 * cp * 4
    return pl.pallas_call(
        kernel,
        out_shape=jax.ShapeDtypeStruct((m_total, cp), jnp.float32),
        grid=(n_tiles,),
        in_specs=[
            pl.BlockSpec((tm, cp), lambda i: (i, 0)),
            pl.BlockSpec((1, cp), lambda i: (0, 0)),
            pl.BlockSpec((1, cp), lambda i: (0, 0)),
        ],
        out_specs=pl.BlockSpec((tm, cp), lambda i: (i, 0)),
        compiler_params=_compiler_params(),
        cost_estimate=pl.CostEstimate(flops=4 * m_total * cp, transcendentals=0,
                                      bytes_accessed=bytes_accessed),
    )(y2d, sc, sh)


# ----------------------------------------------------------------------------
# Global BatchNorm scale/shift from per-tile (sum, centered M2) statistics
# ----------------------------------------------------------------------------
def _bn_scale_shift(s1, m2, rows_per_tile, m_rows, gamma, beta):
    s1 = s1[:, 0, :]                                  # (n_tiles, cp)
    m2 = m2[:, 0, :]
    mean = jnp.sum(s1, axis=0) / m_rows
    mu_t = s1 / rows_per_tile
    m2_tot = jnp.sum(m2, axis=0) + rows_per_tile * jnp.sum((mu_t - mean) ** 2, axis=0)
    var = jnp.maximum(m2_tot / m_rows, 0.0)           # biased variance (train mode)
    inv = lax.rsqrt(var + _BN_EPS)
    scale = gamma * inv
    shift = beta - mean * scale
    return scale, shift


# ----------------------------------------------------------------------------
# Staging (strided slices only; no gathers, no intermediate full unfold tensor)
# ----------------------------------------------------------------------------
def _stage_conv4x4_input(a, th, n_rt, pad_vals):
    """a: (N, H, W, cin_p) pre-activation bf16 -> (N*n_rt, (th+1)*wo, 8*cin_p) bf16
    row-band tiles (1-row halo), built per band directly from the padded input."""
    n, h, w, cin_p = a.shape
    ho, wo = h // 2, w // 2
    pv = pad_vals.astype(a.dtype)
    # Spatial pad with the per-channel value that maps to 0 under the fused
    # BN affine + LeakyReLU of the consumer kernel (zero when no fused act).
    row = jnp.broadcast_to(pv, (n, 1, w, cin_p))
    xp = jnp.concatenate([row, a, row], axis=1)                 # (N, H+2, W, c)
    col = jnp.broadcast_to(pv, (n, h + 2, 1, cin_p))
    xp = jnp.concatenate([col, xp, col], axis=2)                # (N, H+2, W+2, c)

    bands = []
    for b in range(n_rt):
        xb = lax.slice_in_dim(xp, 2 * b * th, 2 * b * th + 2 * th + 2, 1, axis=1)
        cols = [lax.slice_in_dim(xb, i, i + 2 * wo - 1, 2, axis=2) for i in range(4)]
        xwb = jnp.stack(cols, axis=3)                           # (N, 2(th+1), wo, 4, c)
        xwb = xwb.reshape(n, th + 1, 2, wo, 4, cin_p)
        xwb = jnp.transpose(xwb, (0, 1, 3, 2, 4, 5))            # (N, th+1, wo, 2, 4, c)
        bands.append(xwb.reshape(n, 1, (th + 1) * wo, 8 * cin_p))
    xt = jnp.concatenate(bands, axis=1)
    return xt.reshape(n * n_rt, (th + 1) * wo, 8 * cin_p)


# ----------------------------------------------------------------------------
# Layer wrappers
# ----------------------------------------------------------------------------
def _conv4x4s2_layer(a, lp, in_scale, in_shift):
    """a: (N, H, W, cin_p) bf16 pre-activation -> (N, H/2, W/2, cp) bf16 pre-BN."""
    n, h, w, cin_p = a.shape
    cp = lp["cp"]
    ho, wo = h // 2, w // 2
    k_tap = 8 * cin_p
    apply_act = in_scale is not None

    th = _choose_conv_row_tile(ho, wo, k_tap, cp, _TILE_BUDGET)
    n_rt = ho // th
    rows = th * wo
    m_total = n * ho * wo

    if apply_act:
        safe = jnp.where(in_scale == 0, 1.0, in_scale)
        # NOTE: if gamma==0 exactly the pad value is degenerate (corner case).
        pad_vals = jnp.where(in_scale == 0, 0.0, -in_shift / safe)
        sc_k = jnp.tile(in_scale, 8).reshape(1, k_tap)
        sh_k = jnp.tile(in_shift, 8).reshape(1, k_tap)
    else:
        pad_vals = jnp.zeros((cin_p,), jnp.float32)
        sc_k = sh_k = None

    xt = _stage_conv4x4_input(a, th, n_rt, pad_vals)
    y, s1, m2 = _conv4x4s2_matmul(xt, lp["w"], lp["b"], sc_k, sh_k,
                                  wo=wo, rows=rows, apply_act=apply_act)
    scale, shift = _bn_scale_shift(s1, m2, rows, m_total, lp["gamma"], lp["beta"])
    return y.reshape(n, ho, wo, cp), scale, shift


def _conv1x1_layer(a, lp, in_scale, in_shift):
    """a: (N, H, W, cin_p) bf16 pre-activation -> (N, H, W, cp) bf16 pre-BN."""
    n, h, w, cin_p = a.shape
    cp = lp["cp"]
    m_total = n * h * w
    apply_act = in_scale is not None

    x2d = a.reshape(m_total, cin_p).astype(jnp.bfloat16)
    sc = in_scale.reshape(1, cin_p) if apply_act else None
    sh = in_shift.reshape(1, cin_p) if apply_act else None

    row_bytes = 2 * (cin_p * 2 + cp * 2) + cin_p * 6 + cp * 4
    w_bytes = 2 * (cin_p * cp * 2)
    tm = _pick_m_tile(m_total, row_bytes,
                      max(_TILE_BUDGET - 2 * w_bytes, _TILE_BUDGET // 4))
    y, s1, m2 = _dense_matmul(x2d, lp["w"], lp["b"], sc, sh,
                              tm=tm, apply_act=apply_act)
    scale, shift = _bn_scale_shift(s1, m2, tm, m_total, lp["gamma"], lp["beta"])
    return y.reshape(n, h, w, cp), scale, shift


# ----------------------------------------------------------------------------
# Parameters
# ----------------------------------------------------------------------------
def init_encoder_params(key, in_channels, hidden_dims, embedding_dim):
    """Deterministic synthetic init in PyTorch layouts (Conv2d OIHW, BN vectors)."""
    params = []
    c_in = in_channels
    layer_defs = [(h, 4, 2, 1) for h in hidden_dims] + [(embedding_dim, 1, 1, 0)]
    for c_out, k, s, p in layer_defs:
        key, kw, kb = jax.random.split(key, 3)
        fan_in = c_in * k * k
        w = jax.random.normal(kw, (c_out, c_in, k, k), jnp.float32) / jnp.sqrt(fan_in)
        b = jax.random.normal(kb, (c_out,), jnp.float32) / jnp.sqrt(fan_in)
        gamma = jnp.ones((c_out,), jnp.float32)
        beta = jnp.zeros((c_out,), jnp.float32)
        params.append((w, b, gamma, beta, k, s, p))
        c_in = c_out
    return params


def prepare_kernel_params(raw_params, in_channels):
    """Pad channels (first-layer cin to a multiple of 16 so per-tap K % 128 == 0,
    output channels to multiples of 128), build the two-tap weight layout, bf16."""
    kparams = []
    c_in_real = in_channels
    cin_p = _round_up(in_channels, 16)
    for (w_oihw, b, gamma, beta, k, s, p) in raw_params:
        c_out = w_oihw.shape[0]
        cp = _round_up(c_out, _LANE)
        w_k = jnp.transpose(w_oihw, (2, 3, 1, 0))                  # (kh, kw, ci, co)
        w_k = jnp.pad(w_k, ((0, 0), (0, 0),
                            (0, cin_p - c_in_real), (0, cp - c_out)))
        if k == 4:
            w_kernel = w_k.reshape(2, 2, 4, cin_p, cp).reshape(2, 8 * cin_p, cp)
            kind = "conv4x4"
        else:
            w_kernel = w_k.reshape(cin_p, cp)
            kind = "conv1x1"
        pad_c = (0, cp - c_out)
        kparams.append(dict(
            kind=kind,
            w=w_kernel.astype(jnp.bfloat16),
            b=jnp.pad(b, pad_c).reshape(1, cp),
            gamma=jnp.pad(gamma, pad_c),       # 0-padded: pad channels stay exactly 0
            beta=jnp.pad(beta, pad_c),
            cin_p=cin_p, cp=cp, c_out=c_out,
        ))
        c_in_real = c_out
        cin_p = cp
    return kparams


def encoder_forward(x_nchw, kparams):
    """x_nchw: (N, C_in, H, W) -> (N, embedding_dim, H_out, W_out), PyTorch layout."""
    x = jnp.transpose(x_nchw, (0, 2, 3, 1)).astype(jnp.float32)    # NCHW -> NHWC
    pad_c = kparams[0]["cin_p"] - x.shape[-1]
    if pad_c:
        x = jnp.pad(x, ((0, 0), (0, 0), (0, 0), (0, pad_c)))
    act = x.astype(jnp.bfloat16)             # pre-activation stream (bf16 between layers)
    in_scale = in_shift = None               # no fused input activation for layer 0
    for lp in kparams:
        if lp["kind"] == "conv4x4":
            act, in_scale, in_shift = _conv4x4s2_layer(act, lp, in_scale, in_shift)
        else:
            act, in_scale, in_shift = _conv1x1_layer(act, lp, in_scale, in_shift)
    n, ho, wo, cp = act.shape
    out = _bn_act_apply(act.reshape(n * ho * wo, cp), in_scale, in_shift)
    out = out.reshape(n, ho, wo, cp)[..., : kparams[-1]["c_out"]]  # drop lane padding
    return jnp.transpose(out, (0, 3, 1, 2))                        # NHWC -> NCHW


# ----------------------------------------------------------------------------
# Plain-JAX reference with the same precision policy (bf16 MXU operands & bf16
# intermediates, f32 accumulation, f32 BatchNorm statistics / LeakyReLU)
# ----------------------------------------------------------------------------
def encoder_forward_ref(x_nchw, raw_params):
    x = jnp.transpose(x_nchw, (0, 2, 3, 1)).astype(jnp.float32)
    last = len(raw_params) - 1
    for li, (w_oihw, b, gamma, beta, k, s, p) in enumerate(raw_params):
        c_out = w_oihw.shape[0]
        w_hwio = jnp.transpose(w_oihw, (2, 3, 1, 0))
        y = lax.conv_general_dilated(
            x.astype(jnp.bfloat16), w_hwio.astype(jnp.bfloat16),
            window_strides=(s, s), padding=[(p, p), (p, p)],
            dimension_numbers=("NHWC", "HWIO", "NHWC"),
            preferred_element_type=jnp.float32)
        y = y + b.reshape(1, 1, 1, c_out)
        mean = jnp.mean(y, axis=(0, 1, 2), keepdims=True)
        var = jnp.mean((y - mean) ** 2, axis=(0, 1, 2), keepdims=True)
        yb = y.astype(jnp.bfloat16).astype(jnp.float32)         # bf16 intermediate y
        z = (yb - mean) * lax.rsqrt(var + _BN_EPS)
        z = z * gamma.reshape(1, 1, 1, c_out) + beta.reshape(1, 1, 1, c_out)
        a = jnp.where(z >= 0, z, _LEAKY_SLOPE * z)
        x = a if li == last else a.astype(jnp.bfloat16).astype(jnp.float32)
    return jnp.transpose(x, (0, 3, 1, 2))


if __name__ == "__main__":
    key = jax.random.PRNGKey(0)
    key, kx, kp = jax.random.split(key, 3)

    # Small shapes consistent with the module.
    batch, in_channels, spatial = 2, 4, 16
    hidden_dims = [8, 16]
    embedding_dim = 32

    x = jax.random.normal(kx, (batch, in_channels, spatial, spatial), jnp.float32)
    raw_params = init_encoder_params(kp, in_channels, hidden_dims, embedding_dim)
    kparams = prepare_kernel_params(raw_params, in_channels)

    fwd = jax.jit(functools.partial(encoder_forward, kparams=kparams))
    out = jax.block_until_ready(fwd(x))

    assert out.shape == (batch, embedding_dim, spatial // 4, spatial // 4), out.shape
    ref = jax.block_until_ready(encoder_forward_ref(x, raw_params))
    assert bool(jnp.all(jnp.isfinite(out)))
    err = float(jnp.max(jnp.abs(out - ref)))
    assert jnp.allclose(out, ref, atol=2e-2, rtol=2e-2), err

    print("KERNEL_OK")
</pallas_src>

<mosaic_0001>
module attributes {stable_mosaic.version = 11 : i64} {
  func.func @kernel(%arg0: i32, %arg1: memref<1x72x128xbf16, #tpu.memory_space<vmem>>, %arg2: memref<2x128x128xbf16, #tpu.memory_space<vmem>>, %arg3: memref<1x128xf32, #tpu.memory_space<vmem>>, %arg4: memref<64x128xbf16, #tpu.memory_space<vmem>>, %arg5: memref<1x1x128xf32, #tpu.memory_space<vmem>>, %arg6: memref<1x1x128xf32, #tpu.memory_space<vmem>>) attributes {dimension_semantics = [#tpu.dimension_semantics<parallel>], iteration_bounds = array<i64: 2>, scalar_prefetch = 0 : i64, scratch_operands = 0 : i64, tpu.core_type = #tpu.core_type<tc>, window_params = [{transform_indices = @transform_0, window_bounds = array<i64: 1, 72, 128>}, {pipeline_mode = #tpu.pipeline_mode<synchronous>, transform_indices = @transform_1, window_bounds = array<i64: 2, 128, 128>}, {pipeline_mode = #tpu.pipeline_mode<synchronous>, transform_indices = @transform_2, window_bounds = array<i64: 1, 128>}, {transform_indices = @transform_3, window_bounds = array<i64: 64, 128>}, {transform_indices = @transform_4, window_bounds = array<i64: 1, 1, 128>}, {transform_indices = @transform_5, window_bounds = array<i64: 1, 1, 128>}]} {
    %c0 = arith.constant 0 : index
    %c0_0 = arith.constant 0 : index
    %c0_1 = arith.constant 0 : index
    %0 = vector.load %arg1[%c0, %c0_0, %c0_1] : memref<1x72x128xbf16, #tpu.memory_space<vmem>>, vector<1x72x128xbf16>
    %1 = vector.shape_cast %0 : vector<1x72x128xbf16> to vector<72x128xbf16>
    %2 = vector.extract_strided_slice %1 {offsets = [0, 0], sizes = [64, 128], strides = [1, 1]} : vector<72x128xbf16> to vector<64x128xbf16>
    %c0_2 = arith.constant 0 : index
    %c0_3 = arith.constant 0 : index
    %c0_4 = arith.constant 0 : index
    %3 = vector.load %arg2[%c0_2, %c0_3, %c0_4] : memref<2x128x128xbf16, #tpu.memory_space<vmem>>, vector<1x128x128xbf16>
    %4 = vector.shape_cast %3 : vector<1x128x128xbf16> to vector<128x128xbf16>
    %cst = arith.constant dense<0.000000e+00> : vector<64x128xf32>
    %5 = tpu.matmul %2, %4, %cst {dimension_numbers = #tpu.dot_dimension_numbers<[1], [0], [0], [1], [0, 0, 1, 1], [], []>} : vector<64x128xbf16>, vector<128x128xbf16>, vector<64x128xf32> -> vector<64x128xf32>
    %6 = vector.extract_strided_slice %1 {offsets = [8, 0], sizes = [64, 128], strides = [1, 1]} : vector<72x128xbf16> to vector<64x128xbf16>
    %c1 = arith.constant 1 : index
    %c0_5 = arith.constant 0 : index
    %c0_6 = arith.constant 0 : index
    %7 = vector.load %arg2[%c1, %c0_5, %c0_6] : memref<2x128x128xbf16, #tpu.memory_space<vmem>>, vector<1x128x128xbf16>
    %8 = vector.shape_cast %7 : vector<1x128x128xbf16> to vector<128x128xbf16>
    %cst_7 = arith.constant dense<0.000000e+00> : vector<64x128xf32>
    %9 = tpu.matmul %6, %8, %cst_7 {dimension_numbers = #tpu.dot_dimension_numbers<[1], [0], [0], [1], [0, 0, 1, 1], [], []>} : vector<64x128xbf16>, vector<128x128xbf16>, vector<64x128xf32> -> vector<64x128xf32>
    %10 = arith.addf %5, %9 : vector<64x128xf32>
    %c0_8 = arith.constant 0 : index
    %c0_9 = arith.constant 0 : index
    %11 = vector.load %arg3[%c0_8, %c0_9] : memref<1x128xf32, #tpu.memory_space<vmem>>, vector<1x128xf32>
    %12 = vector.broadcast %11 : vector<1x128xf32> to vector<64x128xf32>
    %13 = arith.addf %10, %12 : vector<64x128xf32>
    %14 = arith.truncf %13 : vector<64x128xf32> to vector<64x128xbf16>
    %c0_10 = arith.constant 0 : index
    %c0_11 = arith.constant 0 : index
    %15 = vector.load %arg4[%c0_10, %c0_11] : memref<64x128xbf16, #tpu.memory_space<vmem>>, vector<64x128xbf16>
    tpu.vector_store %arg4[%c0_10, %c0_11], %14 {strides = array<i32>} : memref<64x128xbf16, #tpu.memory_space<vmem>>, vector<64x128xbf16>,
    %cst_12 = arith.constant dense<0.000000e+00> : vector<128xf32>
    %16 = vector.multi_reduction <add>, %13, %cst_12 [0] : vector<64x128xf32> to vector<128xf32>
    %17 = vector.shape_cast %16 : vector<128xf32> to vector<1x128xf32>
    %cst_13 = arith.constant 1.562500e-02 : f32
    %18 = vector.broadcast %cst_13 : f32 to vector<1x128xf32>
    %19 = arith.mulf %17, %18 : vector<1x128xf32>
    %20 = vector.broadcast %19 : vector<1x128xf32> to vector<64x128xf32>
    %21 = arith.subf %13, %20 : vector<64x128xf32>
    %22 = vector.shape_cast %17 : vector<1x128xf32> to vector<1x1x128xf32>
    %c0_14 = arith.constant 0 : index
    %c0_15 = arith.constant 0 : index
    %c0_16 = arith.constant 0 : index
    %23 = vector.load %arg5[%c0_14, %c0_15, %c0_16] : memref<1x1x128xf32, #tpu.memory_space<vmem>>, vector<1x1x128xf32>
    tpu.vector_store %arg5[%c0_14, %c0_15, %c0_16], %22 {strides = array<i32>} : memref<1x1x128xf32, #tpu.memory_space<vmem>>, vector<1x1x128xf32>,
    %24 = arith.mulf %21, %21 : vector<64x128xf32>
    %cst_17 = arith.constant dense<0.000000e+00> : vector<128xf32>
    %25 = vector.multi_reduction <add>, %24, %cst_17 [0] : vector<64x128xf32> to vector<128xf32>
    %26 = vector.shape_cast %25 : vector<128xf32> to vector<1x128xf32>
    %27 = vector.shape_cast %26 : vector<1x128xf32> to vector<1x1x128xf32>
    %c0_18 = arith.constant 0 : index
    %c0_19 = arith.constant 0 : index
    %c0_20 = arith.constant 0 : index
    %28 = vector.load %arg6[%c0_18, %c0_19, %c0_20] : memref<1x1x128xf32, #tpu.memory_space<vmem>>, vector<1x1x128xf32>
    tpu.vector_store %arg6[%c0_18, %c0_19, %c0_20], %27 {strides = array<i32>} : memref<1x1x128xf32, #tpu.memory_space<vmem>>, vector<1x1x128xf32>,
    return
  }
  func.func @transform_0(%arg0: i32) -> (i32, i32, i32) {
    %c0_i32 = arith.constant 0 : i32
    %c0_i32_0 = arith.constant 0 : i32
    %c0_i32_1 = arith.constant 0 : i32
    return %arg0, %c0_i32, %c0_i32_0 : i32, i32, i32
  }
  func.func @transform_1(%arg0: i32) -> (i32, i32, i32) {
    %c0_i32 = arith.constant 0 : i32
    %c0_i32_0 = arith.constant 0 : i32
    %c0_i32_1 = arith.constant 0 : i32
    %c0_i32_2 = arith.constant 0 : i32
    return %c0_i32, %c0_i32_0, %c0_i32_1 : i32, i32, i32
  }
  func.func @transform_2(%arg0: i32) -> (i32, i32) {
    %c0_i32 = arith.constant 0 : i32
    %c0_i32_0 = arith.constant 0 : i32
    %c0_i32_1 = arith.constant 0 : i32
    return %c0_i32, %c0_i32_0 : i32, i32
  }
  func.func @transform_3(%arg0: i32) -> (i32, i32) {
    %c0_i32 = arith.constant 0 : i32
    %c0_i32_0 = arith.constant 0 : i32
    return %arg0, %c0_i32 : i32, i32
  }
  func.func @transform_4(%arg0: i32) -> (i32, i32, i32) {
    %c0_i32 = arith.constant 0 : i32
    %c0_i32_0 = arith.constant 0 : i32
    %c0_i32_1 = arith.constant 0 : i32
    return %arg0, %c0_i32, %c0_i32_0 : i32, i32, i32
  }
  func.func @transform_5(%arg0: i32) -> (i32, i32, i32) {
    %c0_i32 = arith.constant 0 : i32
    %c0_i32_0 = arith.constant 0 : i32
    %c0_i32_1 = arith.constant 0 : i32
    return %arg0, %c0_i32, %c0_i32_0 : i32, i32, i32
  }
}

module attributes {stable_mosaic.version = 11 : i64} {
  func.func @kernel(%arg0: i32, %arg1: memref<1x20x1024xbf16, #tpu.memory_space<vmem>>, %arg2: memref<2x1024x128xbf16, #tpu.memory_space<vmem>>, %arg3: memref<1x128xf32, #tpu.memory_space<vmem>>, %arg4: memref<1x1024xf32, #tpu.memory_space<vmem>>, %arg5: memref<1x1024xf32, #tpu.memory_space<vmem>>, %arg6: memref<16x128xbf16, #tpu.memory_space<vmem>>, %arg7: memref<1x1x128xf32, #tpu.memory_space<vmem>>, %arg8: memref<1x1x128xf32, #tpu.memory_space<vmem>>) attributes {dimension_semantics = [#tpu.dimension_semantics<parallel>], iteration_bounds = array<i64: 2>, scalar_prefetch = 0 : i64, scratch_operands = 0 : i64, tpu.core_type = #tpu.core_type<tc>, window_params = [{transform_indices = @transform_0, window_bounds = array<i64: 1, 20, 1024>}, {pipeline_mode = #tpu.pipeline_mode<synchronous>, transform_indices = @transform_1, window_bounds = array<i64: 2, 1024, 128>}, {pipeline_mode = #tpu.pipeline_mode<synchronous>, transform_indices = @transform_2, window_bounds = array<i64: 1, 128>}, {pipeline_mode = #tpu.pipeline_mode<synchronous>, transform_indices = @transform_3, window_bounds = array<i64: 1, 1024>}, {pipeline_mode = #tpu.pipeline_mode<synchronous>, transform_indices = @transform_4, window_bounds = array<i64: 1, 1024>}, {transform_indices = @transform_5, window_bounds = array<i64: 16, 128>}, {transform_indices = @transform_6, window_bounds = array<i64: 1, 1, 128>}, {transform_indices = @transform_7, window_bounds = array<i64: 1, 1, 128>}]} {
    %c0 = arith.constant 0 : index
    %c0_0 = arith.constant 0 : index
    %c0_1 = arith.constant 0 : index
    %0 = vector.load %arg1[%c0, %c0_0, %c0_1] : memref<1x20x1024xbf16, #tpu.memory_space<vmem>>, vector<1x20x1024xbf16>
    %1 = vector.shape_cast %0 : vector<1x20x1024xbf16> to vector<20x1024xbf16>
    %2 = arith.extf %1 : vector<20x1024xbf16> to vector<20x1024xf32>
    %c0_2 = arith.constant 0 : index
    %c0_3 = arith.constant 0 : index
    %3 = vector.load %arg4[%c0_2, %c0_3] : memref<1x1024xf32, #tpu.memory_space<vmem>>, vector<1x1024xf32>
    %4 = vector.broadcast %3 : vector<1x1024xf32> to vector<20x1024xf32>
    %5 = arith.mulf %2, %4 : vector<20x1024xf32>
    %c0_4 = arith.constant 0 : index
    %c0_5 = arith.constant 0 : index
    %6 = vector.load %arg5[%c0_4, %c0_5] : memref<1x1024xf32, #tpu.memory_space<vmem>>, vector<1x1024xf32>
    %7 = vector.broadcast %6 : vector<1x1024xf32> to vector<20x1024xf32>
    %8 = arith.addf %5, %7 : vector<20x1024xf32>
    %cst = arith.constant 0.000000e+00 : f32
    %9 = vector.broadcast %cst : f32 to vector<20x1024xf32>
    %10 = arith.cmpf oge, %8, %9 : vector<20x1024xf32>
    %cst_6 = arith.constant 2.000000e-01 : f32
    %11 = vector.broadcast %cst_6 : f32 to vector<20x1024xf32>
    %12 = arith.mulf %11, %8 : vector<20x1024xf32>
    %13 = arith.select %10, %8, %12 : vector<20x1024xi1>, vector<20x1024xf32>
    %14 = arith.truncf %13 : vector<20x1024xf32> to vector<20x1024xbf16>
    %15 = vector.extract_strided_slice %14 {offsets = [0, 0], sizes = [16, 1024], strides = [1, 1]} : vector<20x1024xbf16> to vector<16x1024xbf16>
    %c0_7 = arith.constant 0 : index
    %c0_8 = arith.constant 0 : index
    %c0_9 = arith.constant 0 : index
    %16 = vector.load %arg2[%c0_7, %c0_8, %c0_9] : memref<2x1024x128xbf16, #tpu.memory_space<vmem>>, vector<1x1024x128xbf16>
    %17 = vector.shape_cast %16 : vector<1x1024x128xbf16> to vector<1024x128xbf16>
    %cst_10 = arith.constant dense<0.000000e+00> : vector<16x128xf32>
    %18 = tpu.matmul %15, %17, %cst_10 {dimension_numbers = #tpu.dot_dimension_numbers<[1], [0], [0], [1], [0, 0, 1, 1], [], []>} : vector<16x1024xbf16>, vector<1024x128xbf16>, vector<16x128xf32> -> vector<16x128xf32>
    %19 = vector.extract_strided_slice %14 {offsets = [4, 0], sizes = [16, 1024], strides = [1, 1]} : vector<20x1024xbf16> to vector<16x1024xbf16>
    %c1 = arith.constant 1 : index
    %c0_11 = arith.constant 0 : index
    %c0_12 = arith.constant 0 : index
    %20 = vector.load %arg2[%c1, %c0_11, %c0_12] : memref<2x1024x128xbf16, #tpu.memory_space<vmem>>, vector<1x1024x128xbf16>
    %21 = vector.shape_cast %20 : vector<1x1024x128xbf16> to vector<1024x128xbf16>
    %cst_13 = arith.constant dense<0.000000e+00> : vector<16x128xf32>
    %22 = tpu.matmul %19, %21, %cst_13 {dimension_numbers = #tpu.dot_dimension_numbers<[1], [0], [0], [1], [0, 0, 1, 1], [], []>} : vector<16x1024xbf16>, vector<1024x128xbf16>, vector<16x128xf32> -> vector<16x128xf32>
    %23 = arith.addf %18, %22 : vector<16x128xf32>
    %c0_14 = arith.constant 0 : index
    %c0_15 = arith.constant 0 : index
    %24 = vector.load %arg3[%c0_14, %c0_15] : memref<1x128xf32, #tpu.memory_space<vmem>>, vector<1x128xf32>
    %25 = vector.broadcast %24 : vector<1x128xf32> to vector<16x128xf32>
    %26 = arith.addf %23, %25 : vector<16x128xf32>
    %27 = arith.truncf %26 : vector<16x128xf32> to vector<16x128xbf16>
    %c0_16 = arith.constant 0 : index
    %c0_17 = arith.constant 0 : index
    %28 = vector.load %arg6[%c0_16, %c0_17] : memref<16x128xbf16, #tpu.memory_space<vmem>>, vector<16x128xbf16>
    tpu.vector_store %arg6[%c0_16, %c0_17], %27 {strides = array<i32>} : memref<16x128xbf16, #tpu.memory_space<vmem>>, vector<16x128xbf16>,
    %cst_18 = arith.constant dense<0.000000e+00> : vector<128xf32>
    %29 = vector.multi_reduction <add>, %26, %cst_18 [0] : vector<16x128xf32> to vector<128xf32>
    %30 = vector.shape_cast %29 : vector<128xf32> to vector<1x128xf32>
    %cst_19 = arith.constant 6.250000e-02 : f32
    %31 = vector.broadcast %cst_19 : f32 to vector<1x128xf32>
    %32 = arith.mulf %30, %31 : vector<1x128xf32>
    %33 = vector.broadcast %32 : vector<1x128xf32> to vector<16x128xf32>
    %34 = arith.subf %26, %33 : vector<16x128xf32>
    %35 = vector.shape_cast %30 : vector<1x128xf32> to vector<1x1x128xf32>
    %c0_20 = arith.constant 0 : index
    %c0_21 = arith.constant 0 : index
    %c0_22 = arith.constant 0 : index
    %36 = vector.load %arg7[%c0_20, %c0_21, %c0_22] : memref<1x1x128xf32, #tpu.memory_space<vmem>>, vector<1x1x128xf32>
    tpu.vector_store %arg7[%c0_20, %c0_21, %c0_22], %35 {strides = array<i32>} : memref<1x1x128xf32, #tpu.memory_space<vmem>>, vector<1x1x128xf32>,
    %37 = arith.mulf %34, %34 : vector<16x128xf32>
    %cst_23 = arith.constant dense<0.000000e+00> : vector<128xf32>
    %38 = vector.multi_reduction <add>, %37, %cst_23 [0] : vector<16x128xf32> to vector<128xf32>
    %39 = vector.shape_cast %38 : vector<128xf32> to vector<1x128xf32>
    %40 = vector.shape_cast %39 : vector<1x128xf32> to vector<1x1x128xf32>
    %c0_24 = arith.constant 0 : index
    %c0_25 = arith.constant 0 : index
    %c0_26 = arith.constant 0 : index
    %41 = vector.load %arg8[%c0_24, %c0_25, %c0_26] : memref<1x1x128xf32, #tpu.memory_space<vmem>>, vector<1x1x128xf32>
    tpu.vector_store %arg8[%c0_24, %c0_25, %c0_26], %40 {strides = array<i32>} : memref<1x1x128xf32, #tpu.memory_space<vmem>>, vector<1x1x128xf32>,
    return
  }
  func.func @transform_0(%arg0: i32) -> (i32, i32, i32) {
    %c0_i32 = arith.constant 0 : i32
    %c0_i32_0 = arith.constant 0 : i32
    %c0_i32_1 = arith.constant 0 : i32
    return %arg0, %c0_i32, %c0_i32_0 : i32, i32, i32
  }
  func.func @transform_1(%arg0: i32) -> (i32, i32, i32) {
    %c0_i32 = arith.constant 0 : i32
    %c0_i32_0 = arith.constant 0 : i32
    %c0_i32_1 = arith.constant 0 : i32
    %c0_i32_2 = arith.constant 0 : i32
    return %c0_i32, %c0_i32_0, %c0_i32_1 : i32, i32, i32
  }
  func.func @transform_2(%arg0: i32) -> (i32, i32) {
    %c0_i32 = arith.constant 0 : i32
    %c0_i32_0 = arith.constant 0 : i32
    %c0_i32_1 = arith.constant 0 : i32
    return %c0_i32, %c0_i32_0 : i32, i32
  }
  func.func @transform_3(%arg0: i32) -> (i32, i32) {
    %c0_i32 = arith.constant 0 : i32
    %c0_i32_0 = arith.constant 0 : i32
    %c0_i32_1 = arith.constant 0 : i32
    return %c0_i32, %c0_i32_0 : i32, i32
  }
  func.func @transform_4(%arg0: i32) -> (i32, i32) {
    %c0_i32 = arith.constant 0 : i32
    %c0_i32_0 = arith.constant 0 : i32
    %c0_i32_1 = arith.constant 0 : i32
    return %c0_i32, %c0_i32_0 : i32, i32
  }
  func.func @transform_5(%arg0: i32) -> (i32, i32) {
    %c0_i32 = arith.constant 0 : i32
    %c0_i32_0 = arith.constant 0 : i32
    return %arg0, %c0_i32 : i32, i32
  }
  func.func @transform_6(%arg0: i32) -> (i32, i32, i32) {
    %c0_i32 = arith.constant 0 : i32
    %c0_i32_0 = arith.constant 0 : i32
    %c0_i32_1 = arith.constant 0 : i32
    return %arg0, %c0_i32, %c0_i32_0 : i32, i32, i32
  }
  func.func @transform_7(%arg0: i32) -> (i32, i32, i32) {
    %c0_i32 = arith.constant 0 : i32
    %c0_i32_0 = arith.constant 0 : i32
    %c0_i32_1 = arith.constant 0 : i32
    return %arg0, %c0_i32, %c0_i32_0 : i32, i32, i32
  }
}

module attributes {stable_mosaic.version = 11 : i64} {
  func.func @kernel(%arg0: i32, %arg1: memref<32x128xbf16, #tpu.memory_space<vmem>>, %arg2: memref<128x128xbf16, #tpu.memory_space<vmem>>, %arg3: memref<1x128xf32, #tpu.memory_space<vmem>>, %arg4: memref<1x128xf32, #tpu.memory_space<vmem>>, %arg5: memref<1x128xf32, #tpu.memory_space<vmem>>, %arg6: memref<32x128xbf16, #tpu.memory_space<vmem>>, %arg7: memref<1x1x128xf32, #tpu.memory_space<vmem>>, %arg8: memref<1x1x128xf32, #tpu.memory_space<vmem>>) attributes {dimension_semantics = [#tpu.dimension_semantics<parallel>], iteration_bounds = array<i64: 1>, scalar_prefetch = 0 : i64, scratch_operands = 0 : i64, tpu.core_type = #tpu.core_type<tc>, window_params = [{transform_indices = @transform_0, window_bounds = array<i64: 32, 128>}, {pipeline_mode = #tpu.pipeline_mode<synchronous>, transform_indices = @transform_1, window_bounds = array<i64: 128, 128>}, {pipeline_mode = #tpu.pipeline_mode<synchronous>, transform_indices = @transform_2, window_bounds = array<i64: 1, 128>}, {pipeline_mode = #tpu.pipeline_mode<synchronous>, transform_indices = @transform_3, window_bounds = array<i64: 1, 128>}, {pipeline_mode = #tpu.pipeline_mode<synchronous>, transform_indices = @transform_4, window_bounds = array<i64: 1, 128>}, {transform_indices = @transform_5, window_bounds = array<i64: 32, 128>}, {transform_indices = @transform_6, window_bounds = array<i64: 1, 1, 128>}, {transform_indices = @transform_7, window_bounds = array<i64: 1, 1, 128>}]} {
    %c0 = arith.constant 0 : index
    %c0_0 = arith.constant 0 : index
    %0 = vector.load %arg1[%c0, %c0_0] : memref<32x128xbf16, #tpu.memory_space<vmem>>, vector<32x128xbf16>
    %1 = arith.extf %0 : vector<32x128xbf16> to vector<32x128xf32>
    %c0_1 = arith.constant 0 : index
    %c0_2 = arith.constant 0 : index
    %2 = vector.load %arg4[%c0_1, %c0_2] : memref<1x128xf32, #tpu.memory_space<vmem>>, vector<1x128xf32>
    %3 = vector.broadcast %2 : vector<1x128xf32> to vector<32x128xf32>
    %4 = arith.mulf %1, %3 : vector<32x128xf32>
    %c0_3 = arith.constant 0 : index
    %c0_4 = arith.constant 0 : index
    %5 = vector.load %arg5[%c0_3, %c0_4] : memref<1x128xf32, #tpu.memory_space<vmem>>, vector<1x128xf32>
    %6 = vector.broadcast %5 : vector<1x128xf32> to vector<32x128xf32>
    %7 = arith.addf %4, %6 : vector<32x128xf32>
    %cst = arith.constant 0.000000e+00 : f32
    %8 = vector.broadcast %cst : f32 to vector<32x128xf32>
    %9 = arith.cmpf oge, %7, %8 : vector<32x128xf32>
    %cst_5 = arith.constant 2.000000e-01 : f32
    %10 = vector.broadcast %cst_5 : f32 to vector<32x128xf32>
    %11 = arith.mulf %10, %7 : vector<32x128xf32>
    %12 = arith.select %9, %7, %11 : vector<32x128xi1>, vector<32x128xf32>
    %13 = arith.truncf %12 : vector<32x128xf32> to vector<32x128xbf16>
    %c0_6 = arith.constant 0 : index
    %c0_7 = arith.constant 0 : index
    %14 = vector.load %arg2[%c0_6, %c0_7] : memref<128x128xbf16, #tpu.memory_space<vmem>>, vector<128x128xbf16>
    %cst_8 = arith.constant dense<0.000000e+00> : vector<32x128xf32>
    %15 = tpu.matmul %13, %14, %cst_8 {dimension_numbers = #tpu.dot_dimension_numbers<[1], [0], [0], [1], [0, 0, 1, 1], [], []>} : vector<32x128xbf16>, vector<128x128xbf16>, vector<32x128xf32> -> vector<32x128xf32>
    %c0_9 = arith.constant 0 : index
    %c0_10 = arith.constant 0 : index
    %16 = vector.load %arg3[%c0_9, %c0_10] : memref<1x128xf32, #tpu.memory_space<vmem>>, vector<1x128xf32>
    %17 = vector.broadcast %16 : vector<1x128xf32> to vector<32x128xf32>
    %18 = arith.addf %15, %17 : vector<32x128xf32>
    %19 = arith.truncf %18 : vector<32x128xf32> to vector<32x128xbf16>
    %c0_11 = arith.constant 0 : index
    %c0_12 = arith.constant 0 : index
    %20 = vector.load %arg6[%c0_11, %c0_12] : memref<32x128xbf16, #tpu.memory_space<vmem>>, vector<32x128xbf16>
    tpu.vector_store %arg6[%c0_11, %c0_12], %19 {strides = array<i32>} : memref<32x128xbf16, #tpu.memory_space<vmem>>, vector<32x128xbf16>,
    %cst_13 = arith.constant dense<0.000000e+00> : vector<128xf32>
    %21 = vector.multi_reduction <add>, %18, %cst_13 [0] : vector<32x128xf32> to vector<128xf32>
    %22 = vector.shape_cast %21 : vector<128xf32> to vector<1x128xf32>
    %cst_14 = arith.constant 3.125000e-02 : f32
    %23 = vector.broadcast %cst_14 : f32 to vector<1x128xf32>
    %24 = arith.mulf %22, %23 : vector<1x128xf32>
    %25 = vector.broadcast %24 : vector<1x128xf32> to vector<32x128xf32>
    %26 = arith.subf %18, %25 : vector<32x128xf32>
    %27 = vector.shape_cast %22 : vector<1x128xf32> to vector<1x1x128xf32>
    %c0_15 = arith.constant 0 : index
    %c0_16 = arith.constant 0 : index
    %c0_17 = arith.constant 0 : index
    %28 = vector.load %arg7[%c0_15, %c0_16, %c0_17] : memref<1x1x128xf32, #tpu.memory_space<vmem>>, vector<1x1x128xf32>
    tpu.vector_store %arg7[%c0_15, %c0_16, %c0_17], %27 {strides = array<i32>} : memref<1x1x128xf32, #tpu.memory_space<vmem>>, vector<1x1x128xf32>,
    %29 = arith.mulf %26, %26 : vector<32x128xf32>
    %cst_18 = arith.constant dense<0.000000e+00> : vector<128xf32>
    %30 = vector.multi_reduction <add>, %29, %cst_18 [0] : vector<32x128xf32> to vector<128xf32>
    %31 = vector.shape_cast %30 : vector<128xf32> to vector<1x128xf32>
    %32 = vector.shape_cast %31 : vector<1x128xf32> to vector<1x1x128xf32>
    %c0_19 = arith.constant 0 : index
    %c0_20 = arith.constant 0 : index
    %c0_21 = arith.constant 0 : index
    %33 = vector.load %arg8[%c0_19, %c0_20, %c0_21] : memref<1x1x128xf32, #tpu.memory_space<vmem>>, vector<1x1x128xf32>
    tpu.vector_store %arg8[%c0_19, %c0_20, %c0_21], %32 {strides = array<i32>} : memref<1x1x128xf32, #tpu.memory_space<vmem>>, vector<1x1x128xf32>,
    return
  }
  func.func @transform_0(%arg0: i32) -> (i32, i32) {
    %c0_i32 = arith.constant 0 : i32
    %c0_i32_0 = arith.constant 0 : i32
    return %arg0, %c0_i32 : i32, i32
  }
  func.func @transform_1(%arg0: i32) -> (i32, i32) {
    %c0_i32 = arith.constant 0 : i32
    %c0_i32_0 = arith.constant 0 : i32
    %c0_i32_1 = arith.constant 0 : i32
    return %c0_i32, %c0_i32_0 : i32, i32
  }
  func.func @transform_2(%arg0: i32) -> (i32, i32) {
    %c0_i32 = arith.constant 0 : i32
    %c0_i32_0 = arith.constant 0 : i32
    %c0_i32_1 = arith.constant 0 : i32
    return %c0_i32, %c0_i32_0 : i32, i32
  }
  func.func @transform_3(%arg0: i32) -> (i32, i32) {
    %c0_i32 = arith.constant 0 : i32
    %c0_i32_0 = arith.constant 0 : i32
    %c0_i32_1 = arith.constant 0 : i32
    return %c0_i32, %c0_i32_0 : i32, i32
  }
  func.func @transform_4(%arg0: i32) -> (i32, i32) {
    %c0_i32 = arith.constant 0 : i32
    %c0_i32_0 = arith.constant 0 : i32
    %c0_i32_1 = arith.constant 0 : i32
    return %c0_i32, %c0_i32_0 : i32, i32
  }
  func.func @transform_5(%arg0: i32) -> (i32, i32) {
    %c0_i32 = arith.constant 0 : i32
    %c0_i32_0 = arith.constant 0 : i32
    return %arg0, %c0_i32 : i32, i32
  }
  func.func @transform_6(%arg0: i32) -> (i32, i32, i32) {
    %c0_i32 = arith.constant 0 : i32
    %c0_i32_0 = arith.constant 0 : i32
    %c0_i32_1 = arith.constant 0 : i32
    return %arg0, %c0_i32, %c0_i32_0 : i32, i32, i32
  }
  func.func @transform_7(%arg0: i32) -> (i32, i32, i32) {
    %c0_i32 = arith.constant 0 : i32
    %c0_i32_0 = arith.constant 0 : i32
    %c0_i32_1 = arith.constant 0 : i32
    return %arg0, %c0_i32, %c0_i32_0 : i32, i32, i32
  }
}

module attributes {stable_mosaic.version = 11 : i64} {
  func.func @kernel(%arg0: i32, %arg1: memref<32x128xbf16, #tpu.memory_space<vmem>>, %arg2: memref<1x128xf32, #tpu.memory_space<vmem>>, %arg3: memref<1x128xf32, #tpu.memory_space<vmem>>, %arg4: memref<32x128xf32, #tpu.memory_space<vmem>>) attributes {dimension_semantics = [#tpu.dimension_semantics<parallel>], iteration_bounds = array<i64: 1>, scalar_prefetch = 0 : i64, scratch_operands = 0 : i64, tpu.core_type = #tpu.core_type<tc>, window_params = [{transform_indices = @transform_0, window_bounds = array<i64: 32, 128>}, {pipeline_mode = #tpu.pipeline_mode<synchronous>, transform_indices = @transform_1, window_bounds = array<i64: 1, 128>}, {pipeline_mode = #tpu.pipeline_mode<synchronous>, transform_indices = @transform_2, window_bounds = array<i64: 1, 128>}, {transform_indices = @transform_3, window_bounds = array<i64: 32, 128>}]} {
    %c0 = arith.constant 0 : index
    %c0_0 = arith.constant 0 : index
    %0 = vector.load %arg1[%c0, %c0_0] : memref<32x128xbf16, #tpu.memory_space<vmem>>, vector<32x128xbf16>
    %1 = arith.extf %0 : vector<32x128xbf16> to vector<32x128xf32>
    %c0_1 = arith.constant 0 : index
    %c0_2 = arith.constant 0 : index
    %2 = vector.load %arg2[%c0_1, %c0_2] : memref<1x128xf32, #tpu.memory_space<vmem>>, vector<1x128xf32>
    %3 = vector.broadcast %2 : vector<1x128xf32> to vector<32x128xf32>
    %4 = arith.mulf %1, %3 : vector<32x128xf32>
    %c0_3 = arith.constant 0 : index
    %c0_4 = arith.constant 0 : index
    %5 = vector.load %arg3[%c0_3, %c0_4] : memref<1x128xf32, #tpu.memory_space<vmem>>, vector<1x128xf32>
    %6 = vector.broadcast %5 : vector<1x128xf32> to vector<32x128xf32>
    %7 = arith.addf %4, %6 : vector<32x128xf32>
    %cst = arith.constant 0.000000e+00 : f32
    %8 = vector.broadcast %cst : f32 to vector<32x128xf32>
    %9 = arith.cmpf oge, %7, %8 : vector<32x128xf32>
    %cst_5 = arith.constant 2.000000e-01 : f32
    %10 = vector.broadcast %cst_5 : f32 to vector<32x128xf32>
    %11 = arith.mulf %10, %7 : vector<32x128xf32>
    %12 = arith.select %9, %7, %11 : vector<32x128xi1>, vector<32x128xf32>
    %c0_6 = arith.constant 0 : index
    %c0_7 = arith.constant 0 : index
    %13 = vector.load %arg4[%c0_6, %c0_7] : memref<32x128xf32, #tpu.memory_space<vmem>>, vector<32x128xf32>
    tpu.vector_store %arg4[%c0_6, %c0_7], %12 {strides = array<i32>} : memref<32x128xf32, #tpu.memory_space<vmem>>, vector<32x128xf32>,
    return
  }
  func.func @transform_0(%arg0: i32) -> (i32, i32) {
    %c0_i32 = arith.constant 0 : i32
    %c0_i32_0 = arith.constant 0 : i32
    return %arg0, %c0_i32 : i32, i32
  }
  func.func @transform_1(%arg0: i32) -> (i32, i32) {
    %c0_i32 = arith.constant 0 : i32
    %c0_i32_0 = arith.constant 0 : i32
    %c0_i32_1 = arith.constant 0 : i32
    return %c0_i32, %c0_i32_0 : i32, i32
  }
  func.func @transform_2(%arg0: i32) -> (i32, i32) {
    %c0_i32 = arith.constant 0 : i32
    %c0_i32_0 = arith.constant 0 : i32
    %c0_i32_1 = arith.constant 0 : i32
    return %c0_i32, %c0_i32_0 : i32, i32
  }
  func.func @transform_3(%arg0: i32) -> (i32, i32) {
    %c0_i32 = arith.constant 0 : i32
    %c0_i32_0 = arith.constant 0 : i32
    return %arg0, %c0_i32 : i32, i32
  }
}

</mosaic_0001>

<llo_original>
// kernel: encoder_forward.4
$region0: #{encoder_forward.4}
  #allocation0 [shape = 'u32[]', space=smem, size = 0x4, offset = 0x4, fixed_abs, tag = 'smem constant byte address 0x4 - core index']
  #allocation1 [shape = 'u32[144,128]{1,0:T(1,128)}', space=vmem, size = 0x12000, scoped, tag = 'internal scratch']
  %s0 = inlined_call_operand.vmem [shape: bf16[2,72,128], index: 0, kind: input, shape index: {}]
  %s1 = inlined_call_operand.vmem [shape: bf16[2,128,128], index: 1, kind: input, shape index: {}]
  %s2 = inlined_call_operand.vmem [shape: f32[1,128], index: 2, kind: input, shape index: {}]
  %s3 = inlined_call_operand.vmem [shape: bf16[128,128], index: 3, kind: output, shape index: {0}]
  %s4 = inlined_call_operand.vmem [shape: f32[2,1,128], index: 4, kind: output, shape index: {1}]
  %s5 = inlined_call_operand.vmem [shape: f32[2,1,128], index: 5, kind: output, shape index: {2}]
  %6 = xla_tuple %s3, %s4, %s5
  %s7 = sld [smem:[#allocation0]]
  $region61: #{encoder_forward.4} parent=0
    _
  %s9 = ssub.s32 1, %s7
  %s10 = scalar_select 0, %s9, %s7
  loop: start=0, step=1, limit=4
  $region2: #{encoder_forward.4} parent=0 // loop_pre_header
    _
  $region3: #{encoder_forward.4} parent=0 // loop_header
    %s12 = sphi 0, %s16
    %p13 = scmp.ge.s32.totalorder %s12, 4
    %s22 = sphi 0, %s24
    %s25 = sphi 0, %s22
    %s26 = sphi 0, %s25
    %s42 = sphi 0, %s26
    %s46 = sphi 0, %s46
    %s48 = sphi 0, %s46
    %s49 = sphi 0, %s48
    %s63 = sphi 0, %s49
    %s67 = sphi 0, %s67
    %s69 = sphi 0, %s67
    %s70 = sphi 0, %s69
    %s84 = sphi 0, %s70
    %s90 = sphi 0, %s92
    %s93 = sphi 0, %s90
    %s94 = sphi 0, %s93
    %s110 = sphi 0, %s94
    %s116 = sphi 0, %s118
    %s119 = sphi 0, %s116
    %s120 = sphi 0, %s119
    %s136 = sphi 0, %s120
    %s142 = sphi 0, %s144
    %s145 = sphi 0, %s142
    %s146 = sphi 0, %s145
    %s162 = sphi 0, %s146
  $region4: #{encoder_forward.4} parent=0 // loop_header_branch
    %15 = sbr.rel (%p13) target = $region8
  $region5: #{encoder_forward.4} parent=0 // loop_body
    %s17 = ssub.s32 %s12, 1
    %s18 = ssub.s32 %s12, 2
    %s19 = sadd.s32 %s12, 1
    %s20 = ssub.s32 %s12, %s19
    %p21 = scmp.eq.s32.totalorder %s20, 0
    %s23 = sadd.s32 %s22, 1
    %s24 = scalar_select %p21, %s22, %s23
    %p27 = pneg %p21
    %p28 = scmp.eq.s32.totalorder %s12, 1
    %p29 = por %p27, %p28
    %p30 = scmp.ne.s32.totalorder %s22, %s25
    %p31 = scmp.eq.s32.totalorder %s12, 0
    %p32 = por %p30, %p31
    %p33 = scmp.ne.s32.totalorder %s22, %s25
    %p34 = scmp.eq.s32.totalorder %s17, 1
    %p35 = por %p33, %p34
    %p36 = scmp.ne.s32.totalorder %s25, %s26
    %p37 = scmp.eq.s32.totalorder %s17, 0
    %p38 = por %p36, %p37
    %p39 = scmp.ne.s32.totalorder %s25, %s26
    %p40 = scmp.eq.s32.totalorder %s18, 1
    %p41 = por %p39, %p40
    %p43 = scmp.ne.s32.totalorder %s26, %s42
    %p44 = scmp.eq.s32.totalorder %s18, 0
    %p45 = por %p43, %p44
    %s47 = sadd.s32 %s46, 1
    %p50 = scmp.eq.s32.totalorder %s12, 1
    %p51 = scmp.ne.s32.totalorder %s46, %s48
    %p52 = scmp.eq.s32.totalorder %s12, 0
    %p53 = por %p51, %p52
    %p54 = scmp.ne.s32.totalorder %s46, %s48
    %p55 = scmp.eq.s32.totalorder %s17, 1
    %p56 = por %p54, %p55
    %p57 = scmp.ne.s32.totalorder %s48, %s49
    %p58 = scmp.eq.s32.totalorder %s17, 0
    %p59 = por %p57, %p58
    %p60 = scmp.ne.s32.totalorder %s48, %s49
    %p61 = scmp.eq.s32.totalorder %s18, 1
    %p62 = por %p60, %p61
    %p64 = scmp.ne.s32.totalorder %s49, %s63
    %p65 = scmp.eq.s32.totalorder %s18, 0
    %p66 = por %p64, %p65
    %s68 = sadd.s32 %s67, 1
    %p71 = scmp.eq.s32.totalorder %s12, 1
    %p72 = scmp.ne.s32.totalorder %s67, %s69
    %p73 = scmp.eq.s32.totalorder %s12, 0
    %p74 = por %p72, %p73
    %p75 = scmp.ne.s32.totalorder %s67, %s69
    %p76 = scmp.eq.s32.totalorder %s17, 1
    %p77 = por %p75, %p76
    %p78 = scmp.ne.s32.totalorder %s69, %s70
    %p79 = scmp.eq.s32.totalorder %s17, 0
    %p80 = por %p78, %p79
    %p81 = scmp.ne.s32.totalorder %s69, %s70
    %p82 = scmp.eq.s32.totalorder %s18, 1
    %p83 = por %p81, %p82
    %p85 = scmp.ne.s32.totalorder %s70, %s84
    %p86 = scmp.eq.s32.totalorder %s18, 0
    %p87 = por %p85, %p86
    %s88 = ssub.s32 %s12, %s19
    %p89 = scmp.eq.s32.totalorder %s88, 0
    %s91 = sadd.s32 %s90, 1
    %s92 = scalar_select %p89, %s90, %s91
    %p95 = pneg %p89
    %p96 = scmp.eq.s32.totalorder %s12, 1
    %p97 = por %p95, %p96
    %p98 = scmp.ne.s32.totalorder %s90, %s93
    %p99 = scmp.eq.s32.totalorder %s12, 0
    %p100 = por %p98, %p99
    %p101 = scmp.ne.s32.totalorder %s90, %s93
    %p102 = scmp.eq.s32.totalorder %s17, 1
    %p103 = por %p101, %p102
    %p104 = scmp.ne.s32.totalorder %s93, %s94
    %p105 = scmp.eq.s32.totalorder %s17, 0
    %p106 = por %p104, %p105
    %p107 = scmp.ne.s32.totalorder %s93, %s94
    %p108 = scmp.eq.s32.totalorder %s18, 1
    %p109 = por %p107, %p108
    %p111 = scmp.ne.s32.totalorder %s94, %s110
    %p112 = scmp.eq.s32.totalorder %s18, 0
    %p113 = por %p111, %p112
    %s114 = ssub.s32 %s12, %s19
    %p115 = scmp.eq.s32.totalorder %s114, 0
    %s117 = sadd.s32 %s116, 1
    %s118 = scalar_select %p115, %s116, %s117
    %p121 = pneg %p115
    %p122 = scmp.eq.s32.totalorder %s12, 1
    %p123 = por %p121, %p122
    %p124 = scmp.ne.s32.totalorder %s116, %s119
    %p125 = scmp.eq.s32.totalorder %s12, 0
    %p126 = por %p124, %p125
    %p127 = scmp.ne.s32.totalorder %s116, %s119
    %p128 = scmp.eq.s32.totalorder %s17, 1
    %p129 = por %p127, %p128
    %p130 = scmp.ne.s32.totalorder %s119, %s120
    %p131 = scmp.eq.s32.totalorder %s17, 0
    %p132 = por %p130, %p131
    %p133 = scmp.ne.s32.totalorder %s119, %s120
    %p134 = scmp.eq.s32.totalorder %s18, 1
    %p135 = por %p133, %p134
    %p137 = scmp.ne.s32.totalorder %s120, %s136
    %p138 = scmp.eq.s32.totalorder %s18, 0
    %p139 = por %p137, %p138
    %s140 = ssub.s32 %s12, %s19
    %p141 = scmp.eq.s32.totalorder %s140, 0
    %s143 = sadd.s32 %s142, 1
    %s144 = scalar_select %p141, %s142, %s143
    %p147 = pneg %p141
    %p148 = scmp.eq.s32.totalorder %s12, 1
    %p149 = por %p147, %p148
    %p150 = scmp.ne.s32.totalorder %s142, %s145
    %p151 = scmp.eq.s32.totalorder %s12, 0
    %p152 = por %p150, %p151
    %p153 = scmp.ne.s32.totalorder %s142, %s145
    %p154 = scmp.eq.s32.totalorder %s17, 1
    %p155 = por %p153, %p154
    %p156 = scmp.ne.s32.totalorder %s145, %s146
    %p157 = scmp.eq.s32.totalorder %s17, 0
    %p158 = por %p156, %p157
    %p159 = scmp.ne.s32.totalorder %s145, %s146
    %p160 = scmp.eq.s32.totalorder %s18, 1
    %p161 = por %p159, %p160
    %p163 = scmp.ne.s32.totalorder %s146, %s162
    %p164 = scmp.eq.s32.totalorder %s18, 0
    %p165 = por %p163, %p164
    %p166 = scmp.le.s32.totalorder 1, %s12
    %p167 = scmp.lt.s32.totalorder %s12, 3
    %p168 = pnand %p166, %p167
    %p169 = pneg %p168
    // Predicated region
    $region9: #{encoder_forward.4} parent=5 // pred_check
      _
    $region10: #{encoder_forward.4} parent=5 // pred_check_branch
      %171 = sbr.rel (%p168) target = $region12
    $region11: #{encoder_forward.4} parent=5 // pred_region
      %s172 = ssub.s32 %s12, 1
      // Predicated region
      $region13: #{encoder_forward.4} parent=11 // pred_check
        %p173 = pneg %p59
      $region14: #{encoder_forward.4} parent=11 // pred_check_branch
        %175 = sbr.rel (%p173) target = $region16
      $region15: #{encoder_forward.4} parent=11 // pred_region
        _
      $region16: #{encoder_forward.4} parent=11 // pred_fallthru
        _
      // Predicated region
      $region17: #{encoder_forward.4} parent=11 // pred_check
        %p176 = pneg %p80
      $region18: #{encoder_forward.4} parent=11 // pred_check_branch
        %178 = sbr.rel (%p176) target = $region20
      $region19: #{encoder_forward.4} parent=11 // pred_region
        _
      $region20: #{encoder_forward.4} parent=11 // pred_fallthru
        _
    $region12: #{encoder_forward.4} parent=5 // pred_fallthru
      _
    %p179 = scmp.lt.s32.totalorder %s12, 2
    // Predicated region
    $region21: #{encoder_forward.4} parent=5 // pred_check
      %p180 = pneg %p179
    $region22: #{encoder_forward.4} parent=5 // pred_check_branch
      %182 = sbr.rel (%p180) target = $region24
    $region23: #{encoder_forward.4} parent=5 // pred_region
      // Predicated region
      $region25: #{encoder_forward.4} parent=23 // pred_check
        %p183 = pneg %p32
      $region26: #{encoder_forward.4} parent=23 // pred_check_branch
        %185 = sbr.rel (%p183) target = $region28
      $region27: #{encoder_forward.4} parent=23 // pred_region
        %p186 = scmp.lt.s32.totalorder %s12, 1
        %s187 = scalar_select %p186, %s12, 1
        %s188 = smul.addr %s187, 9
        %s189 = smul.addr %s188, 4
        %s190 = scalar_lea.vmem %s0, %s189
      $region28: #{encoder_forward.4} parent=23 // pred_fallthru
        _
    $region24: #{encoder_forward.4} parent=5 // pred_fallthru
      _
    %p191 = scmp.le.s32.totalorder 1, %s12
    %p192 = scmp.lt.s32.totalorder %s12, 3
    %p193 = pnand %p191, %p192
    %p194 = pneg %p193
    // Predicated region
    $region29: #{encoder_forward.4} parent=5 // pred_check
      _
    $region30: #{encoder_forward.4} parent=5 // pred_check_branch
      %196 = sbr.rel (%p193) target = $region32
    $region31: #{encoder_forward.4} parent=5 // pred_region
      %s197 = ssub.s32 %s12, 1
      %p198 = scmp.lt.s32.totalorder %s17, 1
      %s199 = scalar_select %p198, %s17, 1
      %s200 = smul.addr %s199, 9
      %s201 = smul.addr %s200, 4
      %s202 = scalar_lea.vmem %s0, %s201
      %p203 = pneg %p38
      %p204 = pneg %p35
      %p205 = pneg %p59
      %p206 = pneg %p56
      %p207 = pneg %p80
      %p208 = pneg %p77
      %p209 = pneg %p106
      %p210 = pneg %p103
      %s211 = smul.u32 8, %s17
      %p212 = scmp.lt.s32.totalorder %s211, 15
      %s213 = scalar_select %p212, %s211, 15
      %s214 = smul.addr %s213, 4
      %s215 = scalar_lea.vmem %s3, %s214
      %p216 = pneg %p132
      %p217 = pneg %p129
      %p218 = scmp.lt.s32.totalorder %s17, 1
      %s219 = scalar_select %p218, %s17, 1
      %s220 = scalar_lea.vmem %s4, %s219
      %p221 = pneg %p158
      %p222 = pneg %p155
      %p223 = scmp.lt.s32.totalorder %s17, 1
      %s224 = scalar_select %p223, %s17, 1
      %s225 = scalar_lea.vmem %s5, %s224
      %p226 = scmp.lt.s32.totalorder %s17, 1
      %s227 = scalar_select %p226, %s17, 1
      %s228 = smul.addr %s227, 9
      %s229 = smul.addr %s228, 4
      %s230 = scalar_lea.vmem %s0, %s229
      %s231 = smul.u32 8, %s17
      %p232 = scmp.lt.s32.totalorder %s231, 15
      %s233 = scalar_select %p232, %s231, 15
      %s234 = smul.addr %s233, 4
      %s235 = scalar_lea.vmem %s3, %s234
      %s236 = smul.u32 8, %s17
      %p237 = scmp.lt.s32.totalorder %s17, 1
      %s238 = scalar_select %p237, %s17, 1
      %s239 = scalar_lea.vmem %s4, %s238
      %p240 = scmp.lt.s32.totalorder %s17, 1
      %s241 = scalar_select %p240, %s17, 1
      %s242 = scalar_lea.vmem %s5, %s241
      %v244 = vld [vmem:[%s230] sm:$0xf]
      %v245 = vld [vmem:[%s230 + $0x4] sm:$0xf]
      %v246 = vld [vmem:[%s230 + $0x8] sm:$0xf]
      %v247 = vld [vmem:[%s230 + $0xc] sm:$0xf]
      %v248 = vld [vmem:[%s230 + $0x10] sm:$0xf]
      %v249 = vld [vmem:[%s230 + $0x14] sm:$0xf]
      %v250 = vld [vmem:[%s230 + $0x18] sm:$0xf]
      %v251 = vld [vmem:[%s230 + $0x1c] sm:$0xf]
      %v252 = vld [vmem:[%s230 + $0x20] sm:$0xf]
      %v253 = vld [vmem:[%s1] sm:$0xf]
      %v254 = vld [vmem:[%s1 + $0x4] sm:$0xf]
      %v255 = vld [vmem:[%s1 + $0x8] sm:$0xf]
      %v256 = vld [vmem:[%s1 + $0xc] sm:$0xf]
      %v257 = vld [vmem:[%s1 + $0x10] sm:$0xf]
      %v258 = vld [vmem:[%s1 + $0x14] sm:$0xf]
      %v259 = vld [vmem:[%s1 + $0x18] sm:$0xf]
      %v260 = vld [vmem:[%s1 + $0x1c] sm:$0xf]
      %v261 = vld [vmem:[%s1 + $0x20] sm:$0xf]
      %v262 = vld [vmem:[%s1 + $0x24] sm:$0xf]
      %v263 = vld [vmem:[%s1 + $0x28] sm:$0xf]
      %v264 = vld [vmem:[%s1 + $0x2c] sm:$0xf]
      %v265 = vld [vmem:[%s1 + $0x30] sm:$0xf]
      %v266 = vld [vmem:[%s1 + $0x34] sm:$0xf]
      %v267 = vld [vmem:[%s1 + $0x38] sm:$0xf]
      %v268 = vld [vmem:[%s1 + $0x3c] sm:$0xf]
      %s269 = scalar_lea.vmem %s1, 64
      %v270 = vld [vmem:[%s269] sm:$0xf]
      %v271 = vld [vmem:[%s269 + $0x4] sm:$0xf]
      %v272 = vld [vmem:[%s269 + $0x8] sm:$0xf]
      %v273 = vld [vmem:[%s269 + $0xc] sm:$0xf]
      %v274 = vld [vmem:[%s269 + $0x10] sm:$0xf]
      %v275 = vld [vmem:[%s269 + $0x14] sm:$0xf]
      %v276 = vld [vmem:[%s269 + $0x18] sm:$0xf]
      %v277 = vld [vmem:[%s269 + $0x1c] sm:$0xf]
      %v278 = vld [vmem:[%s269 + $0x20] sm:$0xf]
      %v279 = vld [vmem:[%s269 + $0x24] sm:$0xf]
      %v280 = vld [vmem:[%s269 + $0x28] sm:$0xf]
      %v281 = vld [vmem:[%s269 + $0x2c] sm:$0xf]
      %v282 = vld [vmem:[%s269 + $0x30] sm:$0xf]
      %v283 = vld [vmem:[%s269 + $0x34] sm:$0xf]
      %v284 = vld [vmem:[%s269 + $0x38] sm:$0xf]
      %v285 = vld [vmem:[%s269 + $0x3c] sm:$0xf]
      %v294 = vunpack.c.l.b16 %v245
      %v295 = vunpack.c.l.b16 %v246
      %v296 = vunpack.c.l.b16 %v247
      %v297 = vunpack.c.l.b16 %v248
      %v298 = vunpack.c.l.b16 %v249
      %v299 = vunpack.c.l.b16 %v250
      %v300 = vunpack.c.l.b16 %v251
      %v301 = vunpack.c.l.b16 %v252
      %v302 = vpack.c.b16 %v295, %v294
      %v303 = vpack.c.b16 %v297, %v296
      %v304 = vpack.c.b16 %v299, %v298
      %v305 = vpack.c.b16 %v301, %v300
      %v326 = vunpack.c.l.b16 %v270
      %v327 = vunpack.c.l.b16 %v271
      %v328 = vunpack.c.l.b16 %v272
      %v329 = vunpack.c.l.b16 %v273
      %v330 = vunpack.c.l.b16 %v274
      %v331 = vunpack.c.l.b16 %v275
      %v332 = vunpack.c.l.b16 %v276
      %v333 = vunpack.c.l.b16 %v277
      %v334 = vunpack.c.l.b16 %v278
      %v335 = vunpack.c.l.b16 %v279
      %v336 = vunpack.c.l.b16 %v280
      %v337 = vunpack.c.l.b16 %v281
      %v338 = vunpack.c.l.b16 %v282
      %v339 = vunpack.c.l.b16 %v283
      %v340 = vunpack.c.l.b16 %v284
      %v341 = vunpack.c.l.b16 %v285
      %v342 = vpack.c.b16 %v327, %v326
      %v343 = vpack.c.b16 %v329, %v328
      %v344 = vpack.c.b16 %v331, %v330
      %v345 = vpack.c.b16 %v333, %v332
      %v346 = vpack.c.b16 %v335, %v334
      %v347 = vpack.c.b16 %v337, %v336
      %v348 = vpack.c.b16 %v339, %v338
      %v349 = vpack.c.b16 %v341, %v340
      %358 = vmatprep.subr.bf16.mxu0 0
      %359 = vmatpush1.bf16.msra.mxu0 %v342
      %360 = vmatprep.subr.bf16.mxu0 0
      %361 = vmatpush1.bf16.msra.mxu0 %v343
      %362 = vmatprep.subr.bf16.mxu0 0
      %363 = vmatpush1.bf16.msra.mxu0 %v344
      %364 = vmatprep.subr.bf16.mxu0 0
      %365 = vmatpush1.bf16.msra.mxu0 %v345
      %366 = vmatprep.subr.bf16.mxu0 0
      %367 = vmatpush1.bf16.msra.mxu0 %v346
      %368 = vmatprep.subr.bf16.mxu0 0
      %369 = vmatpush1.bf16.msra.mxu0 %v347
      %370 = vmatprep.subr.bf16.mxu0 0
      %371 = vmatpush1.bf16.msra.mxu0 %v348
      %372 = vmatprep.subr.bf16.mxu0 0
      %373 = vmatpush1.bf16.msra.mxu0 %v349
      %374 = vmatprep.subr.bf16.mxu0 0
      %375 = vmatpush1.bf16.msra.mxu0 0
      %376 = vmatprep.subr.bf16.mxu0 0
      %377 = vmatpush1.bf16.msra.mxu0 0
      %378 = vmatprep.subr.bf16.mxu0 0
      %379 = vmatpush1.bf16.msra.mxu0 0
      %380 = vmatprep.subr.bf16.mxu0 0
      %381 = vmatpush1.bf16.msra.mxu0 0
      %382 = vmatprep.subr.bf16.mxu0 0
      %383 = vmatpush1.bf16.msra.mxu0 0
      %384 = vmatprep.subr.bf16.mxu0 0
      %385 = vmatpush1.bf16.msra.mxu0 0
      %386 = vmatprep.subr.bf16.mxu0 0
      %387 = vmatpush1.bf16.msra.mxu0 0
      %388 = vmatprep.subr.bf16.mxu0 0
      %389 = vmatpush1.bf16.msra.mxu0 0
      %390 = vmatprep.mubr.bf16.mxu0 0
      %391 = vmatmul.mubr.bf16.gmra.mrb[0].mxu0 %v302
      %v392 = vpop.f32.mrb[0].mxu0
      %v393 = vadd.f32 0.0, %v392
      %v394 = vpop.f32.mrb[0].mxu0
      %v395 = vpop.f32.mrb[0].mxu0
      %v396 = vadd.f32 0.0, %v395
      %v397 = vpop.f32.mrb[0].mxu0
      %398 = vmatprep.mubr.bf16.mxu0 0
      %399 = vmatmul.mubr.bf16.gmra.mrb[0].mxu0 %v303
      %v400 = vpop.f32.mrb[0].mxu0
      %v401 = vadd.f32 0.0, %v400
      %v402 = vpop.f32.mrb[0].mxu0
      %v403 = vpop.f32.mrb[0].mxu0
      %v404 = vadd.f32 0.0, %v403
      %v405 = vpop.f32.mrb[0].mxu0
      %406 = vmatprep.mubr.bf16.mxu0 0
      %407 = vmatmul.mubr.bf16.gmra.mrb[0].mxu0 %v304
      %v408 = vpop.f32.mrb[0].mxu0
      %v409 = vadd.f32 0.0, %v408
      %v410 = vpop.f32.mrb[0].mxu0
      %v411 = vpop.f32.mrb[0].mxu0
      %v412 = vadd.f32 0.0, %v411
      %v413 = vpop.f32.mrb[0].mxu0
      %414 = vmatprep.mubr.bf16.mxu0 0
      %415 = vmatmul.mubr.bf16.gmra.mrb[0].mxu0 %v305
      %v416 = vpop.f32.mrb[0].mxu0
      %v417 = vadd.f32 0.0, %v416
      %v418 = vpop.f32.mrb[0].mxu0
      %v419 = vpop.f32.mrb[0].mxu0
      %v420 = vadd.f32 0.0, %v419
      %v421 = vpop.f32.mrb[0].mxu0
      %422 = vdwg.mxu0
      %v424 = vunpack.c.l.b16 %v244
      %v425 = vpack.c.b16 %v294, %v424
      %v426 = vpack.c.b16 %v296, %v295
      %v427 = vpack.c.b16 %v298, %v297
      %v428 = vpack.c.b16 %v300, %v299
      %v449 = vunpack.c.l.b16 %v253
      %v450 = vunpack.c.l.b16 %v254
      %v451 = vunpack.c.l.b16 %v255
      %v452 = vunpack.c.l.b16 %v256
      %v453 = vunpack.c.l.b16 %v257
      %v454 = vunpack.c.l.b16 %v258
      %v455 = vunpack.c.l.b16 %v259
      %v456 = vunpack.c.l.b16 %v260
      %v457 = vunpack.c.l.b16 %v261
      %v458 = vunpack.c.l.b16 %v262
      %v459 = vunpack.c.l.b16 %v263
      %v460 = vunpack.c.l.b16 %v264
      %v461 = vunpack.c.l.b16 %v265
      %v462 = vunpack.c.l.b16 %v266
      %v463 = vunpack.c.l.b16 %v267
      %v464 = vunpack.c.l.b16 %v268
      %v465 = vpack.c.b16 %v450, %v449
      %v466 = vpack.c.b16 %v452, %v451
      %v467 = vpack.c.b16 %v454, %v453
      %v468 = vpack.c.b16 %v456, %v455
      %v469 = vpack.c.b16 %v458, %v457
      %v470 = vpack.c.b16 %v460, %v459
      %v471 = vpack.c.b16 %v462, %v461
      %v472 = vpack.c.b16 %v464, %v463
      %481 = vmatprep.subr.bf16.mxu0 0
      %482 = vmatpush1.bf16.msra.mxu0 %v465
      %483 = vmatprep.subr.bf16.mxu0 0
      %484 = vmatpush1.bf16.msra.mxu0 %v466
      %485 = vmatprep.subr.bf16.mxu0 0
      %486 = vmatpush1.bf16.msra.mxu0 %v467
      %487 = vmatprep.subr.bf16.mxu0 0
      %488 = vmatpush1.bf16.msra.mxu0 %v468
      %489 = vmatprep.subr.bf16.mxu0 0
      %490 = vmatpush1.bf16.msra.mxu0 %v469
      %491 = vmatprep.subr.bf16.mxu0 0
      %492 = vmatpush1.bf16.msra.mxu0 %v470
      %493 = vmatprep.subr.bf16.mxu0 0
      %494 = vmatpush1.bf16.msra.mxu0 %v471
      %495 = vmatprep.subr.bf16.mxu0 0
      %496 = vmatpush1.bf16.msra.mxu0 %v472
      %497 = vmatprep.subr.bf16.mxu0 0
      %498 = vmatpush1.bf16.msra.mxu0 0
      %499 = vmatprep.subr.bf16.mxu0 0
      %500 = vmatpush1.bf16.msra.mxu0 0
      %501 = vmatprep.subr.bf16.mxu0 0
      %502 = vmatpush1.bf16.msra.mxu0 0
      %503 = vmatprep.subr.bf16.mxu0 0
      %504 = vmatpush1.bf16.msra.mxu0 0
      %505 = vmatprep.subr.bf16.mxu0 0
      %506 = vmatpush1.bf16.msra.mxu0 0
      %507 = vmatprep.subr.bf16.mxu0 0
      %508 = vmatpush1.bf16.msra.mxu0 0
      %509 = vmatprep.subr.bf16.mxu0 0
      %510 = vmatpush1.bf16.msra.mxu0 0
      %511 = vmatprep.subr.bf16.mxu0 0
      %512 = vmatpush1.bf16.msra.mxu0 0
      %513 = vmatprep.mubr.bf16.mxu0 0
      %514 = vmatmul.mubr.bf16.gmra.mrb[0].mxu0 %v425
      %v515 = vpop.f32.mrb[0].mxu0
      %v516 = vadd.f32 %v393, %v515
      %v517 = vpop.f32.mrb[0].mxu0
      %v518 = vpop.f32.mrb[0].mxu0
      %v519 = vadd.f32 %v396, %v518
      %v520 = vpop.f32.mrb[0].mxu0
      %521 = vmatprep.mubr.bf16.mxu0 0
      %522 = vmatmul.mubr.bf16.gmra.mrb[0].mxu0 %v426
      %v523 = vpop.f32.mrb[0].mxu0
      %v524 = vadd.f32 %v401, %v523
      %v525 = vpop.f32.mrb[0].mxu0
      %v526 = vpop.f32.mrb[0].mxu0
      %v527 = vadd.f32 %v404, %v526
      %v528 = vpop.f32.mrb[0].mxu0
      %529 = vmatprep.mubr.bf16.mxu0 0
      %530 = vmatmul.mubr.bf16.gmra.mrb[0].mxu0 %v427
      %v531 = vpop.f32.mrb[0].mxu0
      %v532 = vadd.f32 %v409, %v531
      %v533 = vpop.f32.mrb[0].mxu0
      %v534 = vpop.f32.mrb[0].mxu0
      %v535 = vadd.f32 %v412, %v534
      %v536 = vpop.f32.mrb[0].mxu0
      %537 = vmatprep.mubr.bf16.mxu0 0
      %538 = vmatmul.mubr.bf16.gmra.mrb[0].mxu0 %v428
      %v539 = vpop.f32.mrb[0].mxu0
      %v540 = vadd.f32 %v417, %v539
      %v541 = vpop.f32.mrb[0].mxu0
      %v542 = vpop.f32.mrb[0].mxu0
      %v543 = vadd.f32 %v420, %v542
      %v544 = vpop.f32.mrb[0].mxu0
      %545 = vdwg.mxu0
      %v546 = vld [vmem:[%s2] sm:$0x1]
      %v548 = vlaneseq
      %v549 = vshrl.u32 %v548, 7
      %v550 = vsub.s32 0, %v549
      %v551 = vrot.slane %v546, %v550
      %v553 = vadd.f32 %v516, %v551
      %v554 = vadd.f32 %v519, %v551
      %v555 = vadd.f32 %v524, %v551
      %v556 = vadd.f32 %v527, %v551
      %v557 = vadd.f32 %v532, %v551
      %v558 = vadd.f32 %v535, %v551
      %v559 = vadd.f32 %v540, %v551
      %v560 = vadd.f32 %v543, %v551
      %v561 = vpack.c.bf16 %v554, %v553
      %v562 = vpack.c.bf16 %v556, %v555
      %v563 = vpack.c.bf16 %v558, %v557
      %v564 = vpack.c.bf16 %v560, %v559
      %v569 = vunpack.c.l.b16 %v561
      %v570 = vunpack.c.h.b16 %v561
      %v571 = vunpack.c.l.b16 %v562
      %v572 = vunpack.c.h.b16 %v562
      %v573 = vunpack.c.l.b16 %v563
      %v574 = vunpack.c.h.b16 %v563
      %v575 = vunpack.c.l.b16 %v564
      %v576 = vunpack.c.h.b16 %v564
      %v577 = vpack.c.b16 %v569, %v569
      %v578 = vpack.c.b16 %v570, %v570
      %v579 = vpack.c.b16 %v571, %v571
      %v580 = vpack.c.b16 %v572, %v572
      %v581 = vpack.c.b16 %v573, %v573
      %v582 = vpack.c.b16 %v574, %v574
      %v583 = vpack.c.b16 %v575, %v575
      %v584 = vpack.c.b16 %v576, %v576
      %593 = vst [vmem:[%s235] sm:$0xf] %v577
      %594 = vst [vmem:[%s235 + $0x4] sm:$0xf] %v578
      %595 = vst [vmem:[%s235 + $0x8] sm:$0xf] %v579
      %596 = vst [vmem:[%s235 + $0xc] sm:$0xf] %v580
      %597 = vst [vmem:[%s235 + $0x10] sm:$0xf] %v581
      %598 = vst [vmem:[%s235 + $0x14] sm:$0xf] %v582
      %599 = vst [vmem:[%s235 + $0x18] sm:$0xf] %v583
      %600 = vst [vmem:[%s235 + $0x1c] sm:$0xf] %v584
      %v601 = vadd.f32 %v553, %v554
      %v602 = vadd.f32 %v601, %v555
      %v603 = vadd.f32 %v602, %v556
      %v604 = vadd.f32 %v603, %v557
      %v605 = vadd.f32 %v604, %v558
      %v606 = vadd.f32 %v605, %v559
      %v607 = vadd.f32 %v606, %v560
      %v608 = vrot.slane %v607, 4
      %v609 = vadd.f32 %v607, %v608
      %v610 = vrot.slane %v609, 2
      %v611 = vadd.f32 %v609, %v610
      %v612 = vrot.slane %v611, 1
      %v613 = vadd.f32 %v611, %v612
      %v614 = vmul.f32 %v613, 0.015625
      %v615 = vsub.f32 %v553, %v614
      %v616 = vsub.f32 %v554, %v614
      %v617 = vsub.f32 %v555, %v614
      %v618 = vsub.f32 %v556, %v614
      %v619 = vsub.f32 %v557, %v614
      %v620 = vsub.f32 %v558, %v614
      %v621 = vsub.f32 %v559, %v614
      %v622 = vsub.f32 %v560, %v614
      %623 = vst [vmem:[%s239] sm:$0x1] %v613
      %v624 = vmul.f32 %v615, %v615
      %v625 = vmul.f32 %v616, %v616
      %v626 = vmul.f32 %v617, %v617
      %v627 = vmul.f32 %v618, %v618
      %v628 = vmul.f32 %v619, %v619
      %v629 = vmul.f32 %v620, %v620
      %v630 = vmul.f32 %v621, %v621
      %v631 = vmul.f32 %v622, %v622
      %v632 = vadd.f32 %v624, %v625
      %v633 = vadd.f32 %v632, %v626
      %v634 = vadd.f32 %v633, %v627
      %v635 = vadd.f32 %v634, %v628
      %v636 = vadd.f32 %v635, %v629
      %v637 = vadd.f32 %v636, %v630
      %v638 = vadd.f32 %v637, %v631
      %v639 = vrot.slane %v638, 4
      %v640 = vadd.f32 %v638, %v639
      %v641 = vrot.slane %v640, 2
      %v642 = vadd.f32 %v640, %v641
      %v643 = vrot.slane %v642, 1
      %v644 = vadd.f32 %v642, %v643
      %645 = vst [vmem:[%s242] sm:$0x1] %v644
      %s646 = smul.u32 8, %s17
      %p647 = scmp.lt.s32.totalorder %s646, 15
      %s648 = scalar_select %p647, %s646, 15
      %s649 = smul.addr %s648, 4
      %s650 = scalar_lea.vmem %s3, %s649
      %p651 = scmp.lt.s32.totalorder %s17, 1
      %s652 = scalar_select %p651, %s17, 1
      %s653 = scalar_lea.vmem %s4, %s652
      %p654 = scmp.lt.s32.totalorder %s17, 1
      %s655 = scalar_select %p654, %s17, 1
      %s656 = scalar_lea.vmem %s5, %s655
      // Predicated region
      $region33: #{encoder_forward.4} parent=31 // pred_check
        %p657 = pneg %p103
      $region34: #{encoder_forward.4} parent=31 // pred_check_branch
        %659 = sbr.rel (%p657) target = $region36
      $region35: #{encoder_forward.4} parent=31 // pred_region
        %s660 = smul.u32 8, %s17
      $region36: #{encoder_forward.4} parent=31 // pred_fallthru
        _
      // Predicated region
      $region37: #{encoder_forward.4} parent=31 // pred_check
        %p661 = pneg %p129
      $region38: #{encoder_forward.4} parent=31 // pred_check_branch
        %663 = sbr.rel (%p661) target = $region40
      $region39: #{encoder_forward.4} parent=31 // pred_region
        _
      $region40: #{encoder_forward.4} parent=31 // pred_fallthru
        _
      // Predicated region
      $region41: #{encoder_forward.4} parent=31 // pred_check
        %p664 = pneg %p155
      $region42: #{encoder_forward.4} parent=31 // pred_check_branch
        %666 = sbr.rel (%p664) target = $region44
      $region43: #{encoder_forward.4} parent=31 // pred_region
        _
      $region44: #{encoder_forward.4} parent=31 // pred_fallthru
        _
    $region32: #{encoder_forward.4} parent=5 // pred_fallthru
      _
    %p667 = scmp.le.s32.totalorder 2, %s12
    // Predicated region
    $region45: #{encoder_forward.4} parent=5 // pred_check
      %p668 = pneg %p667
    $region46: #{encoder_forward.4} parent=5 // pred_check_branch
      %670 = sbr.rel (%p668) target = $region48
    $region47: #{encoder_forward.4} parent=5 // pred_region
      %s671 = ssub.s32 %s12, 2
      // Predicated region
      $region49: #{encoder_forward.4} parent=47 // pred_check
        %p672 = pneg %p109
      $region50: #{encoder_forward.4} parent=47 // pred_check_branch
        %674 = sbr.rel (%p672) target = $region52
      $region51: #{encoder_forward.4} parent=47 // pred_region
        %s675 = smul.u32 8, %s18
        %p676 = scmp.lt.s32.totalorder %s675, 15
        %s677 = scalar_select %p676, %s675, 15
        %s678 = smul.addr %s677, 4
        %s679 = scalar_lea.vmem %s3, %s678
      $region52: #{encoder_forward.4} parent=47 // pred_fallthru
        _
      // Predicated region
      $region53: #{encoder_forward.4} parent=47 // pred_check
        %p680 = pneg %p135
      $region54: #{encoder_forward.4} parent=47 // pred_check_branch
        %682 = sbr.rel (%p680) target = $region56
      $region55: #{encoder_forward.4} parent=47 // pred_region
        %p683 = scmp.lt.s32.totalorder %s18, 1
        %s684 = scalar_select %p683, %s18, 1
        %s685 = scalar_lea.vmem %s4, %s684
      $region56: #{encoder_forward.4} parent=47 // pred_fallthru
        _
      // Predicated region
      $region57: #{encoder_forward.4} parent=47 // pred_check
        %p686 = pneg %p161
      $region58: #{encoder_forward.4} parent=47 // pred_check_branch
        %688 = sbr.rel (%p686) target = $region60
      $region59: #{encoder_forward.4} parent=47 // pred_region
        %p689 = scmp.lt.s32.totalorder %s18, 1
        %s690 = scalar_select %p689, %s18, 1
        %s691 = scalar_lea.vmem %s5, %s690
      $region60: #{encoder_forward.4} parent=47 // pred_fallthru
        _
    $region48: #{encoder_forward.4} parent=5 // pred_fallthru
      _
  $region6: #{encoder_forward.4} parent=0 // loop_footer
    %s16 = sadd.s32 1, %s12
  $region7: #{encoder_forward.4} parent=0 // loop_footer_branch
    %11 = sbr.rel target = $region3
  $region8: #{encoder_forward.4} parent=0 // loop_exit
    _

// kernel: tile.13
$region0: #{tile.13}
  #allocation0 [shape = 's32[1]{0}', space=sflag, size = 0x4, scoped, tag = 'scoped memory for tile.13']
  %s0 = inlined_call_operand.vmem [shape: f32[128], index: 0, kind: input, shape index: {}]
  %s1 = inlined_call_operand.vmem [shape: f32[8,128], index: 1, kind: output, shape index: {}]
  // Predicated region
  $region2: #{tile.13} parent=0 // pred_check
    _
  $region3: #{tile.13} parent=0 // pred_check_branch
    %3 = sbr.rel (0) target = $region5
  $region4: #{tile.13} parent=0 // pred_region
    _
  $region5: #{tile.13} parent=0 // pred_fallthru
    _
  %v4 = vld [vmem:[%s0] ss:$0 sm:$0xff]
  %5 = vst [vmem:[%s1] sm:$0xff] %v4

// kernel: encoder_forward.7
$region0: #{encoder_forward.7}
  #allocation0 [shape = 'u32[]', space=smem, size = 0x4, offset = 0x4, fixed_abs, tag = 'smem constant byte address 0x4 - core index']
  #allocation1 [shape = 'u32[144,128]{1,0:T(1,128)}', space=vmem, size = 0x12000, scoped, tag = 'internal scratch']
  %s0 = inlined_call_operand.vmem [shape: bf16[32,128], index: 0, kind: input, shape index: {}]
  %s1 = inlined_call_operand.vmem [shape: f32[1,128], index: 1, kind: input, shape index: {}]
  %s2 = inlined_call_operand.vmem [shape: f32[1,128], index: 2, kind: input, shape index: {}]
  %s3 = inlined_call_operand.vmem [shape: f32[32,128], index: 3, kind: output, shape index: {}]
  %s4 = sld [smem:[#allocation0]]
  $region22: #{encoder_forward.7} parent=0
    _
  %s6 = ssub.s32 1, %s4
  %s7 = scalar_select 0, %s6, %s4
  // Predicated region
  $region2: #{encoder_forward.7} parent=0 // pred_check
    _
  $region3: #{encoder_forward.7} parent=0 // pred_check_branch
    %9 = sbr.rel (0) target = $region5
  $region4: #{encoder_forward.7} parent=0 // pred_region
    _
  $region5: #{encoder_forward.7} parent=0 // pred_fallthru
    _
  // Predicated region
  $region6: #{encoder_forward.7} parent=0 // pred_check
    _
  $region7: #{encoder_forward.7} parent=0 // pred_check_branch
    %11 = sbr.rel (0) target = $region9
  $region8: #{encoder_forward.7} parent=0 // pred_region
    _
  $region9: #{encoder_forward.7} parent=0 // pred_fallthru
    _
  // Predicated region
  $region10: #{encoder_forward.7} parent=0 // pred_check
    _
  $region11: #{encoder_forward.7} parent=0 // pred_check_branch
    %13 = sbr.rel (0) target = $region13
  $region12: #{encoder_forward.7} parent=0 // pred_region
    _
  $region13: #{encoder_forward.7} parent=0 // pred_fallthru
    _
  %v14 = vld [vmem:[%s0] sm:$0xf]
  %v15 = vld [vmem:[%s0 + $0x4] sm:$0xf]
  %v16 = vld [vmem:[%s0 + $0x8] sm:$0xf]
  %v17 = vld [vmem:[%s0 + $0xc] sm:$0xf]
  %v18 = vunpack.c.l.bf16 %v14
  %v19 = vunpack.c.l.bf16 %v15
  %v20 = vunpack.c.l.bf16 %v16
  %v21 = vunpack.c.l.bf16 %v17
  %v22 = vld [vmem:[%s1] sm:$0x1]
  %v24 = vlaneseq
  %v25 = vshrl.u32 %v24, 7
  %v26 = vsub.s32 0, %v25
  %v27 = vrot.slane %v22, %v26
  %v29 = vmul.f32 %v18, %v27
  %v30 = vmul.f32 %v19, %v27
  %v31 = vmul.f32 %v20, %v27
  %v32 = vmul.f32 %v21, %v27
  %v33 = vld [vmem:[%s2] sm:$0x1]
  %v35 = vlaneseq
  %v36 = vshrl.u32 %v35, 7
  %v37 = vsub.s32 0, %v36
  %v38 = vrot.slane %v33, %v37
  %v40 = vadd.f32 %v29, %v38
  %v41 = vadd.f32 %v30, %v38
  %v42 = vadd.f32 %v31, %v38
  %v43 = vadd.f32 %v32, %v38
  %vm44 = vcmp.ge.f32.partialorder %v40, 0.0
  %vm45 = vcmp.ge.f32.partialorder %v41, 0.0
  %vm46 = vcmp.ge.f32.partialorder %v42, 0.0
  %vm47 = vcmp.ge.f32.partialorder %v43, 0.0
  %v48 = vmul.f32 %v40, 0.2
  %v49 = vmul.f32 %v41, 0.2
  %v50 = vmul.f32 %v42, 0.2
  %v51 = vmul.f32 %v43, 0.2
  %v52 = vsel %vm44, %v40, %v48
  %v53 = vsel %vm45, %v41, %v49
  %v54 = vsel %vm46, %v42, %v50
  %v55 = vsel %vm47, %v43, %v51
  %56 = vst [vmem:[%s3] sm:$0xff] %v52
  %57 = vst [vmem:[%s3 + $0x8] sm:$0xff] %v53
  %58 = vst [vmem:[%s3 + $0x10] sm:$0xff] %v54
  %59 = vst [vmem:[%s3 + $0x18] sm:$0xff] %v55
  // Predicated region
  $region14: #{encoder_forward.7} parent=0 // pred_check
    _
  $region15: #{encoder_forward.7} parent=0 // pred_check_branch
    %61 = sbr.rel (0) target = $region17
  $region16: #{encoder_forward.7} parent=0 // pred_region
    _
  $region17: #{encoder_forward.7} parent=0 // pred_fallthru
    _
  // Predicated region
  $region18: #{encoder_forward.7} parent=0 // pred_check
    _
  $region19: #{encoder_forward.7} parent=0 // pred_check_branch
    %63 = sbr.rel (0) target = $region21
  $region20: #{encoder_forward.7} parent=0 // pred_region
    _
  $region21: #{encoder_forward.7} parent=0 // pred_fallthru
    _

// kernel: encoder_forward.6
$region0: #{encoder_forward.6}
  #allocation0 [shape = 'u32[]', space=smem, size = 0x4, offset = 0x4, fixed_abs, tag = 'smem constant byte address 0x4 - core index']
  #allocation1 [shape = 'u32[144,128]{1,0:T(1,128)}', space=vmem, size = 0x12000, scoped, tag = 'internal scratch']
  %s0 = inlined_call_operand.vmem [shape: bf16[32,128], index: 0, kind: input, shape index: {}]
  %s1 = inlined_call_operand.vmem [shape: bf16[128,128], index: 1, kind: input, shape index: {}]
  %s2 = inlined_call_operand.vmem [shape: f32[1,128], index: 2, kind: input, shape index: {}]
  %s3 = inlined_call_operand.vmem [shape: f32[1,128], index: 3, kind: input, shape index: {}]
  %s4 = inlined_call_operand.vmem [shape: f32[1,128], index: 4, kind: input, shape index: {}]
  %s5 = inlined_call_operand.vmem [shape: bf16[32,128], index: 5, kind: output, shape index: {0}]
  %s6 = inlined_call_operand.vmem [shape: f32[1,1,128], index: 6, kind: output, shape index: {1}]
  %s7 = inlined_call_operand.vmem [shape: f32[1,1,128], index: 7, kind: output, shape index: {2}]
  %8 = xla_tuple %s5, %s6, %s7
  %s9 = sld [smem:[#allocation0]]
  $region46: #{encoder_forward.6} parent=0
    _
  %s11 = ssub.s32 1, %s9
  %s12 = scalar_select 0, %s11, %s9
  // Predicated region
  $region2: #{encoder_forward.6} parent=0 // pred_check
    _
  $region3: #{encoder_forward.6} parent=0 // pred_check_branch
    %14 = sbr.rel (0) target = $region5
  $region4: #{encoder_forward.6} parent=0 // pred_region
    _
  $region5: #{encoder_forward.6} parent=0 // pred_fallthru
    _
  // Predicated region
  $region6: #{encoder_forward.6} parent=0 // pred_check
    _
  $region7: #{encoder_forward.6} parent=0 // pred_check_branch
    %16 = sbr.rel (0) target = $region9
  $region8: #{encoder_forward.6} parent=0 // pred_region
    _
  $region9: #{encoder_forward.6} parent=0 // pred_fallthru
    _
  // Predicated region
  $region10: #{encoder_forward.6} parent=0 // pred_check
    _
  $region11: #{encoder_forward.6} parent=0 // pred_check_branch
    %18 = sbr.rel (0) target = $region13
  $region12: #{encoder_forward.6} parent=0 // pred_region
    _
  $region13: #{encoder_forward.6} parent=0 // pred_fallthru
    _
  // Predicated region
  $region14: #{encoder_forward.6} parent=0 // pred_check
    _
  $region15: #{encoder_forward.6} parent=0 // pred_check_branch
    %20 = sbr.rel (0) target = $region17
  $region16: #{encoder_forward.6} parent=0 // pred_region
    _
  $region17: #{encoder_forward.6} parent=0 // pred_fallthru
    _
  // Predicated region
  $region18: #{encoder_forward.6} parent=0 // pred_check
    _
  $region19: #{encoder_forward.6} parent=0 // pred_check_branch
    %22 = sbr.rel (0) target = $region21
  $region20: #{encoder_forward.6} parent=0 // pred_region
    _
  $region21: #{encoder_forward.6} parent=0 // pred_fallthru
    _
  %v24 = vld [vmem:[%s0] sm:$0xf]
  %v25 = vld [vmem:[%s0 + $0x4] sm:$0xf]
  %v26 = vld [vmem:[%s0 + $0x8] sm:$0xf]
  %v27 = vld [vmem:[%s0 + $0xc] sm:$0xf]
  %v28 = vunpack.c.l.bf16 %v24
  %v29 = vunpack.c.l.bf16 %v25
  %v30 = vunpack.c.l.bf16 %v26
  %v31 = vunpack.c.l.bf16 %v27
  %v32 = vld [vmem:[%s3] sm:$0x1]
  %v34 = vlaneseq
  %v35 = vshrl.u32 %v34, 7
  %v36 = vsub.s32 0, %v35
  %v37 = vrot.slane %v32, %v36
  %v39 = vmul.f32 %v28, %v37
  %v40 = vmul.f32 %v29, %v37
  %v41 = vmul.f32 %v30, %v37
  %v42 = vmul.f32 %v31, %v37
  %v43 = vld [vmem:[%s4] sm:$0x1]
  %v45 = vlaneseq
  %v46 = vshrl.u32 %v45, 7
  %v47 = vsub.s32 0, %v46
  %v48 = vrot.slane %v43, %v47
  %v50 = vadd.f32 %v39, %v48
  %v51 = vadd.f32 %v40, %v48
  %v52 = vadd.f32 %v41, %v48
  %v53 = vadd.f32 %v42, %v48
  %vm54 = vcmp.ge.f32.partialorder %v50, 0.0
  %vm55 = vcmp.ge.f32.partialorder %v51, 0.0
  %vm56 = vcmp.ge.f32.partialorder %v52, 0.0
  %vm57 = vcmp.ge.f32.partialorder %v53, 0.0
  %v58 = vmul.f32 %v50, 0.2
  %v59 = vmul.f32 %v51, 0.2
  %v60 = vmul.f32 %v52, 0.2
  %v61 = vmul.f32 %v53, 0.2
  %v62 = vsel %vm54, %v50, %v58
  %v63 = vsel %vm55, %v51, %v59
  %v64 = vsel %vm56, %v52, %v60
  %v65 = vsel %vm57, %v53, %v61
  %v66 = vpack.c.bf16 %v63, %v62
  %v67 = vpack.c.bf16 %v65, %v64
  %v68 = vld [vmem:[%s1] sm:$0xf]
  %v69 = vld [vmem:[%s1 + $0x4] sm:$0xf]
  %v70 = vld [vmem:[%s1 + $0x8] sm:$0xf]
  %v71 = vld [vmem:[%s1 + $0xc] sm:$0xf]
  %v72 = vld [vmem:[%s1 + $0x10] sm:$0xf]
  %v73 = vld [vmem:[%s1 + $0x14] sm:$0xf]
  %v74 = vld [vmem:[%s1 + $0x18] sm:$0xf]
  %v75 = vld [vmem:[%s1 + $0x1c] sm:$0xf]
  %v76 = vld [vmem:[%s1 + $0x20] sm:$0xf]
  %v77 = vld [vmem:[%s1 + $0x24] sm:$0xf]
  %v78 = vld [vmem:[%s1 + $0x28] sm:$0xf]
  %v79 = vld [vmem:[%s1 + $0x2c] sm:$0xf]
  %v80 = vld [vmem:[%s1 + $0x30] sm:$0xf]
  %v81 = vld [vmem:[%s1 + $0x34] sm:$0xf]
  %v82 = vld [vmem:[%s1 + $0x38] sm:$0xf]
  %v83 = vld [vmem:[%s1 + $0x3c] sm:$0xf]
  %v84 = vld [vmem:[%s2] sm:$0x1]
  %v86 = vlaneseq
  %v87 = vshrl.u32 %v86, 7
  %v88 = vsub.s32 0, %v87
  %v89 = vrot.slane %v84, %v88
  %v107 = vunpack.c.l.b16 %v68
  %v108 = vunpack.c.l.b16 %v69
  %v109 = vunpack.c.l.b16 %v70
  %v110 = vunpack.c.l.b16 %v71
  %v111 = vunpack.c.l.b16 %v72
  %v112 = vunpack.c.l.b16 %v73
  %v113 = vunpack.c.l.b16 %v74
  %v114 = vunpack.c.l.b16 %v75
  %v115 = vunpack.c.l.b16 %v76
  %v116 = vunpack.c.l.b16 %v77
  %v117 = vunpack.c.l.b16 %v78
  %v118 = vunpack.c.l.b16 %v79
  %v119 = vunpack.c.l.b16 %v80
  %v120 = vunpack.c.l.b16 %v81
  %v121 = vunpack.c.l.b16 %v82
  %v122 = vunpack.c.l.b16 %v83
  %v123 = vpack.c.b16 %v108, %v107
  %v124 = vpack.c.b16 %v110, %v109
  %v125 = vpack.c.b16 %v112, %v111
  %v126 = vpack.c.b16 %v114, %v113
  %v127 = vpack.c.b16 %v116, %v115
  %v128 = vpack.c.b16 %v118, %v117
  %v129 = vpack.c.b16 %v120, %v119
  %v130 = vpack.c.b16 %v122, %v121
  %139 = vmatprep.subr.bf16.mxu0 0
  %140 = vmatpush1.bf16.msra.mxu0 %v123
  %141 = vmatprep.subr.bf16.mxu0 0
  %142 = vmatpush1.bf16.msra.mxu0 %v124
  %143 = vmatprep.subr.bf16.mxu0 0
  %144 = vmatpush1.bf16.msra.mxu0 %v125
  %145 = vmatprep.subr.bf16.mxu0 0
  %146 = vmatpush1.bf16.msra.mxu0 %v126
  %147 = vmatprep.subr.bf16.mxu0 0
  %148 = vmatpush1.bf16.msra.mxu0 %v127
  %149 = vmatprep.subr.bf16.mxu0 0
  %150 = vmatpush1.bf16.msra.mxu0 %v128
  %151 = vmatprep.subr.bf16.mxu0 0
  %152 = vmatpush1.bf16.msra.mxu0 %v129
  %153 = vmatprep.subr.bf16.mxu0 0
  %154 = vmatpush1.bf16.msra.mxu0 %v130
  %155 = vmatprep.subr.bf16.mxu0 0
  %156 = vmatpush1.bf16.msra.mxu0 0
  %157 = vmatprep.subr.bf16.mxu0 0
  %158 = vmatpush1.bf16.msra.mxu0 0
  %159 = vmatprep.subr.bf16.mxu0 0
  %160 = vmatpush1.bf16.msra.mxu0 0
  %161 = vmatprep.subr.bf16.mxu0 0
  %162 = vmatpush1.bf16.msra.mxu0 0
  %163 = vmatprep.subr.bf16.mxu0 0
  %164 = vmatpush1.bf16.msra.mxu0 0
  %165 = vmatprep.subr.bf16.mxu0 0
  %166 = vmatpush1.bf16.msra.mxu0 0
  %167 = vmatprep.subr.bf16.mxu0 0
  %168 = vmatpush1.bf16.msra.mxu0 0
  %169 = vmatprep.subr.bf16.mxu0 0
  %170 = vmatpush1.bf16.msra.mxu0 0
  %171 = vmatprep.mubr.bf16.mxu0 0
  %172 = vmatmul.mubr.bf16.gmra.mrb[0].mxu0 %v66
  %v173 = vpop.f32.mrb[0].mxu0
  %v174 = vadd.f32 %v89, %v173
  %v175 = vpop.f32.mrb[0].mxu0
  %v176 = vpop.f32.mrb[0].mxu0
  %v177 = vadd.f32 %v89, %v176
  %v178 = vpop.f32.mrb[0].mxu0
  %179 = vmatprep.mubr.bf16.mxu0 0
  %180 = vmatmul.mubr.bf16.gmra.mrb[0].mxu0 %v67
  %v181 = vpop.f32.mrb[0].mxu0
  %v182 = vadd.f32 %v89, %v181
  %v183 = vpop.f32.mrb[0].mxu0
  %v184 = vpop.f32.mrb[0].mxu0
  %v185 = vadd.f32 %v89, %v184
  %v186 = vpop.f32.mrb[0].mxu0
  %187 = vdwg.mxu0
  %v188 = vpack.c.bf16 %v177, %v174
  %v189 = vpack.c.bf16 %v185, %v182
  %v192 = vunpack.c.l.b16 %v188
  %v193 = vunpack.c.h.b16 %v188
  %v194 = vunpack.c.l.b16 %v189
  %v195 = vunpack.c.h.b16 %v189
  %v196 = vpack.c.b16 %v192, %v192
  %v197 = vpack.c.b16 %v193, %v193
  %v198 = vpack.c.b16 %v194, %v194
  %v199 = vpack.c.b16 %v195, %v195
  %204 = vst [vmem:[%s5] sm:$0xf] %v196
  %205 = vst [vmem:[%s5 + $0x4] sm:$0xf] %v197
  %206 = vst [vmem:[%s5 + $0x8] sm:$0xf] %v198
  %207 = vst [vmem:[%s5 + $0xc] sm:$0xf] %v199
  %v208 = vadd.f32 %v174, %v177
  %v209 = vadd.f32 %v208, %v182
  %v210 = vadd.f32 %v209, %v185
  %v211 = vrot.slane %v210, 4
  %v212 = vadd.f32 %v210, %v211
  %v213 = vrot.slane %v212, 2
  %v214 = vadd.f32 %v212, %v213
  %v215 = vrot.slane %v214, 1
  %v216 = vadd.f32 %v214, %v215
  %v217 = vmul.f32 %v216, 0.03125
  %v218 = vsub.f32 %v174, %v217
  %v219 = vsub.f32 %v177, %v217
  %v220 = vsub.f32 %v182, %v217
  %v221 = vsub.f32 %v185, %v217
  %222 = vst [vmem:[%s6] sm:$0x1] %v216
  %v223 = vmul.f32 %v218, %v218
  %v224 = vmul.f32 %v219, %v219
  %v225 = vmul.f32 %v220, %v220
  %v226 = vmul.f32 %v221, %v221
  %v227 = vadd.f32 %v223, %v224
  %v228 = vadd.f32 %v227, %v225
  %v229 = vadd.f32 %v228, %v226
  %v230 = vrot.slane %v229, 4
  %v231 = vadd.f32 %v229, %v230
  %v232 = vrot.slane %v231, 2
  %v233 = vadd.f32 %v231, %v232
  %v234 = vrot.slane %v233, 1
  %v235 = vadd.f32 %v233, %v234
  %236 = vst [vmem:[%s7] sm:$0x1] %v235
  // Predicated region
  $region22: #{encoder_forward.6} parent=0 // pred_check
    _
  $region23: #{encoder_forward.6} parent=0 // pred_check_branch
    %238 = sbr.rel (0) target = $region25
  $region24: #{encoder_forward.6} parent=0 // pred_region
    _
  $region25: #{encoder_forward.6} parent=0 // pred_fallthru
    _
  // Predicated region
  $region26: #{encoder_forward.6} parent=0 // pred_check
    _
  $region27: #{encoder_forward.6} parent=0 // pred_check_branch
    %240 = sbr.rel (0) target = $region29
  $region28: #{encoder_forward.6} parent=0 // pred_region
    _
  $region29: #{encoder_forward.6} parent=0 // pred_fallthru
    _
  // Predicated region
  $region30: #{encoder_forward.6} parent=0 // pred_check
    _
  $region31: #{encoder_forward.6} parent=0 // pred_check_branch
    %242 = sbr.rel (0) target = $region33
  $region32: #{encoder_forward.6} parent=0 // pred_region
    _
  $region33: #{encoder_forward.6} parent=0 // pred_fallthru
    _
  // Predicated region
  $region34: #{encoder_forward.6} parent=0 // pred_check
    _
  $region35: #{encoder_forward.6} parent=0 // pred_check_branch
    %244 = sbr.rel (0) target = $region37
  $region36: #{encoder_forward.6} parent=0 // pred_region
    _
  $region37: #{encoder_forward.6} parent=0 // pred_fallthru
    _
  // Predicated region
  $region38: #{encoder_forward.6} parent=0 // pred_check
    _
  $region39: #{encoder_forward.6} parent=0 // pred_check_branch
    %246 = sbr.rel (0) target = $region41
  $region40: #{encoder_forward.6} parent=0 // pred_region
    _
  $region41: #{encoder_forward.6} parent=0 // pred_fallthru
    _
  // Predicated region
  $region42: #{encoder_forward.6} parent=0 // pred_check
    _
  $region43: #{encoder_forward.6} parent=0 // pred_check_branch
    %248 = sbr.rel (0) target = $region45
  $region44: #{encoder_forward.6} parent=0 // pred_region
    _
  $region45: #{encoder_forward.6} parent=0 // pred_fallthru
    _

// kernel: encoder_forward.5
$region0: #{encoder_forward.5}
  #allocation0 [shape = 'u32[]', space=smem, size = 0x4, offset = 0x4, fixed_abs, tag = 'smem constant byte address 0x4 - core index']
  #allocation1 [shape = 'u32[144,128]{1,0:T(1,128)}', space=vmem, size = 0x12000, scoped, tag = 'internal scratch']
  %s0 = inlined_call_operand.vmem [shape: bf16[2,20,1024], index: 0, kind: input, shape index: {}]
  %s1 = inlined_call_operand.vmem [shape: bf16[2,1024,128], index: 1, kind: input, shape index: {}]
  %s2 = inlined_call_operand.vmem [shape: f32[1,128], index: 2, kind: input, shape index: {}]
  %s3 = inlined_call_operand.vmem [shape: f32[1,1024], index: 3, kind: input, shape index: {}]
  %s4 = inlined_call_operand.vmem [shape: f32[1,1024], index: 4, kind: input, shape index: {}]
  %s5 = inlined_call_operand.vmem [shape: bf16[32,128], index: 5, kind: output, shape index: {0}]
  %s6 = inlined_call_operand.vmem [shape: f32[2,1,128], index: 6, kind: output, shape index: {1}]
  %s7 = inlined_call_operand.vmem [shape: f32[2,1,128], index: 7, kind: output, shape index: {2}]
  %8 = xla_tuple %s5, %s6, %s7
  %s9 = sld [smem:[#allocation0]]
  $region69: #{encoder_forward.5} parent=0
    _
  %s11 = ssub.s32 1, %s9
  %s12 = scalar_select 0, %s11, %s9
  loop: start=0, step=1, limit=4
  $region2: #{encoder_forward.5} parent=0 // loop_pre_header
    _
  $region3: #{encoder_forward.5} parent=0 // loop_header
    %s14 = sphi 0, %s18
    %p15 = scmp.ge.s32.totalorder %s14, 4
    %s24 = sphi 0, %s26
    %s27 = sphi 0, %s24
    %s28 = sphi 0, %s27
    %s44 = sphi 0, %s28
    %s48 = sphi 0, %s48
    %s50 = sphi 0, %s48
    %s51 = sphi 0, %s50
    %s65 = sphi 0, %s51
    %s69 = sphi 0, %s69
    %s71 = sphi 0, %s69
    %s72 = sphi 0, %s71
    %s86 = sphi 0, %s72
    %s90 = sphi 0, %s90
    %s92 = sphi 0, %s90
    %s93 = sphi 0, %s92
    %s107 = sphi 0, %s93
    %s111 = sphi 0, %s111
    %s113 = sphi 0, %s111
    %s114 = sphi 0, %s113
    %s128 = sphi 0, %s114
    %s134 = sphi 0, %s136
    %s137 = sphi 0, %s134
    %s138 = sphi 0, %s137
    %s154 = sphi 0, %s138
    %s160 = sphi 0, %s162
    %s163 = sphi 0, %s160
    %s164 = sphi 0, %s163
    %s180 = sphi 0, %s164
    %s186 = sphi 0, %s188
    %s189 = sphi 0, %s186
    %s190 = sphi 0, %s189
    %s206 = sphi 0, %s190
  $region4: #{encoder_forward.5} parent=0 // loop_header_branch
    %17 = sbr.rel (%p15) target = $region8
  $region5: #{encoder_forward.5} parent=0 // loop_body
    %s19 = ssub.s32 %s14, 1
    %s20 = ssub.s32 %s14, 2
    %s21 = sadd.s32 %s14, 1
    %s22 = ssub.s32 %s14, %s21
    %p23 = scmp.eq.s32.totalorder %s22, 0
    %s25 = sadd.s32 %s24, 1
    %s26 = scalar_select %p23, %s24, %s25
    %p29 = pneg %p23
    %p30 = scmp.eq.s32.totalorder %s14, 1
    %p31 = por %p29, %p30
    %p32 = scmp.ne.s32.totalorder %s24, %s27
    %p33 = scmp.eq.s32.totalorder %s14, 0
    %p34 = por %p32, %p33
    %p35 = scmp.ne.s32.totalorder %s24, %s27
    %p36 = scmp.eq.s32.totalorder %s19, 1
    %p37 = por %p35, %p36
    %p38 = scmp.ne.s32.totalorder %s27, %s28
    %p39 = scmp.eq.s32.totalorder %s19, 0
    %p40 = por %p38, %p39
    %p41 = scmp.ne.s32.totalorder %s27, %s28
    %p42 = scmp.eq.s32.totalorder %s20, 1
    %p43 = por %p41, %p42
    %p45 = scmp.ne.s32.totalorder %s28, %s44
    %p46 = scmp.eq.s32.totalorder %s20, 0
    %p47 = por %p45, %p46
    %s49 = sadd.s32 %s48, 1
    %p52 = scmp.eq.s32.totalorder %s14, 1
    %p53 = scmp.ne.s32.totalorder %s48, %s50
    %p54 = scmp.eq.s32.totalorder %s14, 0
    %p55 = por %p53, %p54
    %p56 = scmp.ne.s32.totalorder %s48, %s50
    %p57 = scmp.eq.s32.totalorder %s19, 1
    %p58 = por %p56, %p57
    %p59 = scmp.ne.s32.totalorder %s50, %s51
    %p60 = scmp.eq.s32.totalorder %s19, 0
    %p61 = por %p59, %p60
    %p62 = scmp.ne.s32.totalorder %s50, %s51
    %p63 = scmp.eq.s32.totalorder %s20, 1
    %p64 = por %p62, %p63
    %p66 = scmp.ne.s32.totalorder %s51, %s65
    %p67 = scmp.eq.s32.totalorder %s20, 0
    %p68 = por %p66, %p67
    %s70 = sadd.s32 %s69, 1
    %p73 = scmp.eq.s32.totalorder %s14, 1
    %p74 = scmp.ne.s32.totalorder %s69, %s71
    %p75 = scmp.eq.s32.totalorder %s14, 0
    %p76 = por %p74, %p75
    %p77 = scmp.ne.s32.totalorder %s69, %s71
    %p78 = scmp.eq.s32.totalorder %s19, 1
    %p79 = por %p77, %p78
    %p80 = scmp.ne.s32.totalorder %s71, %s72
    %p81 = scmp.eq.s32.totalorder %s19, 0
    %p82 = por %p80, %p81
    %p83 = scmp.ne.s32.totalorder %s71, %s72
    %p84 = scmp.eq.s32.totalorder %s20, 1
    %p85 = por %p83, %p84
    %p87 = scmp.ne.s32.totalorder %s72, %s86
    %p88 = scmp.eq.s32.totalorder %s20, 0
    %p89 = por %p87, %p88
    %s91 = sadd.s32 %s90, 1
    %p94 = scmp.eq.s32.totalorder %s14, 1
    %p95 = scmp.ne.s32.totalorder %s90, %s92
    %p96 = scmp.eq.s32.totalorder %s14, 0
    %p97 = por %p95, %p96
    %p98 = scmp.ne.s32.totalorder %s90, %s92
    %p99 = scmp.eq.s32.totalorder %s19, 1
    %p100 = por %p98, %p99
    %p101 = scmp.ne.s32.totalorder %s92, %s93
    %p102 = scmp.eq.s32.totalorder %s19, 0
    %p103 = por %p101, %p102
    %p104 = scmp.ne.s32.totalorder %s92, %s93
    %p105 = scmp.eq.s32.totalorder %s20, 1
    %p106 = por %p104, %p105
    %p108 = scmp.ne.s32.totalorder %s93, %s107
    %p109 = scmp.eq.s32.totalorder %s20, 0
    %p110 = por %p108, %p109
    %s112 = sadd.s32 %s111, 1
    %p115 = scmp.eq.s32.totalorder %s14, 1
    %p116 = scmp.ne.s32.totalorder %s111, %s113
    %p117 = scmp.eq.s32.totalorder %s14, 0
    %p118 = por %p116, %p117
    %p119 = scmp.ne.s32.totalorder %s111, %s113
    %p120 = scmp.eq.s32.totalorder %s19, 1
    %p121 = por %p119, %p120
    %p122 = scmp.ne.s32.totalorder %s113, %s114
    %p123 = scmp.eq.s32.totalorder %s19, 0
    %p124 = por %p122, %p123
    %p125 = scmp.ne.s32.totalorder %s113, %s114
    %p126 = scmp.eq.s32.totalorder %s20, 1
    %p127 = por %p125, %p126
    %p129 = scmp.ne.s32.totalorder %s114, %s128
    %p130 = scmp.eq.s32.totalorder %s20, 0
    %p131 = por %p129, %p130
    %s132 = ssub.s32 %s14, %s21
    %p133 = scmp.eq.s32.totalorder %s132, 0
    %s135 = sadd.s32 %s134, 1
    %s136 = scalar_select %p133, %s134, %s135
    %p139 = pneg %p133
    %p140 = scmp.eq.s32.totalorder %s14, 1
    %p141 = por %p139, %p140
    %p142 = scmp.ne.s32.totalorder %s134, %s137
    %p143 = scmp.eq.s32.totalorder %s14, 0
    %p144 = por %p142, %p143
    %p145 = scmp.ne.s32.totalorder %s134, %s137
    %p146 = scmp.eq.s32.totalorder %s19, 1
    %p147 = por %p145, %p146
    %p148 = scmp.ne.s32.totalorder %s137, %s138
    %p149 = scmp.eq.s32.totalorder %s19, 0
    %p150 = por %p148, %p149
    %p151 = scmp.ne.s32.totalorder %s137, %s138
    %p152 = scmp.eq.s32.totalorder %s20, 1
    %p153 = por %p151, %p152
    %p155 = scmp.ne.s32.totalorder %s138, %s154
    %p156 = scmp.eq.s32.totalorder %s20, 0
    %p157 = por %p155, %p156
    %s158 = ssub.s32 %s14, %s21
    %p159 = scmp.eq.s32.totalorder %s158, 0
    %s161 = sadd.s32 %s160, 1
    %s162 = scalar_select %p159, %s160, %s161
    %p165 = pneg %p159
    %p166 = scmp.eq.s32.totalorder %s14, 1
    %p167 = por %p165, %p166
    %p168 = scmp.ne.s32.totalorder %s160, %s163
    %p169 = scmp.eq.s32.totalorder %s14, 0
    %p170 = por %p168, %p169
    %p171 = scmp.ne.s32.totalorder %s160, %s163
    %p172 = scmp.eq.s32.totalorder %s19, 1
    %p173 = por %p171, %p172
    %p174 = scmp.ne.s32.totalorder %s163, %s164
    %p175 = scmp.eq.s32.totalorder %s19, 0
    %p176 = por %p174, %p175
    %p177 = scmp.ne.s32.totalorder %s163, %s164
    %p178 = scmp.eq.s32.totalorder %s20, 1
    %p179 = por %p177, %p178
    %p181 = scmp.ne.s32.totalorder %s164, %s180
    %p182 = scmp.eq.s32.totalorder %s20, 0
    %p183 = por %p181, %p182
    %s184 = ssub.s32 %s14, %s21
    %p185 = scmp.eq.s32.totalorder %s184, 0
    %s187 = sadd.s32 %s186, 1
    %s188 = scalar_select %p185, %s186, %s187
    %p191 = pneg %p185
    %p192 = scmp.eq.s32.totalorder %s14, 1
    %p193 = por %p191, %p192
    %p194 = scmp.ne.s32.totalorder %s186, %s189
    %p195 = scmp.eq.s32.totalorder %s14, 0
    %p196 = por %p194, %p195
    %p197 = scmp.ne.s32.totalorder %s186, %s189
    %p198 = scmp.eq.s32.totalorder %s19, 1
    %p199 = por %p197, %p198
    %p200 = scmp.ne.s32.totalorder %s189, %s190
    %p201 = scmp.eq.s32.totalorder %s19, 0
    %p202 = por %p200, %p201
    %p203 = scmp.ne.s32.totalorder %s189, %s190
    %p204 = scmp.eq.s32.totalorder %s20, 1
    %p205 = por %p203, %p204
    %p207 = scmp.ne.s32.totalorder %s190, %s206
    %p208 = scmp.eq.s32.totalorder %s20, 0
    %p209 = por %p207, %p208
    %p210 = scmp.le.s32.totalorder 1, %s14
    %p211 = scmp.lt.s32.totalorder %s14, 3
    %p212 = pnand %p210, %p211
    %p213 = pneg %p212
    // Predicated region
    $region9: #{encoder_forward.5} parent=5 // pred_check
      _
    $region10: #{encoder_forward.5} parent=5 // pred_check_branch
      %215 = sbr.rel (%p212) target = $region12
    $region11: #{encoder_forward.5} parent=5 // pred_region
      %s216 = ssub.s32 %s14, 1
      // Predicated region
      $region13: #{encoder_forward.5} parent=11 // pred_check
        %p217 = pneg %p61
      $region14: #{encoder_forward.5} parent=11 // pred_check_branch
        %219 = sbr.rel (%p217) target = $region16
      $region15: #{encoder_forward.5} parent=11 // pred_region
        _
      $region16: #{encoder_forward.5} parent=11 // pred_fallthru
        _
      // Predicated region
      $region17: #{encoder_forward.5} parent=11 // pred_check
        %p220 = pneg %p82
      $region18: #{encoder_forward.5} parent=11 // pred_check_branch
        %222 = sbr.rel (%p220) target = $region20
      $region19: #{encoder_forward.5} parent=11 // pred_region
        _
      $region20: #{encoder_forward.5} parent=11 // pred_fallthru
        _
      // Predicated region
      $region21: #{encoder_forward.5} parent=11 // pred_check
        %p223 = pneg %p103
      $region22: #{encoder_forward.5} parent=11 // pred_check_branch
        %225 = sbr.rel (%p223) target = $region24
      $region23: #{encoder_forward.5} parent=11 // pred_region
        _
      $region24: #{encoder_forward.5} parent=11 // pred_fallthru
        _
      // Predicated region
      $region25: #{encoder_forward.5} parent=11 // pred_check
        %p226 = pneg %p124
      $region26: #{encoder_forward.5} parent=11 // pred_check_branch
        %228 = sbr.rel (%p226) target = $region28
      $region27: #{encoder_forward.5} parent=11 // pred_region
        _
      $region28: #{encoder_forward.5} parent=11 // pred_fallthru
        _
    $region12: #{encoder_forward.5} parent=5 // pred_fallthru
      _
    %p229 = scmp.lt.s32.totalorder %s14, 2
    // Predicated region
    $region29: #{encoder_forward.5} parent=5 // pred_check
      %p230 = pneg %p229
    $region30: #{encoder_forward.5} parent=5 // pred_check_branch
      %232 = sbr.rel (%p230) target = $region32
    $region31: #{encoder_forward.5} parent=5 // pred_region
      // Predicated region
      $region33: #{encoder_forward.5} parent=31 // pred_check
        %p233 = pneg %p34
      $region34: #{encoder_forward.5} parent=31 // pred_check_branch
        %235 = sbr.rel (%p233) target = $region36
      $region35: #{encoder_forward.5} parent=31 // pred_region
        %p236 = scmp.lt.s32.totalorder %s14, 1
        %s237 = scalar_select %p236, %s14, 1
        %s238 = smul.addr %s237, 24
        %s239 = smul.addr %s238, 4
        %s240 = scalar_lea.vmem %s0, %s239
      $region36: #{encoder_forward.5} parent=31 // pred_fallthru
        _
    $region32: #{encoder_forward.5} parent=5 // pred_fallthru
      _
    %p241 = scmp.le.s32.totalorder 1, %s14
    %p242 = scmp.lt.s32.totalorder %s14, 3
    %p243 = pnand %p241, %p242
    %p244 = pneg %p243
    // Predicated region
    $region37: #{encoder_forward.5} parent=5 // pred_check
      _
    $region38: #{encoder_forward.5} parent=5 // pred_check_branch
      %246 = sbr.rel (%p243) target = $region40
    $region39: #{encoder_forward.5} parent=5 // pred_region
      %s247 = ssub.s32 %s14, 1
      %p248 = scmp.lt.s32.totalorder %s19, 1
      %s249 = scalar_select %p248, %s19, 1
      %s250 = smul.addr %s249, 24
      %s251 = smul.addr %s250, 4
      %s252 = scalar_lea.vmem %s0, %s251
      %p253 = pneg %p40
      %p254 = pneg %p37
      %p255 = pneg %p61
      %p256 = pneg %p58
      %p257 = pneg %p82
      %p258 = pneg %p79
      %p259 = pneg %p103
      %p260 = pneg %p100
      %p261 = pneg %p124
      %p262 = pneg %p121
      %p263 = pneg %p150
      %p264 = pneg %p147
      %s265 = smul.u32 2, %s19
      %p266 = scmp.lt.s32.totalorder %s265, 3
      %s267 = scalar_select %p266, %s265, 3
      %s268 = smul.addr %s267, 4
      %s269 = scalar_lea.vmem %s5, %s268
      %p270 = pneg %p176
      %p271 = pneg %p173
      %p272 = scmp.lt.s32.totalorder %s19, 1
      %s273 = scalar_select %p272, %s19, 1
      %s274 = scalar_lea.vmem %s6, %s273
      %p275 = pneg %p202
      %p276 = pneg %p199
      %p277 = scmp.lt.s32.totalorder %s19, 1
      %s278 = scalar_select %p277, %s19, 1
      %s279 = scalar_lea.vmem %s7, %s278
      %p280 = scmp.lt.s32.totalorder %s19, 1
      %s281 = scalar_select %p280, %s19, 1
      %s282 = smul.addr %s281, 24
      %s283 = smul.addr %s282, 4
      %s284 = scalar_lea.vmem %s0, %s283
      %s285 = smul.u32 2, %s19
      %p286 = scmp.lt.s32.totalorder %s285, 3
      %s287 = scalar_select %p286, %s285, 3
      %s288 = smul.addr %s287, 4
      %s289 = scalar_lea.vmem %s5, %s288
      %s290 = smul.u32 2, %s19
      %p291 = scmp.lt.s32.totalorder %s19, 1
      %s292 = scalar_select %p291, %s19, 1
      %s293 = scalar_lea.vmem %s6, %s292
      %p294 = scmp.lt.s32.totalorder %s19, 1
      %s295 = scalar_select %p294, %s19, 1
      %s296 = scalar_lea.vmem %s7, %s295
      %v298 = vld [vmem:[%s284] sm:$0xff]
      %v299 = vld [vmem:[%s284 + $0x8] sm:$0xff]
      %v300 = vld [vmem:[%s284 + $0x10] sm:$0xff]
      %v301 = vld [vmem:[%s284 + $0x18] sm:$0xff]
      %v302 = vld [vmem:[%s284 + $0x20] sm:$0xff]
      %v303 = vld [vmem:[%s284 + $0x28] sm:$0xff]
      %v304 = vld [vmem:[%s284 + $0x30] sm:$0xff]
      %v305 = vld [vmem:[%s284 + $0x38] sm:$0xff]
      %v306 = vld [vmem:[%s284 + $0x40] sm:$0x33]
      %v307 = vld [vmem:[%s284 + $0x48] sm:$0x33]
      %v308 = vld [vmem:[%s284 + $0x50] sm:$0x33]
      %v309 = vld [vmem:[%s284 + $0x58] sm:$0x33]
      %v310 = vunpack.c.l.bf16 %v298
      %v311 = vunpack.c.h.bf16 %v298
      %v312 = vunpack.c.l.bf16 %v299
      %v313 = vunpack.c.h.bf16 %v299
      %v314 = vunpack.c.l.bf16 %v300
      %v315 = vunpack.c.h.bf16 %v300
      %v316 = vunpack.c.l.bf16 %v301
      %v317 = vunpack.c.h.bf16 %v301
      %v318 = vunpack.c.l.bf16 %v302
      %v319 = vunpack.c.h.bf16 %v302
      %v320 = vunpack.c.l.bf16 %v303
      %v321 = vunpack.c.h.bf16 %v303
      %v322 = vunpack.c.l.bf16 %v304
      %v323 = vunpack.c.h.bf16 %v304
      %v324 = vunpack.c.l.bf16 %v305
      %v325 = vunpack.c.h.bf16 %v305
      %v326 = vunpack.c.l.bf16 %v306
      %v327 = vunpack.c.h.bf16 %v306
      %v328 = vunpack.c.l.bf16 %v307
      %v329 = vunpack.c.h.bf16 %v307
      %v330 = vunpack.c.l.bf16 %v308
      %v331 = vunpack.c.h.bf16 %v308
      %v332 = vunpack.c.l.bf16 %v309
      %v333 = vunpack.c.h.bf16 %v309
      %v334 = vld [vmem:[%s3] sm:$0xff]
      %v336 = vlaneseq
      %v337 = vshrl.u32 %v336, 7
      %v338 = vsub.s32 0, %v337
      %v339 = vrot.slane %v334, %v338
      %v340 = vlaneseq
      %v341 = vshrl.u32 %v340, 7
      %v342 = vsub.s32 1, %v341
      %v343 = vrot.slane %v334, %v342
      %v344 = vlaneseq
      %v345 = vshrl.u32 %v344, 7
      %v346 = vsub.s32 2, %v345
      %v347 = vrot.slane %v334, %v346
      %v348 = vlaneseq
      %v349 = vshrl.u32 %v348, 7
      %v350 = vsub.s32 3, %v349
      %v351 = vrot.slane %v334, %v350
      %v352 = vlaneseq
      %v353 = vshrl.u32 %v352, 7
      %v354 = vsub.s32 4, %v353
      %v355 = vrot.slane %v334, %v354
      %v356 = vlaneseq
      %v357 = vshrl.u32 %v356, 7
      %v358 = vsub.s32 5, %v357
      %v359 = vrot.slane %v334, %v358
      %v360 = vlaneseq
      %v361 = vshrl.u32 %v360, 7
      %v362 = vsub.s32 6, %v361
      %v363 = vrot.slane %v334, %v362
      %v364 = vlaneseq
      %v365 = vshrl.u32 %v364, 7
      %v366 = vsub.s32 7, %v365
      %v367 = vrot.slane %v334, %v366
      %v376 = vmul.f32 %v310, %v339
      %v377 = vmul.f32 %v311, %v343
      %v378 = vmul.f32 %v312, %v347
      %v379 = vmul.f32 %v313, %v351
      %v380 = vmul.f32 %v314, %v355
      %v381 = vmul.f32 %v315, %v359
      %v382 = vmul.f32 %v316, %v363
      %v383 = vmul.f32 %v317, %v367
      %v384 = vmul.f32 %v318, %v339
      %v385 = vmul.f32 %v319, %v343
      %v386 = vmul.f32 %v320, %v347
      %v387 = vmul.f32 %v321, %v351
      %v388 = vmul.f32 %v322, %v355
      %v389 = vmul.f32 %v323, %v359
      %v390 = vmul.f32 %v324, %v363
      %v391 = vmul.f32 %v325, %v367
      %v392 = vmul.f32 %v326, %v339
      %v393 = vmul.f32 %v327, %v343
      %v394 = vmul.f32 %v328, %v347
      %v395 = vmul.f32 %v329, %v351
      %v396 = vmul.f32 %v330, %v355
      %v397 = vmul.f32 %v331, %v359
      %v398 = vmul.f32 %v332, %v363
      %v399 = vmul.f32 %v333, %v367
      %v400 = vld [vmem:[%s4] sm:$0xff]
      %v402 = vlaneseq
      %v403 = vshrl.u32 %v402, 7
      %v404 = vsub.s32 0, %v403
      %v405 = vrot.slane %v400, %v404
      %v406 = vlaneseq
      %v407 = vshrl.u32 %v406, 7
      %v408 = vsub.s32 1, %v407
      %v409 = vrot.slane %v400, %v408
      %v410 = vlaneseq
      %v411 = vshrl.u32 %v410, 7
      %v412 = vsub.s32 2, %v411
      %v413 = vrot.slane %v400, %v412
      %v414 = vlaneseq
      %v415 = vshrl.u32 %v414, 7
      %v416 = vsub.s32 3, %v415
      %v417 = vrot.slane %v400, %v416
      %v418 = vlaneseq
      %v419 = vshrl.u32 %v418, 7
      %v420 = vsub.s32 4, %v419
      %v421 = vrot.slane %v400, %v420
      %v422 = vlaneseq
      %v423 = vshrl.u32 %v422, 7
      %v424 = vsub.s32 5, %v423
      %v425 = vrot.slane %v400, %v424
      %v426 = vlaneseq
      %v427 = vshrl.u32 %v426, 7
      %v428 = vsub.s32 6, %v427
      %v429 = vrot.slane %v400, %v428
      %v430 = vlaneseq
      %v431 = vshrl.u32 %v430, 7
      %v432 = vsub.s32 7, %v431
      %v433 = vrot.slane %v400, %v432
      %v442 = vadd.f32 %v376, %v405
      %v443 = vadd.f32 %v377, %v409
      %v444 = vadd.f32 %v378, %v413
      %v445 = vadd.f32 %v379, %v417
      %v446 = vadd.f32 %v380, %v421
      %v447 = vadd.f32 %v381, %v425
      %v448 = vadd.f32 %v382, %v429
      %v449 = vadd.f32 %v383, %v433
      %v450 = vadd.f32 %v384, %v405
      %v451 = vadd.f32 %v385, %v409
      %v452 = vadd.f32 %v386, %v413
      %v453 = vadd.f32 %v387, %v417
      %v454 = vadd.f32 %v388, %v421
      %v455 = vadd.f32 %v389, %v425
      %v456 = vadd.f32 %v390, %v429
      %v457 = vadd.f32 %v391, %v433
      %v458 = vadd.f32 %v392, %v405
      %v459 = vadd.f32 %v393, %v409
      %v460 = vadd.f32 %v394, %v413
      %v461 = vadd.f32 %v395, %v417
      %v462 = vadd.f32 %v396, %v421
      %v463 = vadd.f32 %v397, %v425
      %v464 = vadd.f32 %v398, %v429
      %v465 = vadd.f32 %v399, %v433
      %vm466 = vcmp.ge.f32.partialorder %v442, 0.0
      %vm467 = vcmp.ge.f32.partialorder %v443, 0.0
      %vm468 = vcmp.ge.f32.partialorder %v444, 0.0
      %vm469 = vcmp.ge.f32.partialorder %v445, 0.0
      %vm470 = vcmp.ge.f32.partialorder %v446, 0.0
      %vm471 = vcmp.ge.f32.partialorder %v447, 0.0
      %vm472 = vcmp.ge.f32.partialorder %v448, 0.0
      %vm473 = vcmp.ge.f32.partialorder %v449, 0.0
      %vm474 = vcmp.ge.f32.partialorder %v450, 0.0
      %vm475 = vcmp.ge.f32.partialorder %v451, 0.0
      %vm476 = vcmp.ge.f32.partialorder %v452, 0.0
      %vm477 = vcmp.ge.f32.partialorder %v453, 0.0
      %vm478 = vcmp.ge.f32.partialorder %v454, 0.0
      %vm479 = vcmp.ge.f32.partialorder %v455, 0.0
      %vm480 = vcmp.ge.f32.partialorder %v456, 0.0
      %vm481 = vcmp.ge.f32.partialorder %v457, 0.0
      %vm482 = vcmp.ge.f32.partialorder %v458, 0.0
      %vm483 = vcmp.ge.f32.partialorder %v459, 0.0
      %vm484 = vcmp.ge.f32.partialorder %v460, 0.0
      %vm485 = vcmp.ge.f32.partialorder %v461, 0.0
      %vm486 = vcmp.ge.f32.partialorder %v462, 0.0
      %vm487 = vcmp.ge.f32.partialorder %v463, 0.0
      %vm488 = vcmp.ge.f32.partialorder %v464, 0.0
      %vm489 = vcmp.ge.f32.partialorder %v465, 0.0
      %v490 = vmul.f32 %v442, 0.2
      %v491 = vmul.f32 %v443, 0.2
      %v492 = vmul.f32 %v444, 0.2
      %v493 = vmul.f32 %v445, 0.2
      %v494 = vmul.f32 %v446, 0.2
      %v495 = vmul.f32 %v447, 0.2
      %v496 = vmul.f32 %v448, 0.2
      %v497 = vmul.f32 %v449, 0.2
      %v498 = vmul.f32 %v450, 0.2
      %v499 = vmul.f32 %v451, 0.2
      %v500 = vmul.f32 %v452, 0.2
      %v501 = vmul.f32 %v453, 0.2
      %v502 = vmul.f32 %v454, 0.2
      %v503 = vmul.f32 %v455, 0.2
      %v504 = vmul.f32 %v456, 0.2
      %v505 = vmul.f32 %v457, 0.2
      %v506 = vmul.f32 %v458, 0.2
      %v507 = vmul.f32 %v459, 0.2
      %v508 = vmul.f32 %v460, 0.2
      %v509 = vmul.f32 %v461, 0.2
      %v510 = vmul.f32 %v462, 0.2
      %v511 = vmul.f32 %v463, 0.2
      %v512 = vmul.f32 %v464, 0.2
      %v513 = vmul.f32 %v465, 0.2
      %v514 = vsel %vm466, %v442, %v490
      %v515 = vsel %vm467, %v443, %v491
      %v516 = vsel %vm468, %v444, %v492
      %v517 = vsel %vm469, %v445, %v493
      %v518 = vsel %vm470, %v446, %v494
      %v519 = vsel %vm471, %v447, %v495
      %v520 = vsel %vm472, %v448, %v496
      %v521 = vsel %vm473, %v449, %v497
      %v522 = vsel %vm474, %v450, %v498
      %v523 = vsel %vm475, %v451, %v499
      %v524 = vsel %vm476, %v452, %v500
      %v525 = vsel %vm477, %v453, %v501
      %v526 = vsel %vm478, %v454, %v502
      %v527 = vsel %vm479, %v455, %v503
      %v528 = vsel %vm480, %v456, %v504
      %v529 = vsel %vm481, %v457, %v505
      %v530 = vsel %vm482, %v458, %v506
      %v531 = vsel %vm483, %v459, %v507
      %v532 = vsel %vm484, %v460, %v508
      %v533 = vsel %vm485, %v461, %v509
      %v534 = vsel %vm486, %v462, %v510
      %v535 = vsel %vm487, %v463, %v511
      %v536 = vsel %vm488, %v464, %v512
      %v537 = vsel %vm489, %v465, %v513
      %v538 = vpack.c.bf16 %v522, %v514
      %v539 = vpack.c.bf16 %v523, %v515
      %v540 = vpack.c.bf16 %v524, %v516
      %v541 = vpack.c.bf16 %v525, %v517
      %v542 = vpack.c.bf16 %v526, %v518
      %v543 = vpack.c.bf16 %v527, %v519
      %v544 = vpack.c.bf16 %v528, %v520
      %v545 = vpack.c.bf16 %v529, %v521
      %v546 = vpack.c.bf16 %v530, %v530
      %v547 = vpack.c.bf16 %v531, %v531
      %v548 = vpack.c.bf16 %v532, %v532
      %v549 = vpack.c.bf16 %v533, %v533
      %v550 = vpack.c.bf16 %v534, %v534
      %v551 = vpack.c.bf16 %v535, %v535
      %v552 = vpack.c.bf16 %v536, %v536
      %v553 = vpack.c.bf16 %v537, %v537
      %v554 = vld [vmem:[%s1] sm:$0xf]
      %v555 = vld [vmem:[%s1 + $0x4] sm:$0xf]
      %v556 = vld [vmem:[%s1 + $0x8] sm:$0xf]
      %v557 = vld [vmem:[%s1 + $0xc] sm:$0xf]
      %v558 = vld [vmem:[%s1 + $0x10] sm:$0xf]
      %v559 = vld [vmem:[%s1 + $0x14] sm:$0xf]
      %v560 = vld [vmem:[%s1 + $0x18] sm:$0xf]
      %v561 = vld [vmem:[%s1 + $0x1c] sm:$0xf]
      %v562 = vld [vmem:[%s1 + $0x20] sm:$0xf]
      %v563 = vld [vmem:[%s1 + $0x24] sm:$0xf]
      %v564 = vld [vmem:[%s1 + $0x28] sm:$0xf]
      %v565 = vld [vmem:[%s1 + $0x2c] sm:$0xf]
      %v566 = vld [vmem:[%s1 + $0x30] sm:$0xf]
      %v567 = vld [vmem:[%s1 + $0x34] sm:$0xf]
      %v568 = vld [vmem:[%s1 + $0x38] sm:$0xf]
      %v569 = vld [vmem:[%s1 + $0x3c] sm:$0xf]
      %v570 = vld [vmem:[%s1 + $0x40] sm:$0xf]
      %v571 = vld [vmem:[%s1 + $0x44] sm:$0xf]
      %v572 = vld [vmem:[%s1 + $0x48] sm:$0xf]
      %v573 = vld [vmem:[%s1 + $0x4c] sm:$0xf]
      %v574 = vld [vmem:[%s1 + $0x50] sm:$0xf]
      %v575 = vld [vmem:[%s1 + $0x54] sm:$0xf]
      %v576 = vld [vmem:[%s1 + $0x58] sm:$0xf]
      %v577 = vld [vmem:[%s1 + $0x5c] sm:$0xf]
      %v578 = vld [vmem:[%s1 + $0x60] sm:$0xf]
      %v579 = vld [vmem:[%s1 + $0x64] sm:$0xf]
      %v580 = vld [vmem:[%s1 + $0x68] sm:$0xf]
      %v581 = vld [vmem:[%s1 + $0x6c] sm:$0xf]
      %v582 = vld [vmem:[%s1 + $0x70] sm:$0xf]
      %v583 = vld [vmem:[%s1 + $0x74] sm:$0xf]
      %v584 = vld [vmem:[%s1 + $0x78] sm:$0xf]
      %v585 = vld [vmem:[%s1 + $0x7c] sm:$0xf]
      %v586 = vld [vmem:[%s1 + $0x80] sm:$0xf]
      %v587 = vld [vmem:[%s1 + $0x84] sm:$0xf]
      %v588 = vld [vmem:[%s1 + $0x88] sm:$0xf]
      %v589 = vld [vmem:[%s1 + $0x8c] sm:$0xf]
      %v590 = vld [vmem:[%s1 + $0x90] sm:$0xf]
      %v591 = vld [vmem:[%s1 + $0x94] sm:$0xf]
      %v592 = vld [vmem:[%s1 + $0x98] sm:$0xf]
      %v593 = vld [vmem:[%s1 + $0x9c] sm:$0xf]
      %v594 = vld [vmem:[%s1 + $0xa0] sm:$0xf]
      %v595 = vld [vmem:[%s1 + $0xa4] sm:$0xf]
      %v596 = vld [vmem:[%s1 + $0xa8] sm:$0xf]
      %v597 = vld [vmem:[%s1 + $0xac] sm:$0xf]
      %v598 = vld [vmem:[%s1 + $0xb0] sm:$0xf]
      %v599 = vld [vmem:[%s1 + $0xb4] sm:$0xf]
      %v600 = vld [vmem:[%s1 + $0xb8] sm:$0xf]
      %v601 = vld [vmem:[%s1 + $0xbc] sm:$0xf]
      %v602 = vld [vmem:[%s1 + $0xc0] sm:$0xf]
      %v603 = vld [vmem:[%s1 + $0xc4] sm:$0xf]
      %v604 = vld [vmem:[%s1 + $0xc8] sm:$0xf]
      %v605 = vld [vmem:[%s1 + $0xcc] sm:$0xf]
      %v606 = vld [vmem:[%s1 + $0xd0] sm:$0xf]
      %v607 = vld [vmem:[%s1 + $0xd4] sm:$0xf]
      %v608 = vld [vmem:[%s1 + $0xd8] sm:$0xf]
      %v609 = vld [vmem:[%s1 + $0xdc] sm:$0xf]
      %v610 = vld [vmem:[%s1 + $0xe0] sm:$0xf]
      %v611 = vld [vmem:[%s1 + $0xe4] sm:$0xf]
      %v612 = vld [vmem:[%s1 + $0xe8] sm:$0xf]
      %v613 = vld [vmem:[%s1 + $0xec] sm:$0xf]
      %v614 = vld [vmem:[%s1 + $0xf0] sm:$0xf]
      %v615 = vld [vmem:[%s1 + $0xf4] sm:$0xf]
      %v616 = vld [vmem:[%s1 + $0xf8] sm:$0xf]
      %v617 = vld [vmem:[%s1 + $0xfc] sm:$0xf]
      %v618 = vld [vmem:[%s1 + $0x100] sm:$0xf]
      %v619 = vld [vmem:[%s1 + $0x104] sm:$0xf]
      %v620 = vld [vmem:[%s1 + $0x108] sm:$0xf]
      %v621 = vld [vmem:[%s1 + $0x10c] sm:$0xf]
      %v622 = vld [vmem:[%s1 + $0x110] sm:$0xf]
      %v623 = vld [vmem:[%s1 + $0x114] sm:$0xf]
      %v624 = vld [vmem:[%s1 + $0x118] sm:$0xf]
      %v625 = vld [vmem:[%s1 + $0x11c] sm:$0xf]
      %v626 = vld [vmem:[%s1 + $0x120] sm:$0xf]
      %v627 = vld [vmem:[%s1 + $0x124] sm:$0xf]
      %v628 = vld [vmem:[%s1 + $0x128] sm:$0xf]
      %v629 = vld [vmem:[%s1 + $0x12c] sm:$0xf]
      %v630 = vld [vmem:[%s1 + $0x130] sm:$0xf]
      %v631 = vld [vmem:[%s1 + $0x134] sm:$0xf]
      %v632 = vld [vmem:[%s1 + $0x138] sm:$0xf]
      %v633 = vld [vmem:[%s1 + $0x13c] sm:$0xf]
      %v634 = vld [vmem:[%s1 + $0x140] sm:$0xf]
      %v635 = vld [vmem:[%s1 + $0x144] sm:$0xf]
      %v636 = vld [vmem:[%s1 + $0x148] sm:$0xf]
      %v637 = vld [vmem:[%s1 + $0x14c] sm:$0xf]
      %v638 = vld [vmem:[%s1 + $0x150] sm:$0xf]
      %v639 = vld [vmem:[%s1 + $0x154] sm:$0xf]
      %v640 = vld [vmem:[%s1 + $0x158] sm:$0xf]
      %v641 = vld [vmem:[%s1 + $0x15c] sm:$0xf]
      %v642 = vld [vmem:[%s1 + $0x160] sm:$0xf]
      %v643 = vld [vmem:[%s1 + $0x164] sm:$0xf]
      %v644 = vld [vmem:[%s1 + $0x168] sm:$0xf]
      %v645 = vld [vmem:[%s1 + $0x16c] sm:$0xf]
      %v646 = vld [vmem:[%s1 + $0x170] sm:$0xf]
      %v647 = vld [vmem:[%s1 + $0x174] sm:$0xf]
      %v648 = vld [vmem:[%s1 + $0x178] sm:$0xf]
      %v649 = vld [vmem:[%s1 + $0x17c] sm:$0xf]
      %v650 = vld [vmem:[%s1 + $0x180] sm:$0xf]
      %v651 = vld [vmem:[%s1 + $0x184] sm:$0xf]
      %v652 = vld [vmem:[%s1 + $0x188] sm:$0xf]
      %v653 = vld [vmem:[%s1 + $0x18c] sm:$0xf]
      %v654 = vld [vmem:[%s1 + $0x190] sm:$0xf]
      %v655 = vld [vmem:[%s1 + $0x194] sm:$0xf]
      %v656 = vld [vmem:[%s1 + $0x198] sm:$0xf]
      %v657 = vld [vmem:[%s1 + $0x19c] sm:$0xf]
      %v658 = vld [vmem:[%s1 + $0x1a0] sm:$0xf]
      %v659 = vld [vmem:[%s1 + $0x1a4] sm:$0xf]
      %v660 = vld [vmem:[%s1 + $0x1a8] sm:$0xf]
      %v661 = vld [vmem:[%s1 + $0x1ac] sm:$0xf]
      %v662 = vld [vmem:[%s1 + $0x1b0] sm:$0xf]
      %v663 = vld [vmem:[%s1 + $0x1b4] sm:$0xf]
      %v664 = vld [vmem:[%s1 + $0x1b8] sm:$0xf]
      %v665 = vld [vmem:[%s1 + $0x1bc] sm:$0xf]
      %v666 = vld [vmem:[%s1 + $0x1c0] sm:$0xf]
      %v667 = vld [vmem:[%s1 + $0x1c4] sm:$0xf]
      %v668 = vld [vmem:[%s1 + $0x1c8] sm:$0xf]
      %v669 = vld [vmem:[%s1 + $0x1cc] sm:$0xf]
      %v670 = vld [vmem:[%s1 + $0x1d0] sm:$0xf]
      %v671 = vld [vmem:[%s1 + $0x1d4] sm:$0xf]
      %v672 = vld [vmem:[%s1 + $0x1d8] sm:$0xf]
      %v673 = vld [vmem:[%s1 + $0x1dc] sm:$0xf]
      %v674 = vld [vmem:[%s1 + $0x1e0] sm:$0xf]
      %v675 = vld [vmem:[%s1 + $0x1e4] sm:$0xf]
      %v676 = vld [vmem:[%s1 + $0x1e8] sm:$0xf]
      %v677 = vld [vmem:[%s1 + $0x1ec] sm:$0xf]
      %v678 = vld [vmem:[%s1 + $0x1f0] sm:$0xf]
      %v679 = vld [vmem:[%s1 + $0x1f4] sm:$0xf]
      %v680 = vld [vmem:[%s1 + $0x1f8] sm:$0xf]
      %v681 = vld [vmem:[%s1 + $0x1fc] sm:$0xf]
      %s682 = scalar_lea.vmem %s1, 512
      %v683 = vld [vmem:[%s682] sm:$0xf]
      %v684 = vld [vmem:[%s682 + $0x4] sm:$0xf]
      %v685 = vld [vmem:[%s682 + $0x8] sm:$0xf]
      %v686 = vld [vmem:[%s682 + $0xc] sm:$0xf]
      %v687 = vld [vmem:[%s682 + $0x10] sm:$0xf]
      %v688 = vld [vmem:[%s682 + $0x14] sm:$0xf]
      %v689 = vld [vmem:[%s682 + $0x18] sm:$0xf]
      %v690 = vld [vmem:[%s682 + $0x1c] sm:$0xf]
      %v691 = vld [vmem:[%s682 + $0x20] sm:$0xf]
      %v692 = vld [vmem:[%s682 + $0x24] sm:$0xf]
      %v693 = vld [vmem:[%s682 + $0x28] sm:$0xf]
      %v694 = vld [vmem:[%s682 + $0x2c] sm:$0xf]
      %v695 = vld [vmem:[%s682 + $0x30] sm:$0xf]
      %v696 = vld [vmem:[%s682 + $0x34] sm:$0xf]
      %v697 = vld [vmem:[%s682 + $0x38] sm:$0xf]
      %v698 = vld [vmem:[%s682 + $0x3c] sm:$0xf]
      %v699 = vld [vmem:[%s682 + $0x40] sm:$0xf]
      %v700 = vld [vmem:[%s682 + $0x44] sm:$0xf]
      %v701 = vld [vmem:[%s682 + $0x48] sm:$0xf]
      %v702 = vld [vmem:[%s682 + $0x4c] sm:$0xf]
      %v703 = vld [vmem:[%s682 + $0x50] sm:$0xf]
      %v704 = vld [vmem:[%s682 + $0x54] sm:$0xf]
      %v705 = vld [vmem:[%s682 + $0x58] sm:$0xf]
      %v706 = vld [vmem:[%s682 + $0x5c] sm:$0xf]
      %v707 = vld [vmem:[%s682 + $0x60] sm:$0xf]
      %v708 = vld [vmem:[%s682 + $0x64] sm:$0xf]
      %v709 = vld [vmem:[%s682 + $0x68] sm:$0xf]
      %v710 = vld [vmem:[%s682 + $0x6c] sm:$0xf]
      %v711 = vld [vmem:[%s682 + $0x70] sm:$0xf]
      %v712 = vld [vmem:[%s682 + $0x74] sm:$0xf]
      %v713 = vld [vmem:[%s682 + $0x78] sm:$0xf]
      %v714 = vld [vmem:[%s682 + $0x7c] sm:$0xf]
      %v715 = vld [vmem:[%s682 + $0x80] sm:$0xf]
      %v716 = vld [vmem:[%s682 + $0x84] sm:$0xf]
      %v717 = vld [vmem:[%s682 + $0x88] sm:$0xf]
      %v718 = vld [vmem:[%s682 + $0x8c] sm:$0xf]
      %v719 = vld [vmem:[%s682 + $0x90] sm:$0xf]
      %v720 = vld [vmem:[%s682 + $0x94] sm:$0xf]
      %v721 = vld [vmem:[%s682 + $0x98] sm:$0xf]
      %v722 = vld [vmem:[%s682 + $0x9c] sm:$0xf]
      %v723 = vld [vmem:[%s682 + $0xa0] sm:$0xf]
      %v724 = vld [vmem:[%s682 + $0xa4] sm:$0xf]
      %v725 = vld [vmem:[%s682 + $0xa8] sm:$0xf]
      %v726 = vld [vmem:[%s682 + $0xac] sm:$0xf]
      %v727 = vld [vmem:[%s682 + $0xb0] sm:$0xf]
      %v728 = vld [vmem:[%s682 + $0xb4] sm:$0xf]
      %v729 = vld [vmem:[%s682 + $0xb8] sm:$0xf]
      %v730 = vld [vmem:[%s682 + $0xbc] sm:$0xf]
      %v731 = vld [vmem:[%s682 + $0xc0] sm:$0xf]
      %v732 = vld [vmem:[%s682 + $0xc4] sm:$0xf]
      %v733 = vld [vmem:[%s682 + $0xc8] sm:$0xf]
      %v734 = vld [vmem:[%s682 + $0xcc] sm:$0xf]
      %v735 = vld [vmem:[%s682 + $0xd0] sm:$0xf]
      %v736 = vld [vmem:[%s682 + $0xd4] sm:$0xf]
      %v737 = vld [vmem:[%s682 + $0xd8] sm:$0xf]
      %v738 = vld [vmem:[%s682 + $0xdc] sm:$0xf]
      %v739 = vld [vmem:[%s682 + $0xe0] sm:$0xf]
      %v740 = vld [vmem:[%s682 + $0xe4] sm:$0xf]
      %v741 = vld [vmem:[%s682 + $0xe8] sm:$0xf]
      %v742 = vld [vmem:[%s682 + $0xec] sm:$0xf]
      %v743 = vld [vmem:[%s682 + $0xf0] sm:$0xf]
      %v744 = vld [vmem:[%s682 + $0xf4] sm:$0xf]
      %v745 = vld [vmem:[%s682 + $0xf8] sm:$0xf]
      %v746 = vld [vmem:[%s682 + $0xfc] sm:$0xf]
      %v747 = vld [vmem:[%s682 + $0x100] sm:$0xf]
      %v748 = vld [vmem:[%s682 + $0x104] sm:$0xf]
      %v749 = vld [vmem:[%s682 + $0x108] sm:$0xf]
      %v750 = vld [vmem:[%s682 + $0x10c] sm:$0xf]
      %v751 = vld [vmem:[%s682 + $0x110] sm:$0xf]
      %v752 = vld [vmem:[%s682 + $0x114] sm:$0xf]
      %v753 = vld [vmem:[%s682 + $0x118] sm:$0xf]
      %v754 = vld [vmem:[%s682 + $0x11c] sm:$0xf]
      %v755 = vld [vmem:[%s682 + $0x120] sm:$0xf]
      %v756 = vld [vmem:[%s682 + $0x124] sm:$0xf]
      %v757 = vld [vmem:[%s682 + $0x128] sm:$0xf]
      %v758 = vld [vmem:[%s682 + $0x12c] sm:$0xf]
      %v759 = vld [vmem:[%s682 + $0x130] sm:$0xf]
      %v760 = vld [vmem:[%s682 + $0x134] sm:$0xf]
      %v761 = vld [vmem:[%s682 + $0x138] sm:$0xf]
      %v762 = vld [vmem:[%s682 + $0x13c] sm:$0xf]
      %v763 = vld [vmem:[%s682 + $0x140] sm:$0xf]
      %v764 = vld [vmem:[%s682 + $0x144] sm:$0xf]
      %v765 = vld [vmem:[%s682 + $0x148] sm:$0xf]
      %v766 = vld [vmem:[%s682 + $0x14c] sm:$0xf]
      %v767 = vld [vmem:[%s682 + $0x150] sm:$0xf]
      %v768 = vld [vmem:[%s682 + $0x154] sm:$0xf]
      %v769 = vld [vmem:[%s682 + $0x158] sm:$0xf]
      %v770 = vld [vmem:[%s682 + $0x15c] sm:$0xf]
      %v771 = vld [vmem:[%s682 + $0x160] sm:$0xf]
      %v772 = vld [vmem:[%s682 + $0x164] sm:$0xf]
      %v773 = vld [vmem:[%s682 + $0x168] sm:$0xf]
      %v774 = vld [vmem:[%s682 + $0x16c] sm:$0xf]
      %v775 = vld [vmem:[%s682 + $0x170] sm:$0xf]
      %v776 = vld [vmem:[%s682 + $0x174] sm:$0xf]
      %v777 = vld [vmem:[%s682 + $0x178] sm:$0xf]
      %v778 = vld [vmem:[%s682 + $0x17c] sm:$0xf]
      %v779 = vld [vmem:[%s682 + $0x180] sm:$0xf]
      %v780 = vld [vmem:[%s682 + $0x184] sm:$0xf]
      %v781 = vld [vmem:[%s682 + $0x188] sm:$0xf]
      %v782 = vld [vmem:[%s682 + $0x18c] sm:$0xf]
      %v783 = vld [vmem:[%s682 + $0x190] sm:$0xf]
      %v784 = vld [vmem:[%s682 + $0x194] sm:$0xf]
      %v785 = vld [vmem:[%s682 + $0x198] sm:$0xf]
      %v786 = vld [vmem:[%s682 + $0x19c] sm:$0xf]
      %v787 = vld [vmem:[%s682 + $0x1a0] sm:$0xf]
      %v788 = vld [vmem:[%s682 + $0x1a4] sm:$0xf]
      %v789 = vld [vmem:[%s682 + $0x1a8] sm:$0xf]
      %v790 = vld [vmem:[%s682 + $0x1ac] sm:$0xf]
      %v791 = vld [vmem:[%s682 + $0x1b0] sm:$0xf]
      %v792 = vld [vmem:[%s682 + $0x1b4] sm:$0xf]
      %v793 = vld [vmem:[%s682 + $0x1b8] sm:$0xf]
      %v794 = vld [vmem:[%s682 + $0x1bc] sm:$0xf]
      %v795 = vld [vmem:[%s682 + $0x1c0] sm:$0xf]
      %v796 = vld [vmem:[%s682 + $0x1c4] sm:$0xf]
      %v797 = vld [vmem:[%s682 + $0x1c8] sm:$0xf]
      %v798 = vld [vmem:[%s682 + $0x1cc] sm:$0xf]
      %v799 = vld [vmem:[%s682 + $0x1d0] sm:$0xf]
      %v800 = vld [vmem:[%s682 + $0x1d4] sm:$0xf]
      %v801 = vld [vmem:[%s682 + $0x1d8] sm:$0xf]
      %v802 = vld [vmem:[%s682 + $0x1dc] sm:$0xf]
      %v803 = vld [vmem:[%s682 + $0x1e0] sm:$0xf]
      %v804 = vld [vmem:[%s682 + $0x1e4] sm:$0xf]
      %v805 = vld [vmem:[%s682 + $0x1e8] sm:$0xf]
      %v806 = vld [vmem:[%s682 + $0x1ec] sm:$0xf]
      %v807 = vld [vmem:[%s682 + $0x1f0] sm:$0xf]
      %v808 = vld [vmem:[%s682 + $0x1f4] sm:$0xf]
      %v809 = vld [vmem:[%s682 + $0x1f8] sm:$0xf]
      %v810 = vld [vmem:[%s682 + $0x1fc] sm:$0xf]
      %vm827 = vcmask 1045504
      %v828 = vrot.slane %v538, 2
      %v829 = vrot.slane %v546, 2
      %v830 = vsel %vm827, %v828, %v829
      %v831 = vrot.slane %v539, 2
      %v832 = vrot.slane %v547, 2
      %v833 = vsel %vm827, %v831, %v832
      %v834 = vrot.slane %v540, 2
      %v835 = vrot.slane %v548, 2
      %v836 = vsel %vm827, %v834, %v835
      %v837 = vrot.slane %v541, 2
      %v838 = vrot.slane %v549, 2
      %v839 = vsel %vm827, %v837, %v838
      %v840 = vrot.slane %v542, 2
      %v841 = vrot.slane %v550, 2
      %v842 = vsel %vm827, %v840, %v841
      %v843 = vrot.slane %v543, 2
      %v844 = vrot.slane %v551, 2
      %v845 = vsel %vm827, %v843, %v844
      %v846 = vrot.slane %v544, 2
      %v847 = vrot.slane %v552, 2
      %v848 = vsel %vm827, %v846, %v847
      %v849 = vrot.slane %v545, 2
      %v850 = vrot.slane %v553, 2
      %v851 = vsel %vm827, %v849, %v850
      %v988 = vunpack.c.l.b16 %v683
      %v989 = vunpack.c.l.b16 %v684
      %v990 = vunpack.c.l.b16 %v685
      %v991 = vunpack.c.l.b16 %v686
      %v992 = vunpack.c.l.b16 %v687
      %v993 = vunpack.c.l.b16 %v688
      %v994 = vunpack.c.l.b16 %v689
      %v995 = vunpack.c.l.b16 %v690
      %v996 = vunpack.c.l.b16 %v691
      %v997 = vunpack.c.l.b16 %v692
      %v998 = vunpack.c.l.b16 %v693
      %v999 = vunpack.c.l.b16 %v694
      %v1000 = vunpack.c.l.b16 %v695
      %v1001 = vunpack.c.l.b16 %v696
      %v1002 = vunpack.c.l.b16 %v697
      %v1003 = vunpack.c.l.b16 %v698
      %v1004 = vunpack.c.l.b16 %v699
      %v1005 = vunpack.c.l.b16 %v700
      %v1006 = vunpack.c.l.b16 %v701
      %v1007 = vunpack.c.l.b16 %v702
      %v1008 = vunpack.c.l.b16 %v703
      %v1009 = vunpack.c.l.b16 %v704
      %v1010 = vunpack.c.l.b16 %v705
      %v1011 = vunpack.c.l.b16 %v706
      %v1012 = vunpack.c.l.b16 %v707
      %v1013 = vunpack.c.l.b16 %v708
      %v1014 = vunpack.c.l.b16 %v709
      %v1015 = vunpack.c.l.b16 %v710
      %v1016 = vunpack.c.l.b16 %v711
      %v1017 = vunpack.c.l.b16 %v712
      %v1018 = vunpack.c.l.b16 %v713
      %v1019 = vunpack.c.l.b16 %v714
      %v1020 = vunpack.c.l.b16 %v715
      %v1021 = vunpack.c.l.b16 %v716
      %v1022 = vunpack.c.l.b16 %v717
      %v1023 = vunpack.c.l.b16 %v718
      %v1024 = vunpack.c.l.b16 %v719
      %v1025 = vunpack.c.l.b16 %v720
      %v1026 = vunpack.c.l.b16 %v721
      %v1027 = vunpack.c.l.b16 %v722
      %v1028 = vunpack.c.l.b16 %v723
      %v1029 = vunpack.c.l.b16 %v724
      %v1030 = vunpack.c.l.b16 %v725
      %v1031 = vunpack.c.l.b16 %v726
      %v1032 = vunpack.c.l.b16 %v727
      %v1033 = vunpack.c.l.b16 %v728
      %v1034 = vunpack.c.l.b16 %v729
      %v1035 = vunpack.c.l.b16 %v730
      %v1036 = vunpack.c.l.b16 %v731
      %v1037 = vunpack.c.l.b16 %v732
      %v1038 = vunpack.c.l.b16 %v733
      %v1039 = vunpack.c.l.b16 %v734
      %v1040 = vunpack.c.l.b16 %v735
      %v1041 = vunpack.c.l.b16 %v736
      %v1042 = vunpack.c.l.b16 %v737
      %v1043 = vunpack.c.l.b16 %v738
      %v1044 = vunpack.c.l.b16 %v739
      %v1045 = vunpack.c.l.b16 %v740
      %v1046 = vunpack.c.l.b16 %v741
      %v1047 = vunpack.c.l.b16 %v742
      %v1048 = vunpack.c.l.b16 %v743
      %v1049 = vunpack.c.l.b16 %v744
      %v1050 = vunpack.c.l.b16 %v745
      %v1051 = vunpack.c.l.b16 %v746
      %v1052 = vunpack.c.l.b16 %v747
      %v1053 = vunpack.c.l.b16 %v748
      %v1054 = vunpack.c.l.b16 %v749
      %v1055 = vunpack.c.l.b16 %v750
      %v1056 = vunpack.c.l.b16 %v751
      %v1057 = vunpack.c.l.b16 %v752
      %v1058 = vunpack.c.l.b16 %v753
      %v1059 = vunpack.c.l.b16 %v754
      %v1060 = vunpack.c.l.b16 %v755
      %v1061 = vunpack.c.l.b16 %v756
      %v1062 = vunpack.c.l.b16 %v757
      %v1063 = vunpack.c.l.b16 %v758
      %v1064 = vunpack.c.l.b16 %v759
      %v1065 = vunpack.c.l.b16 %v760
      %v1066 = vunpack.c.l.b16 %v761
      %v1067 = vunpack.c.l.b16 %v762
      %v1068 = vunpack.c.l.b16 %v763
      %v1069 = vunpack.c.l.b16 %v764
      %v1070 = vunpack.c.l.b16 %v765
      %v1071 = vunpack.c.l.b16 %v766
      %v1072 = vunpack.c.l.b16 %v767
      %v1073 = vunpack.c.l.b16 %v768
      %v1074 = vunpack.c.l.b16 %v769
      %v1075 = vunpack.c.l.b16 %v770
      %v1076 = vunpack.c.l.b16 %v771
      %v1077 = vunpack.c.l.b16 %v772
      %v1078 = vunpack.c.l.b16 %v773
      %v1079 = vunpack.c.l.b16 %v774
      %v1080 = vunpack.c.l.b16 %v775
      %v1081 = vunpack.c.l.b16 %v776
      %v1082 = vunpack.c.l.b16 %v777
      %v1083 = vunpack.c.l.b16 %v778
      %v1084 = vunpack.c.l.b16 %v779
      %v1085 = vunpack.c.l.b16 %v780
      %v1086 = vunpack.c.l.b16 %v781
      %v1087 = vunpack.c.l.b16 %v782
      %v1088 = vunpack.c.l.b16 %v783
      %v1089 = vunpack.c.l.b16 %v784
      %v1090 = vunpack.c.l.b16 %v785
      %v1091 = vunpack.c.l.b16 %v786
      %v1092 = vunpack.c.l.b16 %v787
      %v1093 = vunpack.c.l.b16 %v788
      %v1094 = vunpack.c.l.b16 %v789
      %v1095 = vunpack.c.l.b16 %v790
      %v1096 = vunpack.c.l.b16 %v791
      %v1097 = vunpack.c.l.b16 %v792
      %v1098 = vunpack.c.l.b16 %v793
      %v1099 = vunpack.c.l.b16 %v794
      %v1100 = vunpack.c.l.b16 %v795
      %v1101 = vunpack.c.l.b16 %v796
      %v1102 = vunpack.c.l.b16 %v797
      %v1103 = vunpack.c.l.b16 %v798
      %v1104 = vunpack.c.l.b16 %v799
      %v1105 = vunpack.c.l.b16 %v800
      %v1106 = vunpack.c.l.b16 %v801
      %v1107 = vunpack.c.l.b16 %v802
      %v1108 = vunpack.c.l.b16 %v803
      %v1109 = vunpack.c.l.b16 %v804
      %v1110 = vunpack.c.l.b16 %v805
      %v1111 = vunpack.c.l.b16 %v806
      %v1112 = vunpack.c.l.b16 %v807
      %v1113 = vunpack.c.l.b16 %v808
      %v1114 = vunpack.c.l.b16 %v809
      %v1115 = vunpack.c.l.b16 %v810
      %v1116 = vpack.c.b16 %v989, %v988
      %v1117 = vpack.c.b16 %v991, %v990
      %v1118 = vpack.c.b16 %v993, %v992
      %v1119 = vpack.c.b16 %v995, %v994
      %v1120 = vpack.c.b16 %v997, %v996
      %v1121 = vpack.c.b16 %v999, %v998
      %v1122 = vpack.c.b16 %v1001, %v1000
      %v1123 = vpack.c.b16 %v1003, %v1002
      %v1124 = vpack.c.b16 %v1005, %v1004
      %v1125 = vpack.c.b16 %v1007, %v1006
      %v1126 = vpack.c.b16 %v1009, %v1008
      %v1127 = vpack.c.b16 %v1011, %v1010
      %v1128 = vpack.c.b16 %v1013, %v1012
      %v1129 = vpack.c.b16 %v1015, %v1014
      %v1130 = vpack.c.b16 %v1017, %v1016
      %v1131 = vpack.c.b16 %v1019, %v1018
      %v1132 = vpack.c.b16 %v1021, %v1020
      %v1133 = vpack.c.b16 %v1023, %v1022
      %v1134 = vpack.c.b16 %v1025, %v1024
      %v1135 = vpack.c.b16 %v1027, %v1026
      %v1136 = vpack.c.b16 %v1029, %v1028
      %v1137 = vpack.c.b16 %v1031, %v1030
      %v1138 = vpack.c.b16 %v1033, %v1032
      %v1139 = vpack.c.b16 %v1035, %v1034
      %v1140 = vpack.c.b16 %v1037, %v1036
      %v1141 = vpack.c.b16 %v1039, %v1038
      %v1142 = vpack.c.b16 %v1041, %v1040
      %v1143 = vpack.c.b16 %v1043, %v1042
      %v1144 = vpack.c.b16 %v1045, %v1044
      %v1145 = vpack.c.b16 %v1047, %v1046
      %v1146 = vpack.c.b16 %v1049, %v1048
      %v1147 = vpack.c.b16 %v1051, %v1050
      %v1148 = vpack.c.b16 %v1053, %v1052
      %v1149 = vpack.c.b16 %v1055, %v1054
      %v1150 = vpack.c.b16 %v1057, %v1056
      %v1151 = vpack.c.b16 %v1059, %v1058
      %v1152 = vpack.c.b16 %v1061, %v1060
      %v1153 = vpack.c.b16 %v1063, %v1062
      %v1154 = vpack.c.b16 %v1065, %v1064
      %v1155 = vpack.c.b16 %v1067, %v1066
      %v1156 = vpack.c.b16 %v1069, %v1068
      %v1157 = vpack.c.b16 %v1071, %v1070
      %v1158 = vpack.c.b16 %v1073, %v1072
      %v1159 = vpack.c.b16 %v1075, %v1074
      %v1160 = vpack.c.b16 %v1077, %v1076
      %v1161 = vpack.c.b16 %v1079, %v1078
      %v1162 = vpack.c.b16 %v1081, %v1080
      %v1163 = vpack.c.b16 %v1083, %v1082
      %v1164 = vpack.c.b16 %v1085, %v1084
      %v1165 = vpack.c.b16 %v1087, %v1086
      %v1166 = vpack.c.b16 %v1089, %v1088
      %v1167 = vpack.c.b16 %v1091, %v1090
      %v1168 = vpack.c.b16 %v1093, %v1092
      %v1169 = vpack.c.b16 %v1095, %v1094
      %v1170 = vpack.c.b16 %v1097, %v1096
      %v1171 = vpack.c.b16 %v1099, %v1098
      %v1172 = vpack.c.b16 %v1101, %v1100
      %v1173 = vpack.c.b16 %v1103, %v1102
      %v1174 = vpack.c.b16 %v1105, %v1104
      %v1175 = vpack.c.b16 %v1107, %v1106
      %v1176 = vpack.c.b16 %v1109, %v1108
      %v1177 = vpack.c.b16 %v1111, %v1110
      %v1178 = vpack.c.b16 %v1113, %v1112
      %v1179 = vpack.c.b16 %v1115, %v1114
      %1244 = vmatprep.subr.bf16.mxu0 0
      %1245 = vmatpush1.bf16.msra.mxu0 %v1116
      %1246 = vmatprep.subr.bf16.mxu0 0
      %1247 = vmatpush1.bf16.msra.mxu0 %v1117
      %1248 = vmatprep.subr.bf16.mxu0 0
      %1249 = vmatpush1.bf16.msra.mxu0 %v1118
      %1250 = vmatprep.subr.bf16.mxu0 0
      %1251 = vmatpush1.bf16.msra.mxu0 %v1119
      %1252 = vmatprep.subr.bf16.mxu0 0
      %1253 = vmatpush1.bf16.msra.mxu0 %v1120
      %1254 = vmatprep.subr.bf16.mxu0 0
      %1255 = vmatpush1.bf16.msra.mxu0 %v1121
      %1256 = vmatprep.subr.bf16.mxu0 0
      %1257 = vmatpush1.bf16.msra.mxu0 %v1122
      %1258 = vmatprep.subr.bf16.mxu0 0
      %1259 = vmatpush1.bf16.msra.mxu0 %v1123
      %1260 = vmatprep.subr.bf16.mxu0 0
      %1261 = vmatpush1.bf16.msra.mxu0 %v1124
      %1262 = vmatprep.subr.bf16.mxu0 0
      %1263 = vmatpush1.bf16.msra.mxu0 %v1125
      %1264 = vmatprep.subr.bf16.mxu0 0
      %1265 = vmatpush1.bf16.msra.mxu0 %v1126
      %1266 = vmatprep.subr.bf16.mxu0 0
      %1267 = vmatpush1.bf16.msra.mxu0 %v1127
      %1268 = vmatprep.subr.bf16.mxu0 0
      %1269 = vmatpush1.bf16.msra.mxu0 %v1128
      %1270 = vmatprep.subr.bf16.mxu0 0
      %1271 = vmatpush1.bf16.msra.mxu0 %v1129
      %1272 = vmatprep.subr.bf16.mxu0 0
      %1273 = vmatpush1.bf16.msra.mxu0 %v1130
      %1274 = vmatprep.subr.bf16.mxu0 0
      %1275 = vmatpush1.bf16.msra.mxu0 %v1131
      %1276 = vmatprep.mubr.bf16.mxu0 %v833
      %1277 = vmatmul.mubr.bf16.gmra.mrb[0].mxu0 %v830
      %v1278 = vpop.f32.mrb[0].mxu0
      %v1279 = vadd.f32 0.0, %v1278
      %v1280 = vpop.f32.mrb[0].mxu0
      %v1281 = vpop.f32.mrb[0].mxu0
      %v1282 = vadd.f32 0.0, %v1281
      %v1283 = vpop.f32.mrb[0].mxu0
      %1284 = vdwg.mxu0
      %1285 = vmatprep.subr.bf16.mxu0 0
      %1286 = vmatpush1.bf16.msra.mxu0 %v1132
      %1287 = vmatprep.subr.bf16.mxu0 0
      %1288 = vmatpush1.bf16.msra.mxu0 %v1133
      %1289 = vmatprep.subr.bf16.mxu0 0
      %1290 = vmatpush1.bf16.msra.mxu0 %v1134
      %1291 = vmatprep.subr.bf16.mxu0 0
      %1292 = vmatpush1.bf16.msra.mxu0 %v1135
      %1293 = vmatprep.subr.bf16.mxu0 0
      %1294 = vmatpush1.bf16.msra.mxu0 %v1136
      %1295 = vmatprep.subr.bf16.mxu0 0
      %1296 = vmatpush1.bf16.msra.mxu0 %v1137
      %1297 = vmatprep.subr.bf16.mxu0 0
      %1298 = vmatpush1.bf16.msra.mxu0 %v1138
      %1299 = vmatprep.subr.bf16.mxu0 0
      %1300 = vmatpush1.bf16.msra.mxu0 %v1139
      %1301 = vmatprep.subr.bf16.mxu0 0
      %1302 = vmatpush1.bf16.msra.mxu0 %v1140
      %1303 = vmatprep.subr.bf16.mxu0 0
      %1304 = vmatpush1.bf16.msra.mxu0 %v1141
      %1305 = vmatprep.subr.bf16.mxu0 0
      %1306 = vmatpush1.bf16.msra.mxu0 %v1142
      %1307 = vmatprep.subr.bf16.mxu0 0
      %1308 = vmatpush1.bf16.msra.mxu0 %v1143
      %1309 = vmatprep.subr.bf16.mxu0 0
      %1310 = vmatpush1.bf16.msra.mxu0 %v1144
      %1311 = vmatprep.subr.bf16.mxu0 0
      %1312 = vmatpush1.bf16.msra.mxu0 %v1145
      %1313 = vmatprep.subr.bf16.mxu0 0
      %1314 = vmatpush1.bf16.msra.mxu0 %v1146
      %1315 = vmatprep.subr.bf16.mxu0 0
      %1316 = vmatpush1.bf16.msra.mxu0 %v1147
      %1317 = vmatprep.mubr.bf16.mxu0 %v839
      %1318 = vmatmul.mubr.bf16.gmra.mrb[0].mxu0 %v836
      %v1319 = vpop.f32.mrb[0].mxu0
      %v1320 = vadd.f32 %v1279, %v1319
      %v1321 = vpop.f32.mrb[0].mxu0
      %v1322 = vpop.f32.mrb[0].mxu0
      %v1323 = vadd.f32 %v1282, %v1322
      %v1324 = vpop.f32.mrb[0].mxu0
      %1325 = vdwg.mxu0
      %1326 = vmatprep.subr.bf16.mxu0 0
      %1327 = vmatpush1.bf16.msra.mxu0 %v1148
      %1328 = vmatprep.subr.bf16.mxu0 0
      %1329 = vmatpush1.bf16.msra.mxu0 %v1149
      %1330 = vmatprep.subr.bf16.mxu0 0
      %1331 = vmatpush1.bf16.msra.mxu0 %v1150
      %1332 = vmatprep.subr.bf16.mxu0 0
      %1333 = vmatpush1.bf16.msra.mxu0 %v1151
      %1334 = vmatprep.subr.bf16.mxu0 0
      %1335 = vmatpush1.bf16.msra.mxu0 %v1152
      %1336 = vmatprep.subr.bf16.mxu0 0
      %1337 = vmatpush1.bf16.msra.mxu0 %v1153
      %1338 = vmatprep.subr.bf16.mxu0 0
      %1339 = vmatpush1.bf16.msra.mxu0 %v1154
      %1340 = vmatprep.subr.bf16.mxu0 0
      %1341 = vmatpush1.bf16.msra.mxu0 %v1155
      %1342 = vmatprep.subr.bf16.mxu0 0
      %1343 = vmatpush1.bf16.msra.mxu0 %v1156
      %1344 = vmatprep.subr.bf16.mxu0 0
      %1345 = vmatpush1.bf16.msra.mxu0 %v1157
      %1346 = vmatprep.subr.bf16.mxu0 0
      %1347 = vmatpush1.bf16.msra.mxu0 %v1158
      %1348 = vmatprep.subr.bf16.mxu0 0
      %1349 = vmatpush1.bf16.msra.mxu0 %v1159
      %1350 = vmatprep.subr.bf16.mxu0 0
      %1351 = vmatpush1.bf16.msra.mxu0 %v1160
      %1352 = vmatprep.subr.bf16.mxu0 0
      %1353 = vmatpush1.bf16.msra.mxu0 %v1161
      %1354 = vmatprep.subr.bf16.mxu0 0
      %1355 = vmatpush1.bf16.msra.mxu0 %v1162
      %1356 = vmatprep.subr.bf16.mxu0 0
      %1357 = vmatpush1.bf16.msra.mxu0 %v1163
      %1358 = vmatprep.mubr.bf16.mxu0 %v845
      %1359 = vmatmul.mubr.bf16.gmra.mrb[0].mxu0 %v842
      %v1360 = vpop.f32.mrb[0].mxu0
      %v1361 = vadd.f32 %v1320, %v1360
      %v1362 = vpop.f32.mrb[0].mxu0
      %v1363 = vpop.f32.mrb[0].mxu0
      %v1364 = vadd.f32 %v1323, %v1363
      %v1365 = vpop.f32.mrb[0].mxu0
      %1366 = vdwg.mxu0
      %1367 = vmatprep.subr.bf16.mxu0 0
      %1368 = vmatpush1.bf16.msra.mxu0 %v1164
      %1369 = vmatprep.subr.bf16.mxu0 0
      %1370 = vmatpush1.bf16.msra.mxu0 %v1165
      %1371 = vmatprep.subr.bf16.mxu0 0
      %1372 = vmatpush1.bf16.msra.mxu0 %v1166
      %1373 = vmatprep.subr.bf16.mxu0 0
      %1374 = vmatpush1.bf16.msra.mxu0 %v1167
      %1375 = vmatprep.subr.bf16.mxu0 0
      %1376 = vmatpush1.bf16.msra.mxu0 %v1168
      %1377 = vmatprep.subr.bf16.mxu0 0
      %1378 = vmatpush1.bf16.msra.mxu0 %v1169
      %1379 = vmatprep.subr.bf16.mxu0 0
      %1380 = vmatpush1.bf16.msra.mxu0 %v1170
      %1381 = vmatprep.subr.bf16.mxu0 0
      %1382 = vmatpush1.bf16.msra.mxu0 %v1171
      %1383 = vmatprep.subr.bf16.mxu0 0
      %1384 = vmatpush1.bf16.msra.mxu0 %v1172
      %1385 = vmatprep.subr.bf16.mxu0 0
      %1386 = vmatpush1.bf16.msra.mxu0 %v1173
      %1387 = vmatprep.subr.bf16.mxu0 0
      %1388 = vmatpush1.bf16.msra.mxu0 %v1174
      %1389 = vmatprep.subr.bf16.mxu0 0
      %1390 = vmatpush1.bf16.msra.mxu0 %v1175
      %1391 = vmatprep.subr.bf16.mxu0 0
      %1392 = vmatpush1.bf16.msra.mxu0 %v1176
      %1393 = vmatprep.subr.bf16.mxu0 0
      %1394 = vmatpush1.bf16.msra.mxu0 %v1177
      %1395 = vmatprep.subr.bf16.mxu0 0
      %1396 = vmatpush1.bf16.msra.mxu0 %v1178
      %1397 = vmatprep.subr.bf16.mxu0 0
      %1398 = vmatpush1.bf16.msra.mxu0 %v1179
      %1399 = vmatprep.mubr.bf16.mxu0 %v851
      %1400 = vmatmul.mubr.bf16.gmra.mrb[0].mxu0 %v848
      %v1401 = vpop.f32.mrb[0].mxu0
      %v1402 = vadd.f32 %v1361, %v1401
      %v1403 = vpop.f32.mrb[0].mxu0
      %v1404 = vpop.f32.mrb[0].mxu0
      %v1405 = vadd.f32 %v1364, %v1404
      %v1406 = vpop.f32.mrb[0].mxu0
      %1407 = vdwg.mxu0
      %v1536 = vunpack.c.l.b16 %v554
      %v1537 = vunpack.c.l.b16 %v555
      %v1538 = vunpack.c.l.b16 %v556
      %v1539 = vunpack.c.l.b16 %v557
      %v1540 = vunpack.c.l.b16 %v558
      %v1541 = vunpack.c.l.b16 %v559
      %v1542 = vunpack.c.l.b16 %v560
      %v1543 = vunpack.c.l.b16 %v561
      %v1544 = vunpack.c.l.b16 %v562
      %v1545 = vunpack.c.l.b16 %v563
      %v1546 = vunpack.c.l.b16 %v564
      %v1547 = vunpack.c.l.b16 %v565
      %v1548 = vunpack.c.l.b16 %v566
      %v1549 = vunpack.c.l.b16 %v567
      %v1550 = vunpack.c.l.b16 %v568
      %v1551 = vunpack.c.l.b16 %v569
      %v1552 = vunpack.c.l.b16 %v570
      %v1553 = vunpack.c.l.b16 %v571
      %v1554 = vunpack.c.l.b16 %v572
      %v1555 = vunpack.c.l.b16 %v573
      %v1556 = vunpack.c.l.b16 %v574
      %v1557 = vunpack.c.l.b16 %v575
      %v1558 = vunpack.c.l.b16 %v576
      %v1559 = vunpack.c.l.b16 %v577
      %v1560 = vunpack.c.l.b16 %v578
      %v1561 = vunpack.c.l.b16 %v579
      %v1562 = vunpack.c.l.b16 %v580
      %v1563 = vunpack.c.l.b16 %v581
      %v1564 = vunpack.c.l.b16 %v582
      %v1565 = vunpack.c.l.b16 %v583
      %v1566 = vunpack.c.l.b16 %v584
      %v1567 = vunpack.c.l.b16 %v585
      %v1568 = vunpack.c.l.b16 %v586
      %v1569 = vunpack.c.l.b16 %v587
      %v1570 = vunpack.c.l.b16 %v588
      %v1571 = vunpack.c.l.b16 %v589
      %v1572 = vunpack.c.l.b16 %v590
      %v1573 = vunpack.c.l.b16 %v591
      %v1574 = vunpack.c.l.b16 %v592
      %v1575 = vunpack.c.l.b16 %v593
      %v1576 = vunpack.c.l.b16 %v594
      %v1577 = vunpack.c.l.b16 %v595
      %v1578 = vunpack.c.l.b16 %v596
      %v1579 = vunpack.c.l.b16 %v597
      %v1580 = vunpack.c.l.b16 %v598
      %v1581 = vunpack.c.l.b16 %v599
      %v1582 = vunpack.c.l.b16 %v600
      %v1583 = vunpack.c.l.b16 %v601
      %v1584 = vunpack.c.l.b16 %v602
      %v1585 = vunpack.c.l.b16 %v603
      %v1586 = vunpack.c.l.b16 %v604
      %v1587 = vunpack.c.l.b16 %v605
      %v1588 = vunpack.c.l.b16 %v606
      %v1589 = vunpack.c.l.b16 %v607
      %v1590 = vunpack.c.l.b16 %v608
      %v1591 = vunpack.c.l.b16 %v609
      %v1592 = vunpack.c.l.b16 %v610
      %v1593 = vunpack.c.l.b16 %v611
      %v1594 = vunpack.c.l.b16 %v612
      %v1595 = vunpack.c.l.b16 %v613
      %v1596 = vunpack.c.l.b16 %v614
      %v1597 = vunpack.c.l.b16 %v615
      %v1598 = vunpack.c.l.b16 %v616
      %v1599 = vunpack.c.l.b16 %v617
      %v1600 = vunpack.c.l.b16 %v618
      %v1601 = vunpack.c.l.b16 %v619
      %v1602 = vunpack.c.l.b16 %v620
      %v1603 = vunpack.c.l.b16 %v621
      %v1604 = vunpack.c.l.b16 %v622
      %v1605 = vunpack.c.l.b16 %v623
      %v1606 = vunpack.c.l.b16 %v624
      %v1607 = vunpack.c.l.b16 %v625
      %v1608 = vunpack.c.l.b16 %v626
      %v1609 = vunpack.c.l.b16 %v627
      %v1610 = vunpack.c.l.b16 %v628
      %v1611 = vunpack.c.l.b16 %v629
      %v1612 = vunpack.c.l.b16 %v630
      %v1613 = vunpack.c.l.b16 %v631
      %v1614 = vunpack.c.l.b16 %v632
      %v1615 = vunpack.c.l.b16 %v633
      %v1616 = vunpack.c.l.b16 %v634
      %v1617 = vunpack.c.l.b16 %v635
      %v1618 = vunpack.c.l.b16 %v636
      %v1619 = vunpack.c.l.b16 %v637
      %v1620 = vunpack.c.l.b16 %v638
      %v1621 = vunpack.c.l.b16 %v639
      %v1622 = vunpack.c.l.b16 %v640
      %v1623 = vunpack.c.l.b16 %v641
      %v1624 = vunpack.c.l.b16 %v642
      %v1625 = vunpack.c.l.b16 %v643
      %v1626 = vunpack.c.l.b16 %v644
      %v1627 = vunpack.c.l.b16 %v645
      %v1628 = vunpack.c.l.b16 %v646
      %v1629 = vunpack.c.l.b16 %v647
      %v1630 = vunpack.c.l.b16 %v648
      %v1631 = vunpack.c.l.b16 %v649
      %v1632 = vunpack.c.l.b16 %v650
      %v1633 = vunpack.c.l.b16 %v651
      %v1634 = vunpack.c.l.b16 %v652
      %v1635 = vunpack.c.l.b16 %v653
      %v1636 = vunpack.c.l.b16 %v654
      %v1637 = vunpack.c.l.b16 %v655
      %v1638 = vunpack.c.l.b16 %v656
      %v1639 = vunpack.c.l.b16 %v657
      %v1640 = vunpack.c.l.b16 %v658
      %v1641 = vunpack.c.l.b16 %v659
      %v1642 = vunpack.c.l.b16 %v660
      %v1643 = vunpack.c.l.b16 %v661
      %v1644 = vunpack.c.l.b16 %v662
      %v1645 = vunpack.c.l.b16 %v663
      %v1646 = vunpack.c.l.b16 %v664
      %v1647 = vunpack.c.l.b16 %v665
      %v1648 = vunpack.c.l.b16 %v666
      %v1649 = vunpack.c.l.b16 %v667
      %v1650 = vunpack.c.l.b16 %v668
      %v1651 = vunpack.c.l.b16 %v669
      %v1652 = vunpack.c.l.b16 %v670
      %v1653 = vunpack.c.l.b16 %v671
      %v1654 = vunpack.c.l.b16 %v672
      %v1655 = vunpack.c.l.b16 %v673
      %v1656 = vunpack.c.l.b16 %v674
      %v1657 = vunpack.c.l.b16 %v675
      %v1658 = vunpack.c.l.b16 %v676
      %v1659 = vunpack.c.l.b16 %v677
      %v1660 = vunpack.c.l.b16 %v678
      %v1661 = vunpack.c.l.b16 %v679
      %v1662 = vunpack.c.l.b16 %v680
      %v1663 = vunpack.c.l.b16 %v681
      %v1664 = vpack.c.b16 %v1537, %v1536
      %v1665 = vpack.c.b16 %v1539, %v1538
      %v1666 = vpack.c.b16 %v1541, %v1540
      %v1667 = vpack.c.b16 %v1543, %v1542
      %v1668 = vpack.c.b16 %v1545, %v1544
      %v1669 = vpack.c.b16 %v1547, %v1546
      %v1670 = vpack.c.b16 %v1549, %v1548
      %v1671 = vpack.c.b16 %v1551, %v1550
      %v1672 = vpack.c.b16 %v1553, %v1552
      %v1673 = vpack.c.b16 %v1555, %v1554
      %v1674 = vpack.c.b16 %v1557, %v1556
      %v1675 = vpack.c.b16 %v1559, %v1558
      %v1676 = vpack.c.b16 %v1561, %v1560
      %v1677 = vpack.c.b16 %v1563, %v1562
      %v1678 = vpack.c.b16 %v1565, %v1564
      %v1679 = vpack.c.b16 %v1567, %v1566
      %v1680 = vpack.c.b16 %v1569, %v1568
      %v1681 = vpack.c.b16 %v1571, %v1570
      %v1682 = vpack.c.b16 %v1573, %v1572
      %v1683 = vpack.c.b16 %v1575, %v1574
      %v1684 = vpack.c.b16 %v1577, %v1576
      %v1685 = vpack.c.b16 %v1579, %v1578
      %v1686 = vpack.c.b16 %v1581, %v1580
      %v1687 = vpack.c.b16 %v1583, %v1582
      %v1688 = vpack.c.b16 %v1585, %v1584
      %v1689 = vpack.c.b16 %v1587, %v1586
      %v1690 = vpack.c.b16 %v1589, %v1588
      %v1691 = vpack.c.b16 %v1591, %v1590
      %v1692 = vpack.c.b16 %v1593, %v1592
      %v1693 = vpack.c.b16 %v1595, %v1594
      %v1694 = vpack.c.b16 %v1597, %v1596
      %v1695 = vpack.c.b16 %v1599, %v1598
      %v1696 = vpack.c.b16 %v1601, %v1600
      %v1697 = vpack.c.b16 %v1603, %v1602
      %v1698 = vpack.c.b16 %v1605, %v1604
      %v1699 = vpack.c.b16 %v1607, %v1606
      %v1700 = vpack.c.b16 %v1609, %v1608
      %v1701 = vpack.c.b16 %v1611, %v1610
      %v1702 = vpack.c.b16 %v1613, %v1612
      %v1703 = vpack.c.b16 %v1615, %v1614
      %v1704 = vpack.c.b16 %v1617, %v1616
      %v1705 = vpack.c.b16 %v1619, %v1618
      %v1706 = vpack.c.b16 %v1621, %v1620
      %v1707 = vpack.c.b16 %v1623, %v1622
      %v1708 = vpack.c.b16 %v1625, %v1624
      %v1709 = vpack.c.b16 %v1627, %v1626
      %v1710 = vpack.c.b16 %v1629, %v1628
      %v1711 = vpack.c.b16 %v1631, %v1630
      %v1712 = vpack.c.b16 %v1633, %v1632
      %v1713 = vpack.c.b16 %v1635, %v1634
      %v1714 = vpack.c.b16 %v1637, %v1636
      %v1715 = vpack.c.b16 %v1639, %v1638
      %v1716 = vpack.c.b16 %v1641, %v1640
      %v1717 = vpack.c.b16 %v1643, %v1642
      %v1718 = vpack.c.b16 %v1645, %v1644
      %v1719 = vpack.c.b16 %v1647, %v1646
      %v1720 = vpack.c.b16 %v1649, %v1648
      %v1721 = vpack.c.b16 %v1651, %v1650
      %v1722 = vpack.c.b16 %v1653, %v1652
      %v1723 = vpack.c.b16 %v1655, %v1654
      %v1724 = vpack.c.b16 %v1657, %v1656
      %v1725 = vpack.c.b16 %v1659, %v1658
      %v1726 = vpack.c.b16 %v1661, %v1660
      %v1727 = vpack.c.b16 %v1663, %v1662
      %1792 = vmatprep.subr.bf16.mxu0 0
      %1793 = vmatpush1.bf16.msra.mxu0 %v1664
      %1794 = vmatprep.subr.bf16.mxu0 0
      %1795 = vmatpush1.bf16.msra.mxu0 %v1665
      %1796 = vmatprep.subr.bf16.mxu0 0
      %1797 = vmatpush1.bf16.msra.mxu0 %v1666
      %1798 = vmatprep.subr.bf16.mxu0 0
      %1799 = vmatpush1.bf16.msra.mxu0 %v1667
      %1800 = vmatprep.subr.bf16.mxu0 0
      %1801 = vmatpush1.bf16.msra.mxu0 %v1668
      %1802 = vmatprep.subr.bf16.mxu0 0
      %1803 = vmatpush1.bf16.msra.mxu0 %v1669
      %1804 = vmatprep.subr.bf16.mxu0 0
      %1805 = vmatpush1.bf16.msra.mxu0 %v1670
      %1806 = vmatprep.subr.bf16.mxu0 0
      %1807 = vmatpush1.bf16.msra.mxu0 %v1671
      %1808 = vmatprep.subr.bf16.mxu0 0
      %1809 = vmatpush1.bf16.msra.mxu0 %v1672
      %1810 = vmatprep.subr.bf16.mxu0 0
      %1811 = vmatpush1.bf16.msra.mxu0 %v1673
      %1812 = vmatprep.subr.bf16.mxu0 0
      %1813 = vmatpush1.bf16.msra.mxu0 %v1674
      %1814 = vmatprep.subr.bf16.mxu0 0
      %1815 = vmatpush1.bf16.msra.mxu0 %v1675
      %1816 = vmatprep.subr.bf16.mxu0 0
      %1817 = vmatpush1.bf16.msra.mxu0 %v1676
      %1818 = vmatprep.subr.bf16.mxu0 0
      %1819 = vmatpush1.bf16.msra.mxu0 %v1677
      %1820 = vmatprep.subr.bf16.mxu0 0
      %1821 = vmatpush1.bf16.msra.mxu0 %v1678
      %1822 = vmatprep.subr.bf16.mxu0 0
      %1823 = vmatpush1.bf16.msra.mxu0 %v1679
      %1824 = vmatprep.mubr.bf16.mxu0 %v539
      %1825 = vmatmul.mubr.bf16.gmra.mrb[0].mxu0 %v538
      %v1826 = vpop.f32.mrb[0].mxu0
      %v1827 = vadd.f32 %v1402, %v1826
      %v1828 = vpop.f32.mrb[0].mxu0
      %v1829 = vpop.f32.mrb[0].mxu0
      %v1830 = vadd.f32 %v1405, %v1829
      %v1831 = vpop.f32.mrb[0].mxu0
      %1832 = vdwg.mxu0
      %1833 = vmatprep.subr.bf16.mxu0 0
      %1834 = vmatpush1.bf16.msra.mxu0 %v1680
      %1835 = vmatprep.subr.bf16.mxu0 0
      %1836 = vmatpush1.bf16.msra.mxu0 %v1681
      %1837 = vmatprep.subr.bf16.mxu0 0
      %1838 = vmatpush1.bf16.msra.mxu0 %v1682
      %1839 = vmatprep.subr.bf16.mxu0 0
      %1840 = vmatpush1.bf16.msra.mxu0 %v1683
      %1841 = vmatprep.subr.bf16.mxu0 0
      %1842 = vmatpush1.bf16.msra.mxu0 %v1684
      %1843 = vmatprep.subr.bf16.mxu0 0
      %1844 = vmatpush1.bf16.msra.mxu0 %v1685
      %1845 = vmatprep.subr.bf16.mxu0 0
      %1846 = vmatpush1.bf16.msra.mxu0 %v1686
      %1847 = vmatprep.subr.bf16.mxu0 0
      %1848 = vmatpush1.bf16.msra.mxu0 %v1687
      %1849 = vmatprep.subr.bf16.mxu0 0
      %1850 = vmatpush1.bf16.msra.mxu0 %v1688
      %1851 = vmatprep.subr.bf16.mxu0 0
      %1852 = vmatpush1.bf16.msra.mxu0 %v1689
      %1853 = vmatprep.subr.bf16.mxu0 0
      %1854 = vmatpush1.bf16.msra.mxu0 %v1690
      %1855 = vmatprep.subr.bf16.mxu0 0
      %1856 = vmatpush1.bf16.msra.mxu0 %v1691
      %1857 = vmatprep.subr.bf16.mxu0 0
      %1858 = vmatpush1.bf16.msra.mxu0 %v1692
      %1859 = vmatprep.subr.bf16.mxu0 0
      %1860 = vmatpush1.bf16.msra.mxu0 %v1693
      %1861 = vmatprep.subr.bf16.mxu0 0
      %1862 = vmatpush1.bf16.msra.mxu0 %v1694
      %1863 = vmatprep.subr.bf16.mxu0 0
      %1864 = vmatpush1.bf16.msra.mxu0 %v1695
      %1865 = vmatprep.mubr.bf16.mxu0 %v541
      %1866 = vmatmul.mubr.bf16.gmra.mrb[0].mxu0 %v540
      %v1867 = vpop.f32.mrb[0].mxu0
      %v1868 = vadd.f32 %v1827, %v1867
      %v1869 = vpop.f32.mrb[0].mxu0
      %v1870 = vpop.f32.mrb[0].mxu0
      %v1871 = vadd.f32 %v1830, %v1870
      %v1872 = vpop.f32.mrb[0].mxu0
      %1873 = vdwg.mxu0
      %1874 = vmatprep.subr.bf16.mxu0 0
      %1875 = vmatpush1.bf16.msra.mxu0 %v1696
      %1876 = vmatprep.subr.bf16.mxu0 0
      %1877 = vmatpush1.bf16.msra.mxu0 %v1697
      %1878 = vmatprep.subr.bf16.mxu0 0
      %1879 = vmatpush1.bf16.msra.mxu0 %v1698
      %1880 = vmatprep.subr.bf16.mxu0 0
      %1881 = vmatpush1.bf16.msra.mxu0 %v1699
      %1882 = vmatprep.subr.bf16.mxu0 0
      %1883 = vmatpush1.bf16.msra.mxu0 %v1700
      %1884 = vmatprep.subr.bf16.mxu0 0
      %1885 = vmatpush1.bf16.msra.mxu0 %v1701
      %1886 = vmatprep.subr.bf16.mxu0 0
      %1887 = vmatpush1.bf16.msra.mxu0 %v1702
      %1888 = vmatprep.subr.bf16.mxu0 0
      %1889 = vmatpush1.bf16.msra.mxu0 %v1703
      %1890 = vmatprep.subr.bf16.mxu0 0
      %1891 = vmatpush1.bf16.msra.mxu0 %v1704
      %1892 = vmatprep.subr.bf16.mxu0 0
      %1893 = vmatpush1.bf16.msra.mxu0 %v1705
      %1894 = vmatprep.subr.bf16.mxu0 0
      %1895 = vmatpush1.bf16.msra.mxu0 %v1706
      %1896 = vmatprep.subr.bf16.mxu0 0
      %1897 = vmatpush1.bf16.msra.mxu0 %v1707
      %1898 = vmatprep.subr.bf16.mxu0 0
      %1899 = vmatpush1.bf16.msra.mxu0 %v1708
      %1900 = vmatprep.subr.bf16.mxu0 0
      %1901 = vmatpush1.bf16.msra.mxu0 %v1709
      %1902 = vmatprep.subr.bf16.mxu0 0
      %1903 = vmatpush1.bf16.msra.mxu0 %v1710
      %1904 = vmatprep.subr.bf16.mxu0 0
      %1905 = vmatpush1.bf16.msra.mxu0 %v1711
      %1906 = vmatprep.mubr.bf16.mxu0 %v543
      %1907 = vmatmul.mubr.bf16.gmra.mrb[0].mxu0 %v542
      %v1908 = vpop.f32.mrb[0].mxu0
      %v1909 = vadd.f32 %v1868, %v1908
      %v1910 = vpop.f32.mrb[0].mxu0
      %v1911 = vpop.f32.mrb[0].mxu0
      %v1912 = vadd.f32 %v1871, %v1911
      %v1913 = vpop.f32.mrb[0].mxu0
      %1914 = vdwg.mxu0
      %1915 = vmatprep.subr.bf16.mxu0 0
      %1916 = vmatpush1.bf16.msra.mxu0 %v1712
      %1917 = vmatprep.subr.bf16.mxu0 0
      %1918 = vmatpush1.bf16.msra.mxu0 %v1713
      %1919 = vmatprep.subr.bf16.mxu0 0
      %1920 = vmatpush1.bf16.msra.mxu0 %v1714
      %1921 = vmatprep.subr.bf16.mxu0 0
      %1922 = vmatpush1.bf16.msra.mxu0 %v1715
      %1923 = vmatprep.subr.bf16.mxu0 0
      %1924 = vmatpush1.bf16.msra.mxu0 %v1716
      %1925 = vmatprep.subr.bf16.mxu0 0
      %1926 = vmatpush1.bf16.msra.mxu0 %v1717
      %1927 = vmatprep.subr.bf16.mxu0 0
      %1928 = vmatpush1.bf16.msra.mxu0 %v1718
      %1929 = vmatprep.subr.bf16.mxu0 0
      %1930 = vmatpush1.bf16.msra.mxu0 %v1719
      %1931 = vmatprep.subr.bf16.mxu0 0
      %1932 = vmatpush1.bf16.msra.mxu0 %v1720
      %1933 = vmatprep.subr.bf16.mxu0 0
      %1934 = vmatpush1.bf16.msra.mxu0 %v1721
      %1935 = vmatprep.subr.bf16.mxu0 0
      %1936 = vmatpush1.bf16.msra.mxu0 %v1722
      %1937 = vmatprep.subr.bf16.mxu0 0
      %1938 = vmatpush1.bf16.msra.mxu0 %v1723
      %1939 = vmatprep.subr.bf16.mxu0 0
      %1940 = vmatpush1.bf16.msra.mxu0 %v1724
      %1941 = vmatprep.subr.bf16.mxu0 0
      %1942 = vmatpush1.bf16.msra.mxu0 %v1725
      %1943 = vmatprep.subr.bf16.mxu0 0
      %1944 = vmatpush1.bf16.msra.mxu0 %v1726
      %1945 = vmatprep.subr.bf16.mxu0 0
      %1946 = vmatpush1.bf16.msra.mxu0 %v1727
      %1947 = vmatprep.mubr.bf16.mxu0 %v545
      %1948 = vmatmul.mubr.bf16.gmra.mrb[0].mxu0 %v544
      %v1949 = vpop.f32.mrb[0].mxu0
      %v1950 = vadd.f32 %v1909, %v1949
      %v1951 = vpop.f32.mrb[0].mxu0
      %v1952 = vpop.f32.mrb[0].mxu0
      %v1953 = vadd.f32 %v1912, %v1952
      %v1954 = vpop.f32.mrb[0].mxu0
      %1955 = vdwg.mxu0
      %v1956 = vld [vmem:[%s2] sm:$0x1]
      %v1958 = vlaneseq
      %v1959 = vshrl.u32 %v1958, 7
      %v1960 = vsub.s32 0, %v1959
      %v1961 = vrot.slane %v1956, %v1960
      %v1963 = vadd.f32 %v1950, %v1961
      %v1964 = vadd.f32 %v1953, %v1961
      %v1965 = vpack.c.bf16 %v1964, %v1963
      %v1967 = vunpack.c.l.b16 %v1965
      %v1968 = vunpack.c.h.b16 %v1965
      %v1969 = vpack.c.b16 %v1967, %v1967
      %v1970 = vpack.c.b16 %v1968, %v1968
      %1973 = vst [vmem:[%s289] sm:$0xf] %v1969
      %1974 = vst [vmem:[%s289 + $0x4] sm:$0xf] %v1970
      %v1975 = vadd.f32 %v1963, %v1964
      %v1976 = vrot.slane %v1975, 4
      %v1977 = vadd.f32 %v1975, %v1976
      %v1978 = vrot.slane %v1977, 2
      %v1979 = vadd.f32 %v1977, %v1978
      %v1980 = vrot.slane %v1979, 1
      %v1981 = vadd.f32 %v1979, %v1980
      %v1982 = vmul.f32 %v1981, 0.0625
      %v1983 = vsub.f32 %v1963, %v1982
      %v1984 = vsub.f32 %v1964, %v1982
      %1985 = vst [vmem:[%s293] sm:$0x1] %v1981
      %v1986 = vmul.f32 %v1983, %v1983
      %v1987 = vmul.f32 %v1984, %v1984
      %v1988 = vadd.f32 %v1986, %v1987
      %v1989 = vrot.slane %v1988, 4
      %v1990 = vadd.f32 %v1988, %v1989
      %v1991 = vrot.slane %v1990, 2
      %v1992 = vadd.f32 %v1990, %v1991
      %v1993 = vrot.slane %v1992, 1
      %v1994 = vadd.f32 %v1992, %v1993
      %1995 = vst [vmem:[%s296] sm:$0x1] %v1994
      %s1996 = smul.u32 2, %s19
      %p1997 = scmp.lt.s32.totalorder %s1996, 3
      %s1998 = scalar_select %p1997, %s1996, 3
      %s1999 = smul.addr %s1998, 4
      %s2000 = scalar_lea.vmem %s5, %s1999
      %p2001 = scmp.lt.s32.totalorder %s19, 1
      %s2002 = scalar_select %p2001, %s19, 1
      %s2003 = scalar_lea.vmem %s6, %s2002
      %p2004 = scmp.lt.s32.totalorder %s19, 1
      %s2005 = scalar_select %p2004, %s19, 1
      %s2006 = scalar_lea.vmem %s7, %s2005
      // Predicated region
      $region41: #{encoder_forward.5} parent=39 // pred_check
        %p2007 = pneg %p147
      $region42: #{encoder_forward.5} parent=39 // pred_check_branch
        %2009 = sbr.rel (%p2007) target = $region44
      $region43: #{encoder_forward.5} parent=39 // pred_region
        %s2010 = smul.u32 2, %s19
      $region44: #{encoder_forward.5} parent=39 // pred_fallthru
        _
      // Predicated region
      $region45: #{encoder_forward.5} parent=39 // pred_check
        %p2011 = pneg %p173
      $region46: #{encoder_forward.5} parent=39 // pred_check_branch
        %2013 = sbr.rel (%p2011) target = $region48
      $region47: #{encoder_forward.5} parent=39 // pred_region
        _
      $region48: #{encoder_forward.5} parent=39 // pred_fallthru
        _
      // Predicated region
      $region49: #{encoder_forward.5} parent=39 // pred_check
        %p2014 = pneg %p199
      $region50: #{encoder_forward.5} parent=39 // pred_check_branch
        %2016 = sbr.rel (%p2014) target = $region52
      $region51: #{encoder_forward.5} parent=39 // pred_region
        _
      $region52: #{encoder_forward.5} parent=39 // pred_fallthru
        _
    $region40: #{encoder_forward.5} parent=5 // pred_fallthru
      _
    %p2017 = scmp.le.s32.totalorder 2, %s14
    // Predicated region
    $region53: #{encoder_forward.5} parent=5 // pred_check
      %p2018 = pneg %p2017
    $region54: #{encoder_forward.5} parent=5 // pred_check_branch
      %2020 = sbr.rel (%p2018) target = $region56
    $region55: #{encoder_forward.5} parent=5 // pred_region
      %s2021 = ssub.s32 %s14, 2
      // Predicated region
      $region57: #{encoder_forward.5} parent=55 // pred_check
        %p2022 = pneg %p153
      $region58: #{encoder_forward.5} parent=55 // pred_check_branch
        %2024 = sbr.rel (%p2022) target = $region60
      $region59: #{encoder_forward.5} parent=55 // pred_region
        %s2025 = smul.u32 2, %s20
        %p2026 = scmp.lt.s32.totalorder %s2025, 3
        %s2027 = scalar_select %p2026, %s2025, 3
        %s2028 = smul.addr %s2027, 4
        %s2029 = scalar_lea.vmem %s5, %s2028
      $region60: #{encoder_forward.5} parent=55 // pred_fallthru
        _
      // Predicated region
      $region61: #{encoder_forward.5} parent=55 // pred_check
        %p2030 = pneg %p179
      $region62: #{encoder_forward.5} parent=55 // pred_check_branch
        %2032 = sbr.rel (%p2030) target = $region64
      $region63: #{encoder_forward.5} parent=55 // pred_region
        %p2033 = scmp.lt.s32.totalorder %s20, 1
        %s2034 = scalar_select %p2033, %s20, 1
        %s2035 = scalar_lea.vmem %s6, %s2034
      $region64: #{encoder_forward.5} parent=55 // pred_fallthru
        _
      // Predicated region
      $region65: #{encoder_forward.5} parent=55 // pred_check
        %p2036 = pneg %p205
      $region66: #{encoder_forward.5} parent=55 // pred_check_branch
        %2038 = sbr.rel (%p2036) target = $region68
      $region67: #{encoder_forward.5} parent=55 // pred_region
        %p2039 = scmp.lt.s32.totalorder %s20, 1
        %s2040 = scalar_select %p2039, %s20, 1
        %s2041 = scalar_lea.vmem %s7, %s2040
      $region68: #{encoder_forward.5} parent=55 // pred_fallthru
        _
    $region56: #{encoder_forward.5} parent=5 // pred_fallthru
      _
  $region6: #{encoder_forward.5} parent=0 // loop_footer
    %s18 = sadd.s32 1, %s14
  $region7: #{encoder_forward.5} parent=0 // loop_footer_branch
    %13 = sbr.rel target = $region3
  $region8: #{encoder_forward.5} parent=0 // loop_exit
    _

</llo_original>
